<compile_context>
chip_gen: v7x
topology: tpu7x:2x2x1
jax: 0.10.0
libtpu: 0.0.40
codegen_flags: <defaults>
</compile_context>

<pallas_src>
import functools

import jax
import jax.numpy as jnp
from jax import lax
from jax.experimental import pallas as pl
from jax.experimental.pallas import tpu as pltpu


def _round_up(x, m):
    return (x + m - 1) // m * m


def cbam_kernel(x_ref, w1_ref, w1t_ref, w2_ref, wc_ref, bc_ref, o_ref,
                pad_ref, sa_ref, *, H, W, HW, HP, compute_dtype, approx_sigmoid):
    """One batch element per grid step.

    x_ref  : (1, C, HWp)  VMEM  NCHW image, flattened spatial axis (lanes), zero-padded to HWp
    w1_ref : (CR, C)      VMEM  fc1 weight (Conv2d C->CR, 1x1, no bias)
    w1t_ref: (C, CR)      VMEM  fc1 weight transposed (VPU global-max branch)
    w2_ref : (C, CR)      VMEM  fc2 weight (Conv2d CR->C, 1x1, no bias)
    wc_ref : (98,)        SMEM  7x7 conv weight, flat (in, ky, kx); in0=mean map, in1=max map
    bc_ref : (1,)         SMEM  7x7 conv bias
    o_ref  : (1, C, HWp)  VMEM
    pad_ref: (2*HP, WPAD) VMEM  zero-padded 2-D maps, image rows on sublanes, HP = H + 6
    sa_ref : (1, HWp)     VMEM  flattened spatial-attention map
    """
    x = x_ref[0]                                   # (C, HWp) f32
    _, HWp = x.shape

    def sigmoid(z):
        if approx_sigmoid:
            return pl.reciprocal(1.0 + jnp.exp(-z), approx=True)
        return jax.nn.sigmoid(z)

    # ---- channel attention (MXU: the wide flattened-spatial axis is N) -------
    # Reference quirk preserved: the "avg" branch runs the MLP on the full x.
    w1 = w1_ref[...].astype(compute_dtype)
    w2 = w2_ref[...].astype(compute_dtype)
    rh = jnp.maximum(
        jnp.dot(w1, x.astype(compute_dtype), preferred_element_type=jnp.float32),
        0.0)                                                                        # (CR, HWp)

    # Global-max branch on the VPU (no degenerate N=1 MXU matmul):
    #   mo = W2 @ relu(W1 @ xmax)  via broadcast-FMAs + axis reductions (f32).
    xmax = jnp.max(x[:, :HW], axis=1, keepdims=True)                                # (C, 1)
    hmax = jnp.maximum(jnp.sum(w1t_ref[...] * xmax, axis=0, keepdims=True), 0.0)    # (1, CR)
    mo = jnp.sum(w2_ref[...] * hmax, axis=1, keepdims=True)                         # (C, 1)

    logits = jnp.dot(w2, rh.astype(compute_dtype),
                     preferred_element_type=jnp.float32) + mo                       # (C, HWp)
    ca = sigmoid(logits)

    # Apply channel attention straight into the output block: nothing besides
    # the output buffer stays live across the spatial conv.
    o_ref[0] = x * ca

    # Channel-wise mean / max of the attention map (sublane reductions).
    s_avg = jnp.mean(ca, axis=0, keepdims=True)        # (1, HWp)
    s_max = jnp.max(ca, axis=0, keepdims=True)         # (1, HWp)

    # ---- spatial attention: 7x7 conv over [mean, max], SAME zero padding -----
    # 2-D sublane-dense scratch: map m occupies rows [m*HP, (m+1)*HP), interior
    # at rows [3, 3+H), cols [3, 3+W).  Zero only the pad borders the conv
    # reads (cols < W+6) — no full-scratch zeroing, no cross-step state.
    WPADS = pad_ref.shape[1]
    WC = W + 6
    zrow = jnp.zeros((3, WPADS), jnp.float32)
    zcol = jnp.zeros((H, 3), jnp.float32)
    for m in range(2):
        r0 = m * HP
        pad_ref[r0:r0 + 3, :] = zrow                       # top pad rows
        pad_ref[r0 + 3 + H:r0 + HP, :] = zrow              # bottom pad rows
        pad_ref[r0 + 3:r0 + 3 + H, 0:3] = zcol             # left pad cols
        pad_ref[r0 + 3:r0 + 3 + H, 3 + W:WC] = zcol        # right pad cols
    for y in range(H):                                     # interior rows
        lo = y * W
        pad_ref[3 + y:4 + y, 3:3 + W] = s_avg[:, lo:lo + W]
        pad_ref[HP + 3 + y:HP + 4 + y, 3:3 + W] = s_max[:, lo:lo + W]

    # 14 base loads (one per (map, dy)); the 7 dx variants are lane shifts of
    # the already-loaded block.  4 independent accumulators for VPU ILP.
    accs = [jnp.zeros((H, W), jnp.float32) for _ in range(4)]
    t = 0
    for m in range(2):
        for dy in range(7):
            r0 = m * HP + dy
            base = pad_ref[r0:r0 + H, :]                   # (H, WPADS)
            for dx in range(7):
                win = base[:, dx:dx + W]                   # (H, W) value slice, no reload
                accs[t % 4] = accs[t % 4] + wc_ref[m * 49 + dy * 7 + dx] * win
                t += 1
    conv2d = (accs[0] + accs[1]) + (accs[2] + accs[3]) + bc_ref[0]
    sa2d = sigmoid(conv2d)                                 # (H, W)

    # Flatten the small map back to the lane-dense layout, then one in-place
    # broadcast multiply of the output block.
    if HWp > HW:
        sa_ref[0:1, HW:HWp] = jnp.zeros((1, HWp - HW), jnp.float32)
    for y in range(H):
        sa_ref[0:1, y * W:(y + 1) * W] = sa2d[y:y + 1, :]
    o_ref[0] = o_ref[0] * sa_ref[...]


def cbam_pallas(x_nchw, w1, w2, wc_flat, bc, *,
                matmul_dtype=jnp.bfloat16, approx_sigmoid=True):
    """x_nchw: (B, C, H, W) f32; w1: (CR, C); w2: (C, CR); wc_flat: (98,); bc: (1,)."""
    B, C, H, W = x_nchw.shape
    CR = w1.shape[0]
    HW = H * W
    HWp = _round_up(HW, 128)                 # lane-dense elementwise ops / output store
    HP = H + 6
    WPAD = _round_up(W + 6, 128)

    x2 = x_nchw.reshape(B, C, HW)            # free reshape, no transpose
    if HWp != HW:
        x2 = jnp.pad(x2, ((0, 0), (0, 0), (0, HWp - HW)))
    w1t = w1.T                               # (C, CR) for the VPU global-max branch

    f32b = 4
    vmem_est = (6 * C + 3 * CR) * HWp * f32b
    vmem_est += (2 * 2 * HP * WPAD + 2 * HWp) * f32b
    vmem_est += 4 * C * CR * f32b + (1 << 16)
    # Cap well below v7x's 64 MiB physical VMEM to leave compiler headroom.
    vmem_limit = int(min(max(2 * vmem_est, 16 * 2**20), 48 * 2**20))

    out2 = pl.pallas_call(
        functools.partial(cbam_kernel, H=H, W=W, HW=HW, HP=HP,
                          compute_dtype=matmul_dtype, approx_sigmoid=approx_sigmoid),
        out_shape=jax.ShapeDtypeStruct((B, C, HWp), jnp.float32),
        grid=(B,),
        in_specs=[
            pl.BlockSpec((1, C, HWp), lambda b: (b, 0, 0)),
            pl.BlockSpec((CR, C), lambda b: (0, 0)),
            pl.BlockSpec((C, CR), lambda b: (0, 0)),
            pl.BlockSpec((C, CR), lambda b: (0, 0)),
            pl.BlockSpec(memory_space=pltpu.MemorySpace.SMEM),
            pl.BlockSpec(memory_space=pltpu.MemorySpace.SMEM),
        ],
        out_specs=pl.BlockSpec((1, C, HWp), lambda b: (b, 0, 0)),
        scratch_shapes=[
            pltpu.VMEM((2 * HP, WPAD), jnp.float32),   # padded 2-D [mean, max] maps
            pltpu.VMEM((1, HWp), jnp.float32),         # flattened spatial attention
        ],
        compiler_params=pltpu.CompilerParams(
            dimension_semantics=("parallel",),
            vmem_limit_bytes=vmem_limit,
        ),
    )(x2, w1, w1t, w2, wc_flat, bc)

    if HWp != HW:
        out2 = out2[:, :, :HW]
    return out2.reshape(B, C, H, W)


def cbam_reference(x, w1, w2, wc_flat, bc):
    """Pure-JAX NCHW reference mirroring the PyTorch forward (for verification)."""
    h = jax.nn.relu(jnp.einsum("rc,bchw->brhw", w1, x))
    avg_out = jnp.einsum("cr,brhw->bchw", w2, h)
    xmax = jnp.max(x, axis=(2, 3), keepdims=True)
    hm = jax.nn.relu(jnp.einsum("rc,bchw->brhw", w1, xmax))
    max_out = jnp.einsum("cr,brhw->bchw", w2, hm)
    ca = jax.nn.sigmoid(avg_out + max_out)                     # (B,C,H,W)
    s_avg = jnp.mean(ca, axis=1, keepdims=True)
    s_max = jnp.max(ca, axis=1, keepdims=True)
    stacked = jnp.concatenate([s_avg, s_max], axis=1)          # (B,2,H,W)
    wc = wc_flat.reshape(1, 2, 7, 7)                           # OIHW
    conv = lax.conv_general_dilated(
        stacked, wc, window_strides=(1, 1), padding=((3, 3), (3, 3)),
        dimension_numbers=("NCHW", "OIHW", "NCHW")) + bc[0]
    sa = jax.nn.sigmoid(conv)                                  # (B,1,H,W)
    return x * ca * sa


if __name__ == "__main__":
    B, C, H, W = 2, 16, 16, 16
    reduction = 4
    CR = C // reduction

    key = jax.random.PRNGKey(0)
    kx, k1, k2, k3, k4 = jax.random.split(key, 5)

    x = jax.random.normal(kx, (B, C, H, W), jnp.float32)
    # fc1 (Conv2d C->CR, 1x1, no bias): torch weight (CR, C, 1, 1) -> stored as (CR, C)
    w1 = 0.3 * jax.random.normal(k1, (CR, C), jnp.float32)
    # fc2 (Conv2d CR->C, 1x1, no bias): torch weight (C, CR, 1, 1) -> stored as (C, CR)
    w2 = 0.3 * jax.random.normal(k2, (C, CR), jnp.float32)
    # spatial conv (Conv2d 2->1, 7x7, bias): flat weight (2*7*7,) and bias (1,)
    wc_flat = 0.1 * jax.random.normal(k3, (2 * 7 * 7,), jnp.float32)
    bc = 0.1 * jax.random.normal(k4, (1,), jnp.float32)

    ref = jax.block_until_ready(cbam_reference(x, w1, w2, wc_flat, bc))

    # Exact path: f32 MXU operands + exact sigmoid -> tight tolerance.
    out_exact = jax.block_until_ready(
        cbam_pallas(x, w1, w2, wc_flat, bc,
                    matmul_dtype=jnp.float32, approx_sigmoid=False))
    assert out_exact.shape == (B, C, H, W)
    assert jnp.allclose(out_exact, ref, atol=1e-4, rtol=1e-4), "f32 path mismatch vs JAX reference"

    # Fast path (default): bf16 MXU operands + approx-reciprocal sigmoid.
    out_fast = jax.block_until_ready(cbam_pallas(x, w1, w2, wc_flat, bc))
    assert out_fast.shape == (B, C, H, W)
    assert jnp.allclose(out_fast, ref, atol=6e-2, rtol=6e-2), "bf16 path mismatch vs JAX reference"

    print("KERNEL_OK")
</pallas_src>

<mosaic_0001>
module attributes {stable_mosaic.version = 11 : i64} {
  func.func @cbam_kernel(%arg0: i32, %arg1: memref<1x16x256xf32, #tpu.memory_space<vmem>>, %arg2: memref<4x16xf32, #tpu.memory_space<vmem>>, %arg3: memref<16x4xf32, #tpu.memory_space<vmem>>, %arg4: memref<16x4xf32, #tpu.memory_space<vmem>>, %arg5: memref<98xf32, #tpu.memory_space<smem>>, %arg6: memref<1xf32, #tpu.memory_space<smem>>, %arg7: memref<1x16x256xf32, #tpu.memory_space<vmem>>, %arg8: memref<44x128xf32, #tpu.memory_space<vmem>>, %arg9: memref<1x256xf32, #tpu.memory_space<vmem>>) attributes {dimension_semantics = [#tpu.dimension_semantics<parallel>], iteration_bounds = array<i64: 2>, scalar_prefetch = 0 : i64, scratch_operands = 2 : i64, tpu.core_type = #tpu.core_type<tc>, window_params = [{transform_indices = @transform_0, window_bounds = array<i64: 1, 16, 256>}, {pipeline_mode = #tpu.pipeline_mode<synchronous>, transform_indices = @transform_1, window_bounds = array<i64: 4, 16>}, {pipeline_mode = #tpu.pipeline_mode<synchronous>, transform_indices = @transform_2, window_bounds = array<i64: 16, 4>}, {pipeline_mode = #tpu.pipeline_mode<synchronous>, transform_indices = @transform_3, window_bounds = array<i64: 16, 4>}, {transform_indices = @transform_4, window_bounds = array<i64: 98>}, {transform_indices = @transform_5, window_bounds = array<i64: 1>}, {transform_indices = @transform_6, window_bounds = array<i64: 1, 16, 256>}]} {
    %c0 = arith.constant 0 : index
    %c0_0 = arith.constant 0 : index
    %c0_1 = arith.constant 0 : index
    %0 = vector.load %arg1[%c0, %c0_0, %c0_1] : memref<1x16x256xf32, #tpu.memory_space<vmem>>, vector<1x16x256xf32>
    %1 = vector.shape_cast %0 : vector<1x16x256xf32> to vector<16x256xf32>
    %c0_2 = arith.constant 0 : index
    %c0_3 = arith.constant 0 : index
    %2 = vector.load %arg2[%c0_2, %c0_3] : memref<4x16xf32, #tpu.memory_space<vmem>>, vector<4x16xf32>
    %c0_4 = arith.constant 0 : index
    %c0_5 = arith.constant 0 : index
    %3 = vector.load %arg4[%c0_4, %c0_5] : memref<16x4xf32, #tpu.memory_space<vmem>>, vector<16x4xf32>
    %cst = arith.constant dense<0.000000e+00> : vector<4x256xf32>
    %4 = tpu.matmul %2, %1, %cst {dimension_numbers = #tpu.dot_dimension_numbers<[1], [0], [0], [1], [0, 0, 1, 1], [], []>} : vector<4x16xf32>, vector<16x256xf32>, vector<4x256xf32> -> vector<4x256xf32>
    %cst_6 = arith.constant 0.000000e+00 : f32
    %5 = vector.broadcast %cst_6 : f32 to vector<4x256xf32>
    %6 = arith.maximumf %4, %5 : vector<4x256xf32>
    %cst_7 = arith.constant dense<0xFF800000> : vector<16xf32>
    %7 = vector.multi_reduction <maximumf>, %1, %cst_7 [1] : vector<16x256xf32> to vector<16xf32>
    %8 = vector.shape_cast %7 : vector<16xf32> to vector<16x1xf32>
    %c0_8 = arith.constant 0 : index
    %c0_9 = arith.constant 0 : index
    %9 = vector.load %arg3[%c0_8, %c0_9] : memref<16x4xf32, #tpu.memory_space<vmem>>, vector<16x4xf32>
    %10 = vector.broadcast %8 : vector<16x1xf32> to vector<16x4xf32>
    %11 = arith.mulf %9, %10 : vector<16x4xf32>
    %cst_10 = arith.constant dense<0.000000e+00> : vector<4xf32>
    %12 = vector.multi_reduction <add>, %11, %cst_10 [0] : vector<16x4xf32> to vector<4xf32>
    %13 = vector.shape_cast %12 : vector<4xf32> to vector<1x4xf32>
    %cst_11 = arith.constant 0.000000e+00 : f32
    %14 = vector.broadcast %cst_11 : f32 to vector<1x4xf32>
    %15 = arith.maximumf %13, %14 : vector<1x4xf32>
    %c0_12 = arith.constant 0 : index
    %c0_13 = arith.constant 0 : index
    %16 = vector.load %arg4[%c0_12, %c0_13] : memref<16x4xf32, #tpu.memory_space<vmem>>, vector<16x4xf32>
    %17 = vector.broadcast %15 : vector<1x4xf32> to vector<16x4xf32>
    %18 = arith.mulf %16, %17 : vector<16x4xf32>
    %cst_14 = arith.constant dense<0.000000e+00> : vector<16xf32>
    %19 = vector.multi_reduction <add>, %18, %cst_14 [1] : vector<16x4xf32> to vector<16xf32>
    %20 = vector.shape_cast %19 : vector<16xf32> to vector<16x1xf32>
    %cst_15 = arith.constant dense<0.000000e+00> : vector<16x256xf32>
    %21 = tpu.matmul %3, %6, %cst_15 {dimension_numbers = #tpu.dot_dimension_numbers<[1], [0], [0], [1], [0, 0, 1, 1], [], []>} : vector<16x4xf32>, vector<4x256xf32>, vector<16x256xf32> -> vector<16x256xf32>
    %22 = vector.broadcast %20 : vector<16x1xf32> to vector<16x256xf32>
    %23 = arith.addf %21, %22 : vector<16x256xf32>
    %24 = arith.negf %23 : vector<16x256xf32>
    %25 = math.exp %24 : vector<16x256xf32>
    %cst_16 = arith.constant 1.000000e+00 : f32
    %26 = vector.broadcast %cst_16 : f32 to vector<16x256xf32>
    %27 = arith.addf %26, %25 : vector<16x256xf32>
    %28 = arith.divf %26, %27 : vector<16x256xf32>
    %29 = arith.mulf %1, %28 : vector<16x256xf32>
    %c0_17 = arith.constant 0 : index
    %c0_18 = arith.constant 0 : index
    %c0_19 = arith.constant 0 : index
    %30 = vector.load %arg7[%c0_17, %c0_18, %c0_19] : memref<1x16x256xf32, #tpu.memory_space<vmem>>, vector<1x16x256xf32>
    %31 = vector.shape_cast %30 : vector<1x16x256xf32> to vector<16x256xf32>
    %32 = vector.shape_cast %29 : vector<16x256xf32> to vector<1x16x256xf32>
    tpu.vector_store %arg7[%c0_17, %c0_18, %c0_19], %32 {strides = array<i32>} : memref<1x16x256xf32, #tpu.memory_space<vmem>>, vector<1x16x256xf32>,
    %cst_20 = arith.constant dense<0.000000e+00> : vector<256xf32>
    %33 = vector.multi_reduction <add>, %28, %cst_20 [0] : vector<16x256xf32> to vector<256xf32>
    %34 = vector.shape_cast %33 : vector<256xf32> to vector<1x256xf32>
    %cst_21 = arith.constant 1.600000e+01 : f32
    %35 = vector.broadcast %cst_21 : f32 to vector<1x256xf32>
    %36 = arith.divf %34, %35 : vector<1x256xf32>
    %cst_22 = arith.constant dense<0xFF800000> : vector<256xf32>
    %37 = vector.multi_reduction <maximumf>, %28, %cst_22 [0] : vector<16x256xf32> to vector<256xf32>
    %38 = vector.shape_cast %37 : vector<256xf32> to vector<1x256xf32>
    %cst_23 = arith.constant 0.000000e+00 : f32
    %39 = vector.broadcast %cst_23 : f32 to vector<3x128xf32>
    %cst_24 = arith.constant 0.000000e+00 : f32
    %40 = vector.broadcast %cst_24 : f32 to vector<16x3xf32>
    %c0_25 = arith.constant 0 : index
    %c0_26 = arith.constant 0 : index
    %41 = vector.load %arg8[%c0_25, %c0_26] : memref<44x128xf32, #tpu.memory_space<vmem>>, vector<3x128xf32>
    tpu.vector_store %arg8[%c0_25, %c0_26], %39 {strides = array<i32>} : memref<44x128xf32, #tpu.memory_space<vmem>>, vector<3x128xf32>,
    %c19 = arith.constant 19 : index
    %c0_27 = arith.constant 0 : index
    %42 = vector.load %arg8[%c19, %c0_27] : memref<44x128xf32, #tpu.memory_space<vmem>>, vector<3x128xf32>
    tpu.vector_store %arg8[%c19, %c0_27], %39 {strides = array<i32>} : memref<44x128xf32, #tpu.memory_space<vmem>>, vector<3x128xf32>,
    %c3 = arith.constant 3 : index
    %c0_28 = arith.constant 0 : index
    %43 = vector.load %arg8[%c3, %c0_28] : memref<44x128xf32, #tpu.memory_space<vmem>>, vector<16x3xf32>
    tpu.vector_store %arg8[%c3, %c0_28], %40 {strides = array<i32>} : memref<44x128xf32, #tpu.memory_space<vmem>>, vector<16x3xf32>,
    %c3_29 = arith.constant 3 : index
    %c19_30 = arith.constant 19 : index
    %44 = vector.load %arg8[%c3_29, %c19_30] : memref<44x128xf32, #tpu.memory_space<vmem>>, vector<16x3xf32>
    tpu.vector_store %arg8[%c3_29, %c19_30], %40 {strides = array<i32>} : memref<44x128xf32, #tpu.memory_space<vmem>>, vector<16x3xf32>,
    %c22 = arith.constant 22 : index
    %c0_31 = arith.constant 0 : index
    %45 = vector.load %arg8[%c22, %c0_31] : memref<44x128xf32, #tpu.memory_space<vmem>>, vector<3x128xf32>
    tpu.vector_store %arg8[%c22, %c0_31], %39 {strides = array<i32>} : memref<44x128xf32, #tpu.memory_space<vmem>>, vector<3x128xf32>,
    %c41 = arith.constant 41 : index
    %c0_32 = arith.constant 0 : index
    %46 = vector.load %arg8[%c41, %c0_32] : memref<44x128xf32, #tpu.memory_space<vmem>>, vector<3x128xf32>
    tpu.vector_store %arg8[%c41, %c0_32], %39 {strides = array<i32>} : memref<44x128xf32, #tpu.memory_space<vmem>>, vector<3x128xf32>,
    %c25 = arith.constant 25 : index
    %c0_33 = arith.constant 0 : index
    %47 = vector.load %arg8[%c25, %c0_33] : memref<44x128xf32, #tpu.memory_space<vmem>>, vector<16x3xf32>
    tpu.vector_store %arg8[%c25, %c0_33], %40 {strides = array<i32>} : memref<44x128xf32, #tpu.memory_space<vmem>>, vector<16x3xf32>,
    %c25_34 = arith.constant 25 : index
    %c19_35 = arith.constant 19 : index
    %48 = vector.load %arg8[%c25_34, %c19_35] : memref<44x128xf32, #tpu.memory_space<vmem>>, vector<16x3xf32>
    tpu.vector_store %arg8[%c25_34, %c19_35], %40 {strides = array<i32>} : memref<44x128xf32, #tpu.memory_space<vmem>>, vector<16x3xf32>,
    %49 = vector.extract_strided_slice %36 {offsets = [0, 0], sizes = [1, 16], strides = [1, 1]} : vector<1x256xf32> to vector<1x16xf32>
    %c3_36 = arith.constant 3 : index
    %c3_37 = arith.constant 3 : index
    %50 = vector.load %arg8[%c3_36, %c3_37] : memref<44x128xf32, #tpu.memory_space<vmem>>, vector<1x16xf32>
    tpu.vector_store %arg8[%c3_36, %c3_37], %49 {strides = array<i32>} : memref<44x128xf32, #tpu.memory_space<vmem>>, vector<1x16xf32>,
    %51 = vector.extract_strided_slice %38 {offsets = [0, 0], sizes = [1, 16], strides = [1, 1]} : vector<1x256xf32> to vector<1x16xf32>
    %c25_38 = arith.constant 25 : index
    %c3_39 = arith.constant 3 : index
    %52 = vector.load %arg8[%c25_38, %c3_39] : memref<44x128xf32, #tpu.memory_space<vmem>>, vector<1x16xf32>
    tpu.vector_store %arg8[%c25_38, %c3_39], %51 {strides = array<i32>} : memref<44x128xf32, #tpu.memory_space<vmem>>, vector<1x16xf32>,
    %53 = vector.extract_strided_slice %36 {offsets = [0, 16], sizes = [1, 16], strides = [1, 1]} : vector<1x256xf32> to vector<1x16xf32>
    %c4 = arith.constant 4 : index
    %c3_40 = arith.constant 3 : index
    %54 = vector.load %arg8[%c4, %c3_40] : memref<44x128xf32, #tpu.memory_space<vmem>>, vector<1x16xf32>
    tpu.vector_store %arg8[%c4, %c3_40], %53 {strides = array<i32>} : memref<44x128xf32, #tpu.memory_space<vmem>>, vector<1x16xf32>,
    %55 = vector.extract_strided_slice %38 {offsets = [0, 16], sizes = [1, 16], strides = [1, 1]} : vector<1x256xf32> to vector<1x16xf32>
    %c26 = arith.constant 26 : index
    %c3_41 = arith.constant 3 : index
    %56 = vector.load %arg8[%c26, %c3_41] : memref<44x128xf32, #tpu.memory_space<vmem>>, vector<1x16xf32>
    tpu.vector_store %arg8[%c26, %c3_41], %55 {strides = array<i32>} : memref<44x128xf32, #tpu.memory_space<vmem>>, vector<1x16xf32>,
    %57 = vector.extract_strided_slice %36 {offsets = [0, 32], sizes = [1, 16], strides = [1, 1]} : vector<1x256xf32> to vector<1x16xf32>
    %c5 = arith.constant 5 : index
    %c3_42 = arith.constant 3 : index
    %58 = vector.load %arg8[%c5, %c3_42] : memref<44x128xf32, #tpu.memory_space<vmem>>, vector<1x16xf32>
    tpu.vector_store %arg8[%c5, %c3_42], %57 {strides = array<i32>} : memref<44x128xf32, #tpu.memory_space<vmem>>, vector<1x16xf32>,
    %59 = vector.extract_strided_slice %38 {offsets = [0, 32], sizes = [1, 16], strides = [1, 1]} : vector<1x256xf32> to vector<1x16xf32>
    %c27 = arith.constant 27 : index
    %c3_43 = arith.constant 3 : index
    %60 = vector.load %arg8[%c27, %c3_43] : memref<44x128xf32, #tpu.memory_space<vmem>>, vector<1x16xf32>
    tpu.vector_store %arg8[%c27, %c3_43], %59 {strides = array<i32>} : memref<44x128xf32, #tpu.memory_space<vmem>>, vector<1x16xf32>,
    %61 = vector.extract_strided_slice %36 {offsets = [0, 48], sizes = [1, 16], strides = [1, 1]} : vector<1x256xf32> to vector<1x16xf32>
    %c6 = arith.constant 6 : index
    %c3_44 = arith.constant 3 : index
    %62 = vector.load %arg8[%c6, %c3_44] : memref<44x128xf32, #tpu.memory_space<vmem>>, vector<1x16xf32>
    tpu.vector_store %arg8[%c6, %c3_44], %61 {strides = array<i32>} : memref<44x128xf32, #tpu.memory_space<vmem>>, vector<1x16xf32>,
    %63 = vector.extract_strided_slice %38 {offsets = [0, 48], sizes = [1, 16], strides = [1, 1]} : vector<1x256xf32> to vector<1x16xf32>
    %c28 = arith.constant 28 : index
    %c3_45 = arith.constant 3 : index
    %64 = vector.load %arg8[%c28, %c3_45] : memref<44x128xf32, #tpu.memory_space<vmem>>, vector<1x16xf32>
    tpu.vector_store %arg8[%c28, %c3_45], %63 {strides = array<i32>} : memref<44x128xf32, #tpu.memory_space<vmem>>, vector<1x16xf32>,
    %65 = vector.extract_strided_slice %36 {offsets = [0, 64], sizes = [1, 16], strides = [1, 1]} : vector<1x256xf32> to vector<1x16xf32>
    %c7 = arith.constant 7 : index
    %c3_46 = arith.constant 3 : index
    %66 = vector.load %arg8[%c7, %c3_46] : memref<44x128xf32, #tpu.memory_space<vmem>>, vector<1x16xf32>
    tpu.vector_store %arg8[%c7, %c3_46], %65 {strides = array<i32>} : memref<44x128xf32, #tpu.memory_space<vmem>>, vector<1x16xf32>,
    %67 = vector.extract_strided_slice %38 {offsets = [0, 64], sizes = [1, 16], strides = [1, 1]} : vector<1x256xf32> to vector<1x16xf32>
    %c29 = arith.constant 29 : index
    %c3_47 = arith.constant 3 : index
    %68 = vector.load %arg8[%c29, %c3_47] : memref<44x128xf32, #tpu.memory_space<vmem>>, vector<1x16xf32>
    tpu.vector_store %arg8[%c29, %c3_47], %67 {strides = array<i32>} : memref<44x128xf32, #tpu.memory_space<vmem>>, vector<1x16xf32>,
    %69 = vector.extract_strided_slice %36 {offsets = [0, 80], sizes = [1, 16], strides = [1, 1]} : vector<1x256xf32> to vector<1x16xf32>
    %c8 = arith.constant 8 : index
    %c3_48 = arith.constant 3 : index
    %70 = vector.load %arg8[%c8, %c3_48] : memref<44x128xf32, #tpu.memory_space<vmem>>, vector<1x16xf32>
    tpu.vector_store %arg8[%c8, %c3_48], %69 {strides = array<i32>} : memref<44x128xf32, #tpu.memory_space<vmem>>, vector<1x16xf32>,
    %71 = vector.extract_strided_slice %38 {offsets = [0, 80], sizes = [1, 16], strides = [1, 1]} : vector<1x256xf32> to vector<1x16xf32>
    %c30 = arith.constant 30 : index
    %c3_49 = arith.constant 3 : index
    %72 = vector.load %arg8[%c30, %c3_49] : memref<44x128xf32, #tpu.memory_space<vmem>>, vector<1x16xf32>
    tpu.vector_store %arg8[%c30, %c3_49], %71 {strides = array<i32>} : memref<44x128xf32, #tpu.memory_space<vmem>>, vector<1x16xf32>,
    %73 = vector.extract_strided_slice %36 {offsets = [0, 96], sizes = [1, 16], strides = [1, 1]} : vector<1x256xf32> to vector<1x16xf32>
    %c9 = arith.constant 9 : index
    %c3_50 = arith.constant 3 : index
    %74 = vector.load %arg8[%c9, %c3_50] : memref<44x128xf32, #tpu.memory_space<vmem>>, vector<1x16xf32>
    tpu.vector_store %arg8[%c9, %c3_50], %73 {strides = array<i32>} : memref<44x128xf32, #tpu.memory_space<vmem>>, vector<1x16xf32>,
    %75 = vector.extract_strided_slice %38 {offsets = [0, 96], sizes = [1, 16], strides = [1, 1]} : vector<1x256xf32> to vector<1x16xf32>
    %c31 = arith.constant 31 : index
    %c3_51 = arith.constant 3 : index
    %76 = vector.load %arg8[%c31, %c3_51] : memref<44x128xf32, #tpu.memory_space<vmem>>, vector<1x16xf32>
    tpu.vector_store %arg8[%c31, %c3_51], %75 {strides = array<i32>} : memref<44x128xf32, #tpu.memory_space<vmem>>, vector<1x16xf32>,
    %77 = vector.extract_strided_slice %36 {offsets = [0, 112], sizes = [1, 16], strides = [1, 1]} : vector<1x256xf32> to vector<1x16xf32>
    %c10 = arith.constant 10 : index
    %c3_52 = arith.constant 3 : index
    %78 = vector.load %arg8[%c10, %c3_52] : memref<44x128xf32, #tpu.memory_space<vmem>>, vector<1x16xf32>
    tpu.vector_store %arg8[%c10, %c3_52], %77 {strides = array<i32>} : memref<44x128xf32, #tpu.memory_space<vmem>>, vector<1x16xf32>,
    %79 = vector.extract_strided_slice %38 {offsets = [0, 112], sizes = [1, 16], strides = [1, 1]} : vector<1x256xf32> to vector<1x16xf32>
    %c32 = arith.constant 32 : index
    %c3_53 = arith.constant 3 : index
    %80 = vector.load %arg8[%c32, %c3_53] : memref<44x128xf32, #tpu.memory_space<vmem>>, vector<1x16xf32>
    tpu.vector_store %arg8[%c32, %c3_53], %79 {strides = array<i32>} : memref<44x128xf32, #tpu.memory_space<vmem>>, vector<1x16xf32>,
    %81 = vector.extract_strided_slice %36 {offsets = [0, 128], sizes = [1, 16], strides = [1, 1]} : vector<1x256xf32> to vector<1x16xf32>
    %c11 = arith.constant 11 : index
    %c3_54 = arith.constant 3 : index
    %82 = vector.load %arg8[%c11, %c3_54] : memref<44x128xf32, #tpu.memory_space<vmem>>, vector<1x16xf32>
    tpu.vector_store %arg8[%c11, %c3_54], %81 {strides = array<i32>} : memref<44x128xf32, #tpu.memory_space<vmem>>, vector<1x16xf32>,
    %83 = vector.extract_strided_slice %38 {offsets = [0, 128], sizes = [1, 16], strides = [1, 1]} : vector<1x256xf32> to vector<1x16xf32>
    %c33 = arith.constant 33 : index
    %c3_55 = arith.constant 3 : index
    %84 = vector.load %arg8[%c33, %c3_55] : memref<44x128xf32, #tpu.memory_space<vmem>>, vector<1x16xf32>
    tpu.vector_store %arg8[%c33, %c3_55], %83 {strides = array<i32>} : memref<44x128xf32, #tpu.memory_space<vmem>>, vector<1x16xf32>,
    %85 = vector.extract_strided_slice %36 {offsets = [0, 144], sizes = [1, 16], strides = [1, 1]} : vector<1x256xf32> to vector<1x16xf32>
    %c12 = arith.constant 12 : index
    %c3_56 = arith.constant 3 : index
    %86 = vector.load %arg8[%c12, %c3_56] : memref<44x128xf32, #tpu.memory_space<vmem>>, vector<1x16xf32>
    tpu.vector_store %arg8[%c12, %c3_56], %85 {strides = array<i32>} : memref<44x128xf32, #tpu.memory_space<vmem>>, vector<1x16xf32>,
    %87 = vector.extract_strided_slice %38 {offsets = [0, 144], sizes = [1, 16], strides = [1, 1]} : vector<1x256xf32> to vector<1x16xf32>
    %c34 = arith.constant 34 : index
    %c3_57 = arith.constant 3 : index
    %88 = vector.load %arg8[%c34, %c3_57] : memref<44x128xf32, #tpu.memory_space<vmem>>, vector<1x16xf32>
    tpu.vector_store %arg8[%c34, %c3_57], %87 {strides = array<i32>} : memref<44x128xf32, #tpu.memory_space<vmem>>, vector<1x16xf32>,
    %89 = vector.extract_strided_slice %36 {offsets = [0, 160], sizes = [1, 16], strides = [1, 1]} : vector<1x256xf32> to vector<1x16xf32>
    %c13 = arith.constant 13 : index
    %c3_58 = arith.constant 3 : index
    %90 = vector.load %arg8[%c13, %c3_58] : memref<44x128xf32, #tpu.memory_space<vmem>>, vector<1x16xf32>
    tpu.vector_store %arg8[%c13, %c3_58], %89 {strides = array<i32>} : memref<44x128xf32, #tpu.memory_space<vmem>>, vector<1x16xf32>,
    %91 = vector.extract_strided_slice %38 {offsets = [0, 160], sizes = [1, 16], strides = [1, 1]} : vector<1x256xf32> to vector<1x16xf32>
    %c35 = arith.constant 35 : index
    %c3_59 = arith.constant 3 : index
    %92 = vector.load %arg8[%c35, %c3_59] : memref<44x128xf32, #tpu.memory_space<vmem>>, vector<1x16xf32>
    tpu.vector_store %arg8[%c35, %c3_59], %91 {strides = array<i32>} : memref<44x128xf32, #tpu.memory_space<vmem>>, vector<1x16xf32>,
    %93 = vector.extract_strided_slice %36 {offsets = [0, 176], sizes = [1, 16], strides = [1, 1]} : vector<1x256xf32> to vector<1x16xf32>
    %c14 = arith.constant 14 : index
    %c3_60 = arith.constant 3 : index
    %94 = vector.load %arg8[%c14, %c3_60] : memref<44x128xf32, #tpu.memory_space<vmem>>, vector<1x16xf32>
    tpu.vector_store %arg8[%c14, %c3_60], %93 {strides = array<i32>} : memref<44x128xf32, #tpu.memory_space<vmem>>, vector<1x16xf32>,
    %95 = vector.extract_strided_slice %38 {offsets = [0, 176], sizes = [1, 16], strides = [1, 1]} : vector<1x256xf32> to vector<1x16xf32>
    %c36 = arith.constant 36 : index
    %c3_61 = arith.constant 3 : index
    %96 = vector.load %arg8[%c36, %c3_61] : memref<44x128xf32, #tpu.memory_space<vmem>>, vector<1x16xf32>
    tpu.vector_store %arg8[%c36, %c3_61], %95 {strides = array<i32>} : memref<44x128xf32, #tpu.memory_space<vmem>>, vector<1x16xf32>,
    %97 = vector.extract_strided_slice %36 {offsets = [0, 192], sizes = [1, 16], strides = [1, 1]} : vector<1x256xf32> to vector<1x16xf32>
    %c15 = arith.constant 15 : index
    %c3_62 = arith.constant 3 : index
    %98 = vector.load %arg8[%c15, %c3_62] : memref<44x128xf32, #tpu.memory_space<vmem>>, vector<1x16xf32>
    tpu.vector_store %arg8[%c15, %c3_62], %97 {strides = array<i32>} : memref<44x128xf32, #tpu.memory_space<vmem>>, vector<1x16xf32>,
    %99 = vector.extract_strided_slice %38 {offsets = [0, 192], sizes = [1, 16], strides = [1, 1]} : vector<1x256xf32> to vector<1x16xf32>
    %c37 = arith.constant 37 : index
    %c3_63 = arith.constant 3 : index
    %100 = vector.load %arg8[%c37, %c3_63] : memref<44x128xf32, #tpu.memory_space<vmem>>, vector<1x16xf32>
    tpu.vector_store %arg8[%c37, %c3_63], %99 {strides = array<i32>} : memref<44x128xf32, #tpu.memory_space<vmem>>, vector<1x16xf32>,
    %101 = vector.extract_strided_slice %36 {offsets = [0, 208], sizes = [1, 16], strides = [1, 1]} : vector<1x256xf32> to vector<1x16xf32>
    %c16 = arith.constant 16 : index
    %c3_64 = arith.constant 3 : index
    %102 = vector.load %arg8[%c16, %c3_64] : memref<44x128xf32, #tpu.memory_space<vmem>>, vector<1x16xf32>
    tpu.vector_store %arg8[%c16, %c3_64], %101 {strides = array<i32>} : memref<44x128xf32, #tpu.memory_space<vmem>>, vector<1x16xf32>,
    %103 = vector.extract_strided_slice %38 {offsets = [0, 208], sizes = [1, 16], strides = [1, 1]} : vector<1x256xf32> to vector<1x16xf32>
    %c38 = arith.constant 38 : index
    %c3_65 = arith.constant 3 : index
    %104 = vector.load %arg8[%c38, %c3_65] : memref<44x128xf32, #tpu.memory_space<vmem>>, vector<1x16xf32>
    tpu.vector_store %arg8[%c38, %c3_65], %103 {strides = array<i32>} : memref<44x128xf32, #tpu.memory_space<vmem>>, vector<1x16xf32>,
    %105 = vector.extract_strided_slice %36 {offsets = [0, 224], sizes = [1, 16], strides = [1, 1]} : vector<1x256xf32> to vector<1x16xf32>
    %c17 = arith.constant 17 : index
    %c3_66 = arith.constant 3 : index
    %106 = vector.load %arg8[%c17, %c3_66] : memref<44x128xf32, #tpu.memory_space<vmem>>, vector<1x16xf32>
    tpu.vector_store %arg8[%c17, %c3_66], %105 {strides = array<i32>} : memref<44x128xf32, #tpu.memory_space<vmem>>, vector<1x16xf32>,
    %107 = vector.extract_strided_slice %38 {offsets = [0, 224], sizes = [1, 16], strides = [1, 1]} : vector<1x256xf32> to vector<1x16xf32>
    %c39 = arith.constant 39 : index
    %c3_67 = arith.constant 3 : index
    %108 = vector.load %arg8[%c39, %c3_67] : memref<44x128xf32, #tpu.memory_space<vmem>>, vector<1x16xf32>
    tpu.vector_store %arg8[%c39, %c3_67], %107 {strides = array<i32>} : memref<44x128xf32, #tpu.memory_space<vmem>>, vector<1x16xf32>,
    %109 = vector.extract_strided_slice %36 {offsets = [0, 240], sizes = [1, 16], strides = [1, 1]} : vector<1x256xf32> to vector<1x16xf32>
    %c18 = arith.constant 18 : index
    %c3_68 = arith.constant 3 : index
    %110 = vector.load %arg8[%c18, %c3_68] : memref<44x128xf32, #tpu.memory_space<vmem>>, vector<1x16xf32>
    tpu.vector_store %arg8[%c18, %c3_68], %109 {strides = array<i32>} : memref<44x128xf32, #tpu.memory_space<vmem>>, vector<1x16xf32>,
    %111 = vector.extract_strided_slice %38 {offsets = [0, 240], sizes = [1, 16], strides = [1, 1]} : vector<1x256xf32> to vector<1x16xf32>
    %c40 = arith.constant 40 : index
    %c3_69 = arith.constant 3 : index
    %112 = vector.load %arg8[%c40, %c3_69] : memref<44x128xf32, #tpu.memory_space<vmem>>, vector<1x16xf32>
    tpu.vector_store %arg8[%c40, %c3_69], %111 {strides = array<i32>} : memref<44x128xf32, #tpu.memory_space<vmem>>, vector<1x16xf32>,
    %cst_70 = arith.constant 0.000000e+00 : f32
    %113 = vector.broadcast %cst_70 : f32 to vector<16x16xf32>
    %cst_71 = arith.constant 0.000000e+00 : f32
    %114 = vector.broadcast %cst_71 : f32 to vector<16x16xf32>
    %cst_72 = arith.constant 0.000000e+00 : f32
    %115 = vector.broadcast %cst_72 : f32 to vector<16x16xf32>
    %cst_73 = arith.constant 0.000000e+00 : f32
    %116 = vector.broadcast %cst_73 : f32 to vector<16x16xf32>
    %c0_74 = arith.constant 0 : index
    %c0_75 = arith.constant 0 : index
    %117 = vector.load %arg8[%c0_74, %c0_75] : memref<44x128xf32, #tpu.memory_space<vmem>>, vector<16x128xf32>
    %118 = vector.extract_strided_slice %117 {offsets = [0, 0], sizes = [16, 16], strides = [1, 1]} : vector<16x128xf32> to vector<16x16xf32>
    %c0_76 = arith.constant 0 : index
    %119 = memref.load %arg5[%c0_76] : memref<98xf32, #tpu.memory_space<smem>>
    %120 = vector.broadcast %119 : f32 to vector<16x16xf32>
    %121 = arith.mulf %120, %118 : vector<16x16xf32>
    %122 = arith.addf %113, %121 : vector<16x16xf32>
    %123 = vector.extract_strided_slice %117 {offsets = [0, 1], sizes = [16, 16], strides = [1, 1]} : vector<16x128xf32> to vector<16x16xf32>
    %c1 = arith.constant 1 : index
    %124 = memref.load %arg5[%c1] : memref<98xf32, #tpu.memory_space<smem>>
    %125 = vector.broadcast %124 : f32 to vector<16x16xf32>
    %126 = arith.mulf %125, %123 : vector<16x16xf32>
    %127 = arith.addf %114, %126 : vector<16x16xf32>
    %128 = vector.extract_strided_slice %117 {offsets = [0, 2], sizes = [16, 16], strides = [1, 1]} : vector<16x128xf32> to vector<16x16xf32>
    %c2 = arith.constant 2 : index
    %129 = memref.load %arg5[%c2] : memref<98xf32, #tpu.memory_space<smem>>
    %130 = vector.broadcast %129 : f32 to vector<16x16xf32>
    %131 = arith.mulf %130, %128 : vector<16x16xf32>
    %132 = arith.addf %115, %131 : vector<16x16xf32>
    %133 = vector.extract_strided_slice %117 {offsets = [0, 3], sizes = [16, 16], strides = [1, 1]} : vector<16x128xf32> to vector<16x16xf32>
    %c3_77 = arith.constant 3 : index
    %134 = memref.load %arg5[%c3_77] : memref<98xf32, #tpu.memory_space<smem>>
    %135 = vector.broadcast %134 : f32 to vector<16x16xf32>
    %136 = arith.mulf %135, %133 : vector<16x16xf32>
    %137 = arith.addf %116, %136 : vector<16x16xf32>
    %138 = vector.extract_strided_slice %117 {offsets = [0, 4], sizes = [16, 16], strides = [1, 1]} : vector<16x128xf32> to vector<16x16xf32>
    %c4_78 = arith.constant 4 : index
    %139 = memref.load %arg5[%c4_78] : memref<98xf32, #tpu.memory_space<smem>>
    %140 = vector.broadcast %139 : f32 to vector<16x16xf32>
    %141 = arith.mulf %140, %138 : vector<16x16xf32>
    %142 = arith.addf %122, %141 : vector<16x16xf32>
    %143 = vector.extract_strided_slice %117 {offsets = [0, 5], sizes = [16, 16], strides = [1, 1]} : vector<16x128xf32> to vector<16x16xf32>
    %c5_79 = arith.constant 5 : index
    %144 = memref.load %arg5[%c5_79] : memref<98xf32, #tpu.memory_space<smem>>
    %145 = vector.broadcast %144 : f32 to vector<16x16xf32>
    %146 = arith.mulf %145, %143 : vector<16x16xf32>
    %147 = arith.addf %127, %146 : vector<16x16xf32>
    %148 = vector.extract_strided_slice %117 {offsets = [0, 6], sizes = [16, 16], strides = [1, 1]} : vector<16x128xf32> to vector<16x16xf32>
    %c6_80 = arith.constant 6 : index
    %149 = memref.load %arg5[%c6_80] : memref<98xf32, #tpu.memory_space<smem>>
    %150 = vector.broadcast %149 : f32 to vector<16x16xf32>
    %151 = arith.mulf %150, %148 : vector<16x16xf32>
    %152 = arith.addf %132, %151 : vector<16x16xf32>
    %c1_81 = arith.constant 1 : index
    %c0_82 = arith.constant 0 : index
    %153 = vector.load %arg8[%c1_81, %c0_82] : memref<44x128xf32, #tpu.memory_space<vmem>>, vector<16x128xf32>
    %154 = vector.extract_strided_slice %153 {offsets = [0, 0], sizes = [16, 16], strides = [1, 1]} : vector<16x128xf32> to vector<16x16xf32>
    %c7_83 = arith.constant 7 : index
    %155 = memref.load %arg5[%c7_83] : memref<98xf32, #tpu.memory_space<smem>>
    %156 = vector.broadcast %155 : f32 to vector<16x16xf32>
    %157 = arith.mulf %156, %154 : vector<16x16xf32>
    %158 = arith.addf %137, %157 : vector<16x16xf32>
    %159 = vector.extract_strided_slice %153 {offsets = [0, 1], sizes = [16, 16], strides = [1, 1]} : vector<16x128xf32> to vector<16x16xf32>
    %c8_84 = arith.constant 8 : index
    %160 = memref.load %arg5[%c8_84] : memref<98xf32, #tpu.memory_space<smem>>
    %161 = vector.broadcast %160 : f32 to vector<16x16xf32>
    %162 = arith.mulf %161, %159 : vector<16x16xf32>
    %163 = arith.addf %142, %162 : vector<16x16xf32>
    %164 = vector.extract_strided_slice %153 {offsets = [0, 2], sizes = [16, 16], strides = [1, 1]} : vector<16x128xf32> to vector<16x16xf32>
    %c9_85 = arith.constant 9 : index
    %165 = memref.load %arg5[%c9_85] : memref<98xf32, #tpu.memory_space<smem>>
    %166 = vector.broadcast %165 : f32 to vector<16x16xf32>
    %167 = arith.mulf %166, %164 : vector<16x16xf32>
    %168 = arith.addf %147, %167 : vector<16x16xf32>
    %169 = vector.extract_strided_slice %153 {offsets = [0, 3], sizes = [16, 16], strides = [1, 1]} : vector<16x128xf32> to vector<16x16xf32>
    %c10_86 = arith.constant 10 : index
    %170 = memref.load %arg5[%c10_86] : memref<98xf32, #tpu.memory_space<smem>>
    %171 = vector.broadcast %170 : f32 to vector<16x16xf32>
    %172 = arith.mulf %171, %169 : vector<16x16xf32>
    %173 = arith.addf %152, %172 : vector<16x16xf32>
    %174 = vector.extract_strided_slice %153 {offsets = [0, 4], sizes = [16, 16], strides = [1, 1]} : vector<16x128xf32> to vector<16x16xf32>
    %c11_87 = arith.constant 11 : index
    %175 = memref.load %arg5[%c11_87] : memref<98xf32, #tpu.memory_space<smem>>
    %176 = vector.broadcast %175 : f32 to vector<16x16xf32>
    %177 = arith.mulf %176, %174 : vector<16x16xf32>
    %178 = arith.addf %158, %177 : vector<16x16xf32>
    %179 = vector.extract_strided_slice %153 {offsets = [0, 5], sizes = [16, 16], strides = [1, 1]} : vector<16x128xf32> to vector<16x16xf32>
    %c12_88 = arith.constant 12 : index
    %180 = memref.load %arg5[%c12_88] : memref<98xf32, #tpu.memory_space<smem>>
    %181 = vector.broadcast %180 : f32 to vector<16x16xf32>
    %182 = arith.mulf %181, %179 : vector<16x16xf32>
    %183 = arith.addf %163, %182 : vector<16x16xf32>
    %184 = vector.extract_strided_slice %153 {offsets = [0, 6], sizes = [16, 16], strides = [1, 1]} : vector<16x128xf32> to vector<16x16xf32>
    %c13_89 = arith.constant 13 : index
    %185 = memref.load %arg5[%c13_89] : memref<98xf32, #tpu.memory_space<smem>>
    %186 = vector.broadcast %185 : f32 to vector<16x16xf32>
    %187 = arith.mulf %186, %184 : vector<16x16xf32>
    %188 = arith.addf %168, %187 : vector<16x16xf32>
    %c2_90 = arith.constant 2 : index
    %c0_91 = arith.constant 0 : index
    %189 = vector.load %arg8[%c2_90, %c0_91] : memref<44x128xf32, #tpu.memory_space<vmem>>, vector<16x128xf32>
    %190 = vector.extract_strided_slice %189 {offsets = [0, 0], sizes = [16, 16], strides = [1, 1]} : vector<16x128xf32> to vector<16x16xf32>
    %c14_92 = arith.constant 14 : index
    %191 = memref.load %arg5[%c14_92] : memref<98xf32, #tpu.memory_space<smem>>
    %192 = vector.broadcast %191 : f32 to vector<16x16xf32>
    %193 = arith.mulf %192, %190 : vector<16x16xf32>
    %194 = arith.addf %173, %193 : vector<16x16xf32>
    %195 = vector.extract_strided_slice %189 {offsets = [0, 1], sizes = [16, 16], strides = [1, 1]} : vector<16x128xf32> to vector<16x16xf32>
    %c15_93 = arith.constant 15 : index
    %196 = memref.load %arg5[%c15_93] : memref<98xf32, #tpu.memory_space<smem>>
    %197 = vector.broadcast %196 : f32 to vector<16x16xf32>
    %198 = arith.mulf %197, %195 : vector<16x16xf32>
    %199 = arith.addf %178, %198 : vector<16x16xf32>
    %200 = vector.extract_strided_slice %189 {offsets = [0, 2], sizes = [16, 16], strides = [1, 1]} : vector<16x128xf32> to vector<16x16xf32>
    %c16_94 = arith.constant 16 : index
    %201 = memref.load %arg5[%c16_94] : memref<98xf32, #tpu.memory_space<smem>>
    %202 = vector.broadcast %201 : f32 to vector<16x16xf32>
    %203 = arith.mulf %202, %200 : vector<16x16xf32>
    %204 = arith.addf %183, %203 : vector<16x16xf32>
    %205 = vector.extract_strided_slice %189 {offsets = [0, 3], sizes = [16, 16], strides = [1, 1]} : vector<16x128xf32> to vector<16x16xf32>
    %c17_95 = arith.constant 17 : index
    %206 = memref.load %arg5[%c17_95] : memref<98xf32, #tpu.memory_space<smem>>
    %207 = vector.broadcast %206 : f32 to vector<16x16xf32>
    %208 = arith.mulf %207, %205 : vector<16x16xf32>
    %209 = arith.addf %188, %208 : vector<16x16xf32>
    %210 = vector.extract_strided_slice %189 {offsets = [0, 4], sizes = [16, 16], strides = [1, 1]} : vector<16x128xf32> to vector<16x16xf32>
    %c18_96 = arith.constant 18 : index
    %211 = memref.load %arg5[%c18_96] : memref<98xf32, #tpu.memory_space<smem>>
    %212 = vector.broadcast %211 : f32 to vector<16x16xf32>
    %213 = arith.mulf %212, %210 : vector<16x16xf32>
    %214 = arith.addf %194, %213 : vector<16x16xf32>
    %215 = vector.extract_strided_slice %189 {offsets = [0, 5], sizes = [16, 16], strides = [1, 1]} : vector<16x128xf32> to vector<16x16xf32>
    %c19_97 = arith.constant 19 : index
    %216 = memref.load %arg5[%c19_97] : memref<98xf32, #tpu.memory_space<smem>>
    %217 = vector.broadcast %216 : f32 to vector<16x16xf32>
    %218 = arith.mulf %217, %215 : vector<16x16xf32>
    %219 = arith.addf %199, %218 : vector<16x16xf32>
    %220 = vector.extract_strided_slice %189 {offsets = [0, 6], sizes = [16, 16], strides = [1, 1]} : vector<16x128xf32> to vector<16x16xf32>
    %c20 = arith.constant 20 : index
    %221 = memref.load %arg5[%c20] : memref<98xf32, #tpu.memory_space<smem>>
    %222 = vector.broadcast %221 : f32 to vector<16x16xf32>
    %223 = arith.mulf %222, %220 : vector<16x16xf32>
    %224 = arith.addf %204, %223 : vector<16x16xf32>
    %c3_98 = arith.constant 3 : index
    %c0_99 = arith.constant 0 : index
    %225 = vector.load %arg8[%c3_98, %c0_99] : memref<44x128xf32, #tpu.memory_space<vmem>>, vector<16x128xf32>
    %226 = vector.extract_strided_slice %225 {offsets = [0, 0], sizes = [16, 16], strides = [1, 1]} : vector<16x128xf32> to vector<16x16xf32>
    %c21 = arith.constant 21 : index
    %227 = memref.load %arg5[%c21] : memref<98xf32, #tpu.memory_space<smem>>
    %228 = vector.broadcast %227 : f32 to vector<16x16xf32>
    %229 = arith.mulf %228, %226 : vector<16x16xf32>
    %230 = arith.addf %209, %229 : vector<16x16xf32>
    %231 = vector.extract_strided_slice %225 {offsets = [0, 1], sizes = [16, 16], strides = [1, 1]} : vector<16x128xf32> to vector<16x16xf32>
    %c22_100 = arith.constant 22 : index
    %232 = memref.load %arg5[%c22_100] : memref<98xf32, #tpu.memory_space<smem>>
    %233 = vector.broadcast %232 : f32 to vector<16x16xf32>
    %234 = arith.mulf %233, %231 : vector<16x16xf32>
    %235 = arith.addf %214, %234 : vector<16x16xf32>
    %236 = vector.extract_strided_slice %225 {offsets = [0, 2], sizes = [16, 16], strides = [1, 1]} : vector<16x128xf32> to vector<16x16xf32>
    %c23 = arith.constant 23 : index
    %237 = memref.load %arg5[%c23] : memref<98xf32, #tpu.memory_space<smem>>
    %238 = vector.broadcast %237 : f32 to vector<16x16xf32>
    %239 = arith.mulf %238, %236 : vector<16x16xf32>
    %240 = arith.addf %219, %239 : vector<16x16xf32>
    %241 = vector.extract_strided_slice %225 {offsets = [0, 3], sizes = [16, 16], strides = [1, 1]} : vector<16x128xf32> to vector<16x16xf32>
    %c24 = arith.constant 24 : index
    %242 = memref.load %arg5[%c24] : memref<98xf32, #tpu.memory_space<smem>>
    %243 = vector.broadcast %242 : f32 to vector<16x16xf32>
    %244 = arith.mulf %243, %241 : vector<16x16xf32>
    %245 = arith.addf %224, %244 : vector<16x16xf32>
    %246 = vector.extract_strided_slice %225 {offsets = [0, 4], sizes = [16, 16], strides = [1, 1]} : vector<16x128xf32> to vector<16x16xf32>
    %c25_101 = arith.constant 25 : index
    %247 = memref.load %arg5[%c25_101] : memref<98xf32, #tpu.memory_space<smem>>
    %248 = vector.broadcast %247 : f32 to vector<16x16xf32>
    %249 = arith.mulf %248, %246 : vector<16x16xf32>
    %250 = arith.addf %230, %249 : vector<16x16xf32>
    %251 = vector.extract_strided_slice %225 {offsets = [0, 5], sizes = [16, 16], strides = [1, 1]} : vector<16x128xf32> to vector<16x16xf32>
    %c26_102 = arith.constant 26 : index
    %252 = memref.load %arg5[%c26_102] : memref<98xf32, #tpu.memory_space<smem>>
    %253 = vector.broadcast %252 : f32 to vector<16x16xf32>
    %254 = arith.mulf %253, %251 : vector<16x16xf32>
    %255 = arith.addf %235, %254 : vector<16x16xf32>
    %256 = vector.extract_strided_slice %225 {offsets = [0, 6], sizes = [16, 16], strides = [1, 1]} : vector<16x128xf32> to vector<16x16xf32>
    %c27_103 = arith.constant 27 : index
    %257 = memref.load %arg5[%c27_103] : memref<98xf32, #tpu.memory_space<smem>>
    %258 = vector.broadcast %257 : f32 to vector<16x16xf32>
    %259 = arith.mulf %258, %256 : vector<16x16xf32>
    %260 = arith.addf %240, %259 : vector<16x16xf32>
    %c4_104 = arith.constant 4 : index
    %c0_105 = arith.constant 0 : index
    %261 = vector.load %arg8[%c4_104, %c0_105] : memref<44x128xf32, #tpu.memory_space<vmem>>, vector<16x128xf32>
    %262 = vector.extract_strided_slice %261 {offsets = [0, 0], sizes = [16, 16], strides = [1, 1]} : vector<16x128xf32> to vector<16x16xf32>
    %c28_106 = arith.constant 28 : index
    %263 = memref.load %arg5[%c28_106] : memref<98xf32, #tpu.memory_space<smem>>
    %264 = vector.broadcast %263 : f32 to vector<16x16xf32>
    %265 = arith.mulf %264, %262 : vector<16x16xf32>
    %266 = arith.addf %245, %265 : vector<16x16xf32>
    %267 = vector.extract_strided_slice %261 {offsets = [0, 1], sizes = [16, 16], strides = [1, 1]} : vector<16x128xf32> to vector<16x16xf32>
    %c29_107 = arith.constant 29 : index
    %268 = memref.load %arg5[%c29_107] : memref<98xf32, #tpu.memory_space<smem>>
    %269 = vector.broadcast %268 : f32 to vector<16x16xf32>
    %270 = arith.mulf %269, %267 : vector<16x16xf32>
    %271 = arith.addf %250, %270 : vector<16x16xf32>
    %272 = vector.extract_strided_slice %261 {offsets = [0, 2], sizes = [16, 16], strides = [1, 1]} : vector<16x128xf32> to vector<16x16xf32>
    %c30_108 = arith.constant 30 : index
    %273 = memref.load %arg5[%c30_108] : memref<98xf32, #tpu.memory_space<smem>>
    %274 = vector.broadcast %273 : f32 to vector<16x16xf32>
    %275 = arith.mulf %274, %272 : vector<16x16xf32>
    %276 = arith.addf %255, %275 : vector<16x16xf32>
    %277 = vector.extract_strided_slice %261 {offsets = [0, 3], sizes = [16, 16], strides = [1, 1]} : vector<16x128xf32> to vector<16x16xf32>
    %c31_109 = arith.constant 31 : index
    %278 = memref.load %arg5[%c31_109] : memref<98xf32, #tpu.memory_space<smem>>
    %279 = vector.broadcast %278 : f32 to vector<16x16xf32>
    %280 = arith.mulf %279, %277 : vector<16x16xf32>
    %281 = arith.addf %260, %280 : vector<16x16xf32>
    %282 = vector.extract_strided_slice %261 {offsets = [0, 4], sizes = [16, 16], strides = [1, 1]} : vector<16x128xf32> to vector<16x16xf32>
    %c32_110 = arith.constant 32 : index
    %283 = memref.load %arg5[%c32_110] : memref<98xf32, #tpu.memory_space<smem>>
    %284 = vector.broadcast %283 : f32 to vector<16x16xf32>
    %285 = arith.mulf %284, %282 : vector<16x16xf32>
    %286 = arith.addf %266, %285 : vector<16x16xf32>
    %287 = vector.extract_strided_slice %261 {offsets = [0, 5], sizes = [16, 16], strides = [1, 1]} : vector<16x128xf32> to vector<16x16xf32>
    %c33_111 = arith.constant 33 : index
    %288 = memref.load %arg5[%c33_111] : memref<98xf32, #tpu.memory_space<smem>>
    %289 = vector.broadcast %288 : f32 to vector<16x16xf32>
    %290 = arith.mulf %289, %287 : vector<16x16xf32>
    %291 = arith.addf %271, %290 : vector<16x16xf32>
    %292 = vector.extract_strided_slice %261 {offsets = [0, 6], sizes = [16, 16], strides = [1, 1]} : vector<16x128xf32> to vector<16x16xf32>
    %c34_112 = arith.constant 34 : index
    %293 = memref.load %arg5[%c34_112] : memref<98xf32, #tpu.memory_space<smem>>
    %294 = vector.broadcast %293 : f32 to vector<16x16xf32>
    %295 = arith.mulf %294, %292 : vector<16x16xf32>
    %296 = arith.addf %276, %295 : vector<16x16xf32>
    %c5_113 = arith.constant 5 : index
    %c0_114 = arith.constant 0 : index
    %297 = vector.load %arg8[%c5_113, %c0_114] : memref<44x128xf32, #tpu.memory_space<vmem>>, vector<16x128xf32>
    %298 = vector.extract_strided_slice %297 {offsets = [0, 0], sizes = [16, 16], strides = [1, 1]} : vector<16x128xf32> to vector<16x16xf32>
    %c35_115 = arith.constant 35 : index
    %299 = memref.load %arg5[%c35_115] : memref<98xf32, #tpu.memory_space<smem>>
    %300 = vector.broadcast %299 : f32 to vector<16x16xf32>
    %301 = arith.mulf %300, %298 : vector<16x16xf32>
    %302 = arith.addf %281, %301 : vector<16x16xf32>
    %303 = vector.extract_strided_slice %297 {offsets = [0, 1], sizes = [16, 16], strides = [1, 1]} : vector<16x128xf32> to vector<16x16xf32>
    %c36_116 = arith.constant 36 : index
    %304 = memref.load %arg5[%c36_116] : memref<98xf32, #tpu.memory_space<smem>>
    %305 = vector.broadcast %304 : f32 to vector<16x16xf32>
    %306 = arith.mulf %305, %303 : vector<16x16xf32>
    %307 = arith.addf %286, %306 : vector<16x16xf32>
    %308 = vector.extract_strided_slice %297 {offsets = [0, 2], sizes = [16, 16], strides = [1, 1]} : vector<16x128xf32> to vector<16x16xf32>
    %c37_117 = arith.constant 37 : index
    %309 = memref.load %arg5[%c37_117] : memref<98xf32, #tpu.memory_space<smem>>
    %310 = vector.broadcast %309 : f32 to vector<16x16xf32>
    %311 = arith.mulf %310, %308 : vector<16x16xf32>
    %312 = arith.addf %291, %311 : vector<16x16xf32>
    %313 = vector.extract_strided_slice %297 {offsets = [0, 3], sizes = [16, 16], strides = [1, 1]} : vector<16x128xf32> to vector<16x16xf32>
    %c38_118 = arith.constant 38 : index
    %314 = memref.load %arg5[%c38_118] : memref<98xf32, #tpu.memory_space<smem>>
    %315 = vector.broadcast %314 : f32 to vector<16x16xf32>
    %316 = arith.mulf %315, %313 : vector<16x16xf32>
    %317 = arith.addf %296, %316 : vector<16x16xf32>
    %318 = vector.extract_strided_slice %297 {offsets = [0, 4], sizes = [16, 16], strides = [1, 1]} : vector<16x128xf32> to vector<16x16xf32>
    %c39_119 = arith.constant 39 : index
    %319 = memref.load %arg5[%c39_119] : memref<98xf32, #tpu.memory_space<smem>>
    %320 = vector.broadcast %319 : f32 to vector<16x16xf32>
    %321 = arith.mulf %320, %318 : vector<16x16xf32>
    %322 = arith.addf %302, %321 : vector<16x16xf32>
    %323 = vector.extract_strided_slice %297 {offsets = [0, 5], sizes = [16, 16], strides = [1, 1]} : vector<16x128xf32> to vector<16x16xf32>
    %c40_120 = arith.constant 40 : index
    %324 = memref.load %arg5[%c40_120] : memref<98xf32, #tpu.memory_space<smem>>
    %325 = vector.broadcast %324 : f32 to vector<16x16xf32>
    %326 = arith.mulf %325, %323 : vector<16x16xf32>
    %327 = arith.addf %307, %326 : vector<16x16xf32>
    %328 = vector.extract_strided_slice %297 {offsets = [0, 6], sizes = [16, 16], strides = [1, 1]} : vector<16x128xf32> to vector<16x16xf32>
    %c41_121 = arith.constant 41 : index
    %329 = memref.load %arg5[%c41_121] : memref<98xf32, #tpu.memory_space<smem>>
    %330 = vector.broadcast %329 : f32 to vector<16x16xf32>
    %331 = arith.mulf %330, %328 : vector<16x16xf32>
    %332 = arith.addf %312, %331 : vector<16x16xf32>
    %c6_122 = arith.constant 6 : index
    %c0_123 = arith.constant 0 : index
    %333 = vector.load %arg8[%c6_122, %c0_123] : memref<44x128xf32, #tpu.memory_space<vmem>>, vector<16x128xf32>
    %334 = vector.extract_strided_slice %333 {offsets = [0, 0], sizes = [16, 16], strides = [1, 1]} : vector<16x128xf32> to vector<16x16xf32>
    %c42 = arith.constant 42 : index
    %335 = memref.load %arg5[%c42] : memref<98xf32, #tpu.memory_space<smem>>
    %336 = vector.broadcast %335 : f32 to vector<16x16xf32>
    %337 = arith.mulf %336, %334 : vector<16x16xf32>
    %338 = arith.addf %317, %337 : vector<16x16xf32>
    %339 = vector.extract_strided_slice %333 {offsets = [0, 1], sizes = [16, 16], strides = [1, 1]} : vector<16x128xf32> to vector<16x16xf32>
    %c43 = arith.constant 43 : index
    %340 = memref.load %arg5[%c43] : memref<98xf32, #tpu.memory_space<smem>>
    %341 = vector.broadcast %340 : f32 to vector<16x16xf32>
    %342 = arith.mulf %341, %339 : vector<16x16xf32>
    %343 = arith.addf %322, %342 : vector<16x16xf32>
    %344 = vector.extract_strided_slice %333 {offsets = [0, 2], sizes = [16, 16], strides = [1, 1]} : vector<16x128xf32> to vector<16x16xf32>
    %c44 = arith.constant 44 : index
    %345 = memref.load %arg5[%c44] : memref<98xf32, #tpu.memory_space<smem>>
    %346 = vector.broadcast %345 : f32 to vector<16x16xf32>
    %347 = arith.mulf %346, %344 : vector<16x16xf32>
    %348 = arith.addf %327, %347 : vector<16x16xf32>
    %349 = vector.extract_strided_slice %333 {offsets = [0, 3], sizes = [16, 16], strides = [1, 1]} : vector<16x128xf32> to vector<16x16xf32>
    %c45 = arith.constant 45 : index
    %350 = memref.load %arg5[%c45] : memref<98xf32, #tpu.memory_space<smem>>
    %351 = vector.broadcast %350 : f32 to vector<16x16xf32>
    %352 = arith.mulf %351, %349 : vector<16x16xf32>
    %353 = arith.addf %332, %352 : vector<16x16xf32>
    %354 = vector.extract_strided_slice %333 {offsets = [0, 4], sizes = [16, 16], strides = [1, 1]} : vector<16x128xf32> to vector<16x16xf32>
    %c46 = arith.constant 46 : index
    %355 = memref.load %arg5[%c46] : memref<98xf32, #tpu.memory_space<smem>>
    %356 = vector.broadcast %355 : f32 to vector<16x16xf32>
    %357 = arith.mulf %356, %354 : vector<16x16xf32>
    %358 = arith.addf %338, %357 : vector<16x16xf32>
    %359 = vector.extract_strided_slice %333 {offsets = [0, 5], sizes = [16, 16], strides = [1, 1]} : vector<16x128xf32> to vector<16x16xf32>
    %c47 = arith.constant 47 : index
    %360 = memref.load %arg5[%c47] : memref<98xf32, #tpu.memory_space<smem>>
    %361 = vector.broadcast %360 : f32 to vector<16x16xf32>
    %362 = arith.mulf %361, %359 : vector<16x16xf32>
    %363 = arith.addf %343, %362 : vector<16x16xf32>
    %364 = vector.extract_strided_slice %333 {offsets = [0, 6], sizes = [16, 16], strides = [1, 1]} : vector<16x128xf32> to vector<16x16xf32>
    %c48 = arith.constant 48 : index
    %365 = memref.load %arg5[%c48] : memref<98xf32, #tpu.memory_space<smem>>
    %366 = vector.broadcast %365 : f32 to vector<16x16xf32>
    %367 = arith.mulf %366, %364 : vector<16x16xf32>
    %368 = arith.addf %348, %367 : vector<16x16xf32>
    %c22_124 = arith.constant 22 : index
    %c0_125 = arith.constant 0 : index
    %369 = vector.load %arg8[%c22_124, %c0_125] : memref<44x128xf32, #tpu.memory_space<vmem>>, vector<16x128xf32>
    %370 = vector.extract_strided_slice %369 {offsets = [0, 0], sizes = [16, 16], strides = [1, 1]} : vector<16x128xf32> to vector<16x16xf32>
    %c49 = arith.constant 49 : index
    %371 = memref.load %arg5[%c49] : memref<98xf32, #tpu.memory_space<smem>>
    %372 = vector.broadcast %371 : f32 to vector<16x16xf32>
    %373 = arith.mulf %372, %370 : vector<16x16xf32>
    %374 = arith.addf %353, %373 : vector<16x16xf32>
    %375 = vector.extract_strided_slice %369 {offsets = [0, 1], sizes = [16, 16], strides = [1, 1]} : vector<16x128xf32> to vector<16x16xf32>
    %c50 = arith.constant 50 : index
    %376 = memref.load %arg5[%c50] : memref<98xf32, #tpu.memory_space<smem>>
    %377 = vector.broadcast %376 : f32 to vector<16x16xf32>
    %378 = arith.mulf %377, %375 : vector<16x16xf32>
    %379 = arith.addf %358, %378 : vector<16x16xf32>
    %380 = vector.extract_strided_slice %369 {offsets = [0, 2], sizes = [16, 16], strides = [1, 1]} : vector<16x128xf32> to vector<16x16xf32>
    %c51 = arith.constant 51 : index
    %381 = memref.load %arg5[%c51] : memref<98xf32, #tpu.memory_space<smem>>
    %382 = vector.broadcast %381 : f32 to vector<16x16xf32>
    %383 = arith.mulf %382, %380 : vector<16x16xf32>
    %384 = arith.addf %363, %383 : vector<16x16xf32>
    %385 = vector.extract_strided_slice %369 {offsets = [0, 3], sizes = [16, 16], strides = [1, 1]} : vector<16x128xf32> to vector<16x16xf32>
    %c52 = arith.constant 52 : index
    %386 = memref.load %arg5[%c52] : memref<98xf32, #tpu.memory_space<smem>>
    %387 = vector.broadcast %386 : f32 to vector<16x16xf32>
    %388 = arith.mulf %387, %385 : vector<16x16xf32>
    %389 = arith.addf %368, %388 : vector<16x16xf32>
    %390 = vector.extract_strided_slice %369 {offsets = [0, 4], sizes = [16, 16], strides = [1, 1]} : vector<16x128xf32> to vector<16x16xf32>
    %c53 = arith.constant 53 : index
    %391 = memref.load %arg5[%c53] : memref<98xf32, #tpu.memory_space<smem>>
    %392 = vector.broadcast %391 : f32 to vector<16x16xf32>
    %393 = arith.mulf %392, %390 : vector<16x16xf32>
    %394 = arith.addf %374, %393 : vector<16x16xf32>
    %395 = vector.extract_strided_slice %369 {offsets = [0, 5], sizes = [16, 16], strides = [1, 1]} : vector<16x128xf32> to vector<16x16xf32>
    %c54 = arith.constant 54 : index
    %396 = memref.load %arg5[%c54] : memref<98xf32, #tpu.memory_space<smem>>
    %397 = vector.broadcast %396 : f32 to vector<16x16xf32>
    %398 = arith.mulf %397, %395 : vector<16x16xf32>
    %399 = arith.addf %379, %398 : vector<16x16xf32>
    %400 = vector.extract_strided_slice %369 {offsets = [0, 6], sizes = [16, 16], strides = [1, 1]} : vector<16x128xf32> to vector<16x16xf32>
    %c55 = arith.constant 55 : index
    %401 = memref.load %arg5[%c55] : memref<98xf32, #tpu.memory_space<smem>>
    %402 = vector.broadcast %401 : f32 to vector<16x16xf32>
    %403 = arith.mulf %402, %400 : vector<16x16xf32>
    %404 = arith.addf %384, %403 : vector<16x16xf32>
    %c23_126 = arith.constant 23 : index
    %c0_127 = arith.constant 0 : index
    %405 = vector.load %arg8[%c23_126, %c0_127] : memref<44x128xf32, #tpu.memory_space<vmem>>, vector<16x128xf32>
    %406 = vector.extract_strided_slice %405 {offsets = [0, 0], sizes = [16, 16], strides = [1, 1]} : vector<16x128xf32> to vector<16x16xf32>
    %c56 = arith.constant 56 : index
    %407 = memref.load %arg5[%c56] : memref<98xf32, #tpu.memory_space<smem>>
    %408 = vector.broadcast %407 : f32 to vector<16x16xf32>
    %409 = arith.mulf %408, %406 : vector<16x16xf32>
    %410 = arith.addf %389, %409 : vector<16x16xf32>
    %411 = vector.extract_strided_slice %405 {offsets = [0, 1], sizes = [16, 16], strides = [1, 1]} : vector<16x128xf32> to vector<16x16xf32>
    %c57 = arith.constant 57 : index
    %412 = memref.load %arg5[%c57] : memref<98xf32, #tpu.memory_space<smem>>
    %413 = vector.broadcast %412 : f32 to vector<16x16xf32>
    %414 = arith.mulf %413, %411 : vector<16x16xf32>
    %415 = arith.addf %394, %414 : vector<16x16xf32>
    %416 = vector.extract_strided_slice %405 {offsets = [0, 2], sizes = [16, 16], strides = [1, 1]} : vector<16x128xf32> to vector<16x16xf32>
    %c58 = arith.constant 58 : index
    %417 = memref.load %arg5[%c58] : memref<98xf32, #tpu.memory_space<smem>>
    %418 = vector.broadcast %417 : f32 to vector<16x16xf32>
    %419 = arith.mulf %418, %416 : vector<16x16xf32>
    %420 = arith.addf %399, %419 : vector<16x16xf32>
    %421 = vector.extract_strided_slice %405 {offsets = [0, 3], sizes = [16, 16], strides = [1, 1]} : vector<16x128xf32> to vector<16x16xf32>
    %c59 = arith.constant 59 : index
    %422 = memref.load %arg5[%c59] : memref<98xf32, #tpu.memory_space<smem>>
    %423 = vector.broadcast %422 : f32 to vector<16x16xf32>
    %424 = arith.mulf %423, %421 : vector<16x16xf32>
    %425 = arith.addf %404, %424 : vector<16x16xf32>
    %426 = vector.extract_strided_slice %405 {offsets = [0, 4], sizes = [16, 16], strides = [1, 1]} : vector<16x128xf32> to vector<16x16xf32>
    %c60 = arith.constant 60 : index
    %427 = memref.load %arg5[%c60] : memref<98xf32, #tpu.memory_space<smem>>
    %428 = vector.broadcast %427 : f32 to vector<16x16xf32>
    %429 = arith.mulf %428, %426 : vector<16x16xf32>
    %430 = arith.addf %410, %429 : vector<16x16xf32>
    %431 = vector.extract_strided_slice %405 {offsets = [0, 5], sizes = [16, 16], strides = [1, 1]} : vector<16x128xf32> to vector<16x16xf32>
    %c61 = arith.constant 61 : index
    %432 = memref.load %arg5[%c61] : memref<98xf32, #tpu.memory_space<smem>>
    %433 = vector.broadcast %432 : f32 to vector<16x16xf32>
    %434 = arith.mulf %433, %431 : vector<16x16xf32>
    %435 = arith.addf %415, %434 : vector<16x16xf32>
    %436 = vector.extract_strided_slice %405 {offsets = [0, 6], sizes = [16, 16], strides = [1, 1]} : vector<16x128xf32> to vector<16x16xf32>
    %c62 = arith.constant 62 : index
    %437 = memref.load %arg5[%c62] : memref<98xf32, #tpu.memory_space<smem>>
    %438 = vector.broadcast %437 : f32 to vector<16x16xf32>
    %439 = arith.mulf %438, %436 : vector<16x16xf32>
    %440 = arith.addf %420, %439 : vector<16x16xf32>
    %c24_128 = arith.constant 24 : index
    %c0_129 = arith.constant 0 : index
    %441 = vector.load %arg8[%c24_128, %c0_129] : memref<44x128xf32, #tpu.memory_space<vmem>>, vector<16x128xf32>
    %442 = vector.extract_strided_slice %441 {offsets = [0, 0], sizes = [16, 16], strides = [1, 1]} : vector<16x128xf32> to vector<16x16xf32>
    %c63 = arith.constant 63 : index
    %443 = memref.load %arg5[%c63] : memref<98xf32, #tpu.memory_space<smem>>
    %444 = vector.broadcast %443 : f32 to vector<16x16xf32>
    %445 = arith.mulf %444, %442 : vector<16x16xf32>
    %446 = arith.addf %425, %445 : vector<16x16xf32>
    %447 = vector.extract_strided_slice %441 {offsets = [0, 1], sizes = [16, 16], strides = [1, 1]} : vector<16x128xf32> to vector<16x16xf32>
    %c64 = arith.constant 64 : index
    %448 = memref.load %arg5[%c64] : memref<98xf32, #tpu.memory_space<smem>>
    %449 = vector.broadcast %448 : f32 to vector<16x16xf32>
    %450 = arith.mulf %449, %447 : vector<16x16xf32>
    %451 = arith.addf %430, %450 : vector<16x16xf32>
    %452 = vector.extract_strided_slice %441 {offsets = [0, 2], sizes = [16, 16], strides = [1, 1]} : vector<16x128xf32> to vector<16x16xf32>
    %c65 = arith.constant 65 : index
    %453 = memref.load %arg5[%c65] : memref<98xf32, #tpu.memory_space<smem>>
    %454 = vector.broadcast %453 : f32 to vector<16x16xf32>
    %455 = arith.mulf %454, %452 : vector<16x16xf32>
    %456 = arith.addf %435, %455 : vector<16x16xf32>
    %457 = vector.extract_strided_slice %441 {offsets = [0, 3], sizes = [16, 16], strides = [1, 1]} : vector<16x128xf32> to vector<16x16xf32>
    %c66 = arith.constant 66 : index
    %458 = memref.load %arg5[%c66] : memref<98xf32, #tpu.memory_space<smem>>
    %459 = vector.broadcast %458 : f32 to vector<16x16xf32>
    %460 = arith.mulf %459, %457 : vector<16x16xf32>
    %461 = arith.addf %440, %460 : vector<16x16xf32>
    %462 = vector.extract_strided_slice %441 {offsets = [0, 4], sizes = [16, 16], strides = [1, 1]} : vector<16x128xf32> to vector<16x16xf32>
    %c67 = arith.constant 67 : index
    %463 = memref.load %arg5[%c67] : memref<98xf32, #tpu.memory_space<smem>>
    %464 = vector.broadcast %463 : f32 to vector<16x16xf32>
    %465 = arith.mulf %464, %462 : vector<16x16xf32>
    %466 = arith.addf %446, %465 : vector<16x16xf32>
    %467 = vector.extract_strided_slice %441 {offsets = [0, 5], sizes = [16, 16], strides = [1, 1]} : vector<16x128xf32> to vector<16x16xf32>
    %c68 = arith.constant 68 : index
    %468 = memref.load %arg5[%c68] : memref<98xf32, #tpu.memory_space<smem>>
    %469 = vector.broadcast %468 : f32 to vector<16x16xf32>
    %470 = arith.mulf %469, %467 : vector<16x16xf32>
    %471 = arith.addf %451, %470 : vector<16x16xf32>
    %472 = vector.extract_strided_slice %441 {offsets = [0, 6], sizes = [16, 16], strides = [1, 1]} : vector<16x128xf32> to vector<16x16xf32>
    %c69 = arith.constant 69 : index
    %473 = memref.load %arg5[%c69] : memref<98xf32, #tpu.memory_space<smem>>
    %474 = vector.broadcast %473 : f32 to vector<16x16xf32>
    %475 = arith.mulf %474, %472 : vector<16x16xf32>
    %476 = arith.addf %456, %475 : vector<16x16xf32>
    %c25_130 = arith.constant 25 : index
    %c0_131 = arith.constant 0 : index
    %477 = vector.load %arg8[%c25_130, %c0_131] : memref<44x128xf32, #tpu.memory_space<vmem>>, vector<16x128xf32>
    %478 = vector.extract_strided_slice %477 {offsets = [0, 0], sizes = [16, 16], strides = [1, 1]} : vector<16x128xf32> to vector<16x16xf32>
    %c70 = arith.constant 70 : index
    %479 = memref.load %arg5[%c70] : memref<98xf32, #tpu.memory_space<smem>>
    %480 = vector.broadcast %479 : f32 to vector<16x16xf32>
    %481 = arith.mulf %480, %478 : vector<16x16xf32>
    %482 = arith.addf %461, %481 : vector<16x16xf32>
    %483 = vector.extract_strided_slice %477 {offsets = [0, 1], sizes = [16, 16], strides = [1, 1]} : vector<16x128xf32> to vector<16x16xf32>
    %c71 = arith.constant 71 : index
    %484 = memref.load %arg5[%c71] : memref<98xf32, #tpu.memory_space<smem>>
    %485 = vector.broadcast %484 : f32 to vector<16x16xf32>
    %486 = arith.mulf %485, %483 : vector<16x16xf32>
    %487 = arith.addf %466, %486 : vector<16x16xf32>
    %488 = vector.extract_strided_slice %477 {offsets = [0, 2], sizes = [16, 16], strides = [1, 1]} : vector<16x128xf32> to vector<16x16xf32>
    %c72 = arith.constant 72 : index
    %489 = memref.load %arg5[%c72] : memref<98xf32, #tpu.memory_space<smem>>
    %490 = vector.broadcast %489 : f32 to vector<16x16xf32>
    %491 = arith.mulf %490, %488 : vector<16x16xf32>
    %492 = arith.addf %471, %491 : vector<16x16xf32>
    %493 = vector.extract_strided_slice %477 {offsets = [0, 3], sizes = [16, 16], strides = [1, 1]} : vector<16x128xf32> to vector<16x16xf32>
    %c73 = arith.constant 73 : index
    %494 = memref.load %arg5[%c73] : memref<98xf32, #tpu.memory_space<smem>>
    %495 = vector.broadcast %494 : f32 to vector<16x16xf32>
    %496 = arith.mulf %495, %493 : vector<16x16xf32>
    %497 = arith.addf %476, %496 : vector<16x16xf32>
    %498 = vector.extract_strided_slice %477 {offsets = [0, 4], sizes = [16, 16], strides = [1, 1]} : vector<16x128xf32> to vector<16x16xf32>
    %c74 = arith.constant 74 : index
    %499 = memref.load %arg5[%c74] : memref<98xf32, #tpu.memory_space<smem>>
    %500 = vector.broadcast %499 : f32 to vector<16x16xf32>
    %501 = arith.mulf %500, %498 : vector<16x16xf32>
    %502 = arith.addf %482, %501 : vector<16x16xf32>
    %503 = vector.extract_strided_slice %477 {offsets = [0, 5], sizes = [16, 16], strides = [1, 1]} : vector<16x128xf32> to vector<16x16xf32>
    %c75 = arith.constant 75 : index
    %504 = memref.load %arg5[%c75] : memref<98xf32, #tpu.memory_space<smem>>
    %505 = vector.broadcast %504 : f32 to vector<16x16xf32>
    %506 = arith.mulf %505, %503 : vector<16x16xf32>
    %507 = arith.addf %487, %506 : vector<16x16xf32>
    %508 = vector.extract_strided_slice %477 {offsets = [0, 6], sizes = [16, 16], strides = [1, 1]} : vector<16x128xf32> to vector<16x16xf32>
    %c76 = arith.constant 76 : index
    %509 = memref.load %arg5[%c76] : memref<98xf32, #tpu.memory_space<smem>>
    %510 = vector.broadcast %509 : f32 to vector<16x16xf32>
    %511 = arith.mulf %510, %508 : vector<16x16xf32>
    %512 = arith.addf %492, %511 : vector<16x16xf32>
    %c26_132 = arith.constant 26 : index
    %c0_133 = arith.constant 0 : index
    %513 = vector.load %arg8[%c26_132, %c0_133] : memref<44x128xf32, #tpu.memory_space<vmem>>, vector<16x128xf32>
    %514 = vector.extract_strided_slice %513 {offsets = [0, 0], sizes = [16, 16], strides = [1, 1]} : vector<16x128xf32> to vector<16x16xf32>
    %c77 = arith.constant 77 : index
    %515 = memref.load %arg5[%c77] : memref<98xf32, #tpu.memory_space<smem>>
    %516 = vector.broadcast %515 : f32 to vector<16x16xf32>
    %517 = arith.mulf %516, %514 : vector<16x16xf32>
    %518 = arith.addf %497, %517 : vector<16x16xf32>
    %519 = vector.extract_strided_slice %513 {offsets = [0, 1], sizes = [16, 16], strides = [1, 1]} : vector<16x128xf32> to vector<16x16xf32>
    %c78 = arith.constant 78 : index
    %520 = memref.load %arg5[%c78] : memref<98xf32, #tpu.memory_space<smem>>
    %521 = vector.broadcast %520 : f32 to vector<16x16xf32>
    %522 = arith.mulf %521, %519 : vector<16x16xf32>
    %523 = arith.addf %502, %522 : vector<16x16xf32>
    %524 = vector.extract_strided_slice %513 {offsets = [0, 2], sizes = [16, 16], strides = [1, 1]} : vector<16x128xf32> to vector<16x16xf32>
    %c79 = arith.constant 79 : index
    %525 = memref.load %arg5[%c79] : memref<98xf32, #tpu.memory_space<smem>>
    %526 = vector.broadcast %525 : f32 to vector<16x16xf32>
    %527 = arith.mulf %526, %524 : vector<16x16xf32>
    %528 = arith.addf %507, %527 : vector<16x16xf32>
    %529 = vector.extract_strided_slice %513 {offsets = [0, 3], sizes = [16, 16], strides = [1, 1]} : vector<16x128xf32> to vector<16x16xf32>
    %c80 = arith.constant 80 : index
    %530 = memref.load %arg5[%c80] : memref<98xf32, #tpu.memory_space<smem>>
    %531 = vector.broadcast %530 : f32 to vector<16x16xf32>
    %532 = arith.mulf %531, %529 : vector<16x16xf32>
    %533 = arith.addf %512, %532 : vector<16x16xf32>
    %534 = vector.extract_strided_slice %513 {offsets = [0, 4], sizes = [16, 16], strides = [1, 1]} : vector<16x128xf32> to vector<16x16xf32>
    %c81 = arith.constant 81 : index
    %535 = memref.load %arg5[%c81] : memref<98xf32, #tpu.memory_space<smem>>
    %536 = vector.broadcast %535 : f32 to vector<16x16xf32>
    %537 = arith.mulf %536, %534 : vector<16x16xf32>
    %538 = arith.addf %518, %537 : vector<16x16xf32>
    %539 = vector.extract_strided_slice %513 {offsets = [0, 5], sizes = [16, 16], strides = [1, 1]} : vector<16x128xf32> to vector<16x16xf32>
    %c82 = arith.constant 82 : index
    %540 = memref.load %arg5[%c82] : memref<98xf32, #tpu.memory_space<smem>>
    %541 = vector.broadcast %540 : f32 to vector<16x16xf32>
    %542 = arith.mulf %541, %539 : vector<16x16xf32>
    %543 = arith.addf %523, %542 : vector<16x16xf32>
    %544 = vector.extract_strided_slice %513 {offsets = [0, 6], sizes = [16, 16], strides = [1, 1]} : vector<16x128xf32> to vector<16x16xf32>
    %c83 = arith.constant 83 : index
    %545 = memref.load %arg5[%c83] : memref<98xf32, #tpu.memory_space<smem>>
    %546 = vector.broadcast %545 : f32 to vector<16x16xf32>
    %547 = arith.mulf %546, %544 : vector<16x16xf32>
    %548 = arith.addf %528, %547 : vector<16x16xf32>
    %c27_134 = arith.constant 27 : index
    %c0_135 = arith.constant 0 : index
    %549 = vector.load %arg8[%c27_134, %c0_135] : memref<44x128xf32, #tpu.memory_space<vmem>>, vector<16x128xf32>
    %550 = vector.extract_strided_slice %549 {offsets = [0, 0], sizes = [16, 16], strides = [1, 1]} : vector<16x128xf32> to vector<16x16xf32>
    %c84 = arith.constant 84 : index
    %551 = memref.load %arg5[%c84] : memref<98xf32, #tpu.memory_space<smem>>
    %552 = vector.broadcast %551 : f32 to vector<16x16xf32>
    %553 = arith.mulf %552, %550 : vector<16x16xf32>
    %554 = arith.addf %533, %553 : vector<16x16xf32>
    %555 = vector.extract_strided_slice %549 {offsets = [0, 1], sizes = [16, 16], strides = [1, 1]} : vector<16x128xf32> to vector<16x16xf32>
    %c85 = arith.constant 85 : index
    %556 = memref.load %arg5[%c85] : memref<98xf32, #tpu.memory_space<smem>>
    %557 = vector.broadcast %556 : f32 to vector<16x16xf32>
    %558 = arith.mulf %557, %555 : vector<16x16xf32>
    %559 = arith.addf %538, %558 : vector<16x16xf32>
    %560 = vector.extract_strided_slice %549 {offsets = [0, 2], sizes = [16, 16], strides = [1, 1]} : vector<16x128xf32> to vector<16x16xf32>
    %c86 = arith.constant 86 : index
    %561 = memref.load %arg5[%c86] : memref<98xf32, #tpu.memory_space<smem>>
    %562 = vector.broadcast %561 : f32 to vector<16x16xf32>
    %563 = arith.mulf %562, %560 : vector<16x16xf32>
    %564 = arith.addf %543, %563 : vector<16x16xf32>
    %565 = vector.extract_strided_slice %549 {offsets = [0, 3], sizes = [16, 16], strides = [1, 1]} : vector<16x128xf32> to vector<16x16xf32>
    %c87 = arith.constant 87 : index
    %566 = memref.load %arg5[%c87] : memref<98xf32, #tpu.memory_space<smem>>
    %567 = vector.broadcast %566 : f32 to vector<16x16xf32>
    %568 = arith.mulf %567, %565 : vector<16x16xf32>
    %569 = arith.addf %548, %568 : vector<16x16xf32>
    %570 = vector.extract_strided_slice %549 {offsets = [0, 4], sizes = [16, 16], strides = [1, 1]} : vector<16x128xf32> to vector<16x16xf32>
    %c88 = arith.constant 88 : index
    %571 = memref.load %arg5[%c88] : memref<98xf32, #tpu.memory_space<smem>>
    %572 = vector.broadcast %571 : f32 to vector<16x16xf32>
    %573 = arith.mulf %572, %570 : vector<16x16xf32>
    %574 = arith.addf %554, %573 : vector<16x16xf32>
    %575 = vector.extract_strided_slice %549 {offsets = [0, 5], sizes = [16, 16], strides = [1, 1]} : vector<16x128xf32> to vector<16x16xf32>
    %c89 = arith.constant 89 : index
    %576 = memref.load %arg5[%c89] : memref<98xf32, #tpu.memory_space<smem>>
    %577 = vector.broadcast %576 : f32 to vector<16x16xf32>
    %578 = arith.mulf %577, %575 : vector<16x16xf32>
    %579 = arith.addf %559, %578 : vector<16x16xf32>
    %580 = vector.extract_strided_slice %549 {offsets = [0, 6], sizes = [16, 16], strides = [1, 1]} : vector<16x128xf32> to vector<16x16xf32>
    %c90 = arith.constant 90 : index
    %581 = memref.load %arg5[%c90] : memref<98xf32, #tpu.memory_space<smem>>
    %582 = vector.broadcast %581 : f32 to vector<16x16xf32>
    %583 = arith.mulf %582, %580 : vector<16x16xf32>
    %584 = arith.addf %564, %583 : vector<16x16xf32>
    %c28_136 = arith.constant 28 : index
    %c0_137 = arith.constant 0 : index
    %585 = vector.load %arg8[%c28_136, %c0_137] : memref<44x128xf32, #tpu.memory_space<vmem>>, vector<16x128xf32>
    %586 = vector.extract_strided_slice %585 {offsets = [0, 0], sizes = [16, 16], strides = [1, 1]} : vector<16x128xf32> to vector<16x16xf32>
    %c91 = arith.constant 91 : index
    %587 = memref.load %arg5[%c91] : memref<98xf32, #tpu.memory_space<smem>>
    %588 = vector.broadcast %587 : f32 to vector<16x16xf32>
    %589 = arith.mulf %588, %586 : vector<16x16xf32>
    %590 = arith.addf %569, %589 : vector<16x16xf32>
    %591 = vector.extract_strided_slice %585 {offsets = [0, 1], sizes = [16, 16], strides = [1, 1]} : vector<16x128xf32> to vector<16x16xf32>
    %c92 = arith.constant 92 : index
    %592 = memref.load %arg5[%c92] : memref<98xf32, #tpu.memory_space<smem>>
    %593 = vector.broadcast %592 : f32 to vector<16x16xf32>
    %594 = arith.mulf %593, %591 : vector<16x16xf32>
    %595 = arith.addf %574, %594 : vector<16x16xf32>
    %596 = vector.extract_strided_slice %585 {offsets = [0, 2], sizes = [16, 16], strides = [1, 1]} : vector<16x128xf32> to vector<16x16xf32>
    %c93 = arith.constant 93 : index
    %597 = memref.load %arg5[%c93] : memref<98xf32, #tpu.memory_space<smem>>
    %598 = vector.broadcast %597 : f32 to vector<16x16xf32>
    %599 = arith.mulf %598, %596 : vector<16x16xf32>
    %600 = arith.addf %579, %599 : vector<16x16xf32>
    %601 = vector.extract_strided_slice %585 {offsets = [0, 3], sizes = [16, 16], strides = [1, 1]} : vector<16x128xf32> to vector<16x16xf32>
    %c94 = arith.constant 94 : index
    %602 = memref.load %arg5[%c94] : memref<98xf32, #tpu.memory_space<smem>>
    %603 = vector.broadcast %602 : f32 to vector<16x16xf32>
    %604 = arith.mulf %603, %601 : vector<16x16xf32>
    %605 = arith.addf %584, %604 : vector<16x16xf32>
    %606 = vector.extract_strided_slice %585 {offsets = [0, 4], sizes = [16, 16], strides = [1, 1]} : vector<16x128xf32> to vector<16x16xf32>
    %c95 = arith.constant 95 : index
    %607 = memref.load %arg5[%c95] : memref<98xf32, #tpu.memory_space<smem>>
    %608 = vector.broadcast %607 : f32 to vector<16x16xf32>
    %609 = arith.mulf %608, %606 : vector<16x16xf32>
    %610 = arith.addf %590, %609 : vector<16x16xf32>
    %611 = vector.extract_strided_slice %585 {offsets = [0, 5], sizes = [16, 16], strides = [1, 1]} : vector<16x128xf32> to vector<16x16xf32>
    %c96 = arith.constant 96 : index
    %612 = memref.load %arg5[%c96] : memref<98xf32, #tpu.memory_space<smem>>
    %613 = vector.broadcast %612 : f32 to vector<16x16xf32>
    %614 = arith.mulf %613, %611 : vector<16x16xf32>
    %615 = arith.addf %595, %614 : vector<16x16xf32>
    %616 = vector.extract_strided_slice %585 {offsets = [0, 6], sizes = [16, 16], strides = [1, 1]} : vector<16x128xf32> to vector<16x16xf32>
    %c97 = arith.constant 97 : index
    %617 = memref.load %arg5[%c97] : memref<98xf32, #tpu.memory_space<smem>>
    %618 = vector.broadcast %617 : f32 to vector<16x16xf32>
    %619 = arith.mulf %618, %616 : vector<16x16xf32>
    %620 = arith.addf %600, %619 : vector<16x16xf32>
    %621 = arith.addf %615, %620 : vector<16x16xf32>
    %622 = arith.addf %605, %610 : vector<16x16xf32>
    %623 = arith.addf %621, %622 : vector<16x16xf32>
    %c0_138 = arith.constant 0 : index
    %624 = memref.load %arg6[%c0_138] : memref<1xf32, #tpu.memory_space<smem>>
    %625 = vector.broadcast %624 : f32 to vector<16x16xf32>
    %626 = arith.addf %623, %625 : vector<16x16xf32>
    %627 = arith.negf %626 : vector<16x16xf32>
    %628 = math.exp %627 : vector<16x16xf32>
    %cst_139 = arith.constant 1.000000e+00 : f32
    %629 = vector.broadcast %cst_139 : f32 to vector<16x16xf32>
    %630 = arith.addf %629, %628 : vector<16x16xf32>
    %631 = arith.divf %629, %630 : vector<16x16xf32>
    %632 = vector.extract_strided_slice %631 {offsets = [0, 0], sizes = [1, 16], strides = [1, 1]} : vector<16x16xf32> to vector<1x16xf32>
    %c0_140 = arith.constant 0 : index
    %c0_141 = arith.constant 0 : index
    %633 = vector.load %arg9[%c0_140, %c0_141] : memref<1x256xf32, #tpu.memory_space<vmem>>, vector<1x16xf32>
    tpu.vector_store %arg9[%c0_140, %c0_141], %632 {strides = array<i32>} : memref<1x256xf32, #tpu.memory_space<vmem>>, vector<1x16xf32>,
    %634 = vector.extract_strided_slice %631 {offsets = [1, 0], sizes = [1, 16], strides = [1, 1]} : vector<16x16xf32> to vector<1x16xf32>
    %c0_142 = arith.constant 0 : index
    %c16_143 = arith.constant 16 : index
    %635 = vector.load %arg9[%c0_142, %c16_143] : memref<1x256xf32, #tpu.memory_space<vmem>>, vector<1x16xf32>
    tpu.vector_store %arg9[%c0_142, %c16_143], %634 {strides = array<i32>} : memref<1x256xf32, #tpu.memory_space<vmem>>, vector<1x16xf32>,
    %636 = vector.extract_strided_slice %631 {offsets = [2, 0], sizes = [1, 16], strides = [1, 1]} : vector<16x16xf32> to vector<1x16xf32>
    %c0_144 = arith.constant 0 : index
    %c32_145 = arith.constant 32 : index
    %637 = vector.load %arg9[%c0_144, %c32_145] : memref<1x256xf32, #tpu.memory_space<vmem>>, vector<1x16xf32>
    tpu.vector_store %arg9[%c0_144, %c32_145], %636 {strides = array<i32>} : memref<1x256xf32, #tpu.memory_space<vmem>>, vector<1x16xf32>,
    %638 = vector.extract_strided_slice %631 {offsets = [3, 0], sizes = [1, 16], strides = [1, 1]} : vector<16x16xf32> to vector<1x16xf32>
    %c0_146 = arith.constant 0 : index
    %c48_147 = arith.constant 48 : index
    %639 = vector.load %arg9[%c0_146, %c48_147] : memref<1x256xf32, #tpu.memory_space<vmem>>, vector<1x16xf32>
    tpu.vector_store %arg9[%c0_146, %c48_147], %638 {strides = array<i32>} : memref<1x256xf32, #tpu.memory_space<vmem>>, vector<1x16xf32>,
    %640 = vector.extract_strided_slice %631 {offsets = [4, 0], sizes = [1, 16], strides = [1, 1]} : vector<16x16xf32> to vector<1x16xf32>
    %c0_148 = arith.constant 0 : index
    %c64_149 = arith.constant 64 : index
    %641 = vector.load %arg9[%c0_148, %c64_149] : memref<1x256xf32, #tpu.memory_space<vmem>>, vector<1x16xf32>
    tpu.vector_store %arg9[%c0_148, %c64_149], %640 {strides = array<i32>} : memref<1x256xf32, #tpu.memory_space<vmem>>, vector<1x16xf32>,
    %642 = vector.extract_strided_slice %631 {offsets = [5, 0], sizes = [1, 16], strides = [1, 1]} : vector<16x16xf32> to vector<1x16xf32>
    %c0_150 = arith.constant 0 : index
    %c80_151 = arith.constant 80 : index
    %643 = vector.load %arg9[%c0_150, %c80_151] : memref<1x256xf32, #tpu.memory_space<vmem>>, vector<1x16xf32>
    tpu.vector_store %arg9[%c0_150, %c80_151], %642 {strides = array<i32>} : memref<1x256xf32, #tpu.memory_space<vmem>>, vector<1x16xf32>,
    %644 = vector.extract_strided_slice %631 {offsets = [6, 0], sizes = [1, 16], strides = [1, 1]} : vector<16x16xf32> to vector<1x16xf32>
    %c0_152 = arith.constant 0 : index
    %c96_153 = arith.constant 96 : index
    %645 = vector.load %arg9[%c0_152, %c96_153] : memref<1x256xf32, #tpu.memory_space<vmem>>, vector<1x16xf32>
    tpu.vector_store %arg9[%c0_152, %c96_153], %644 {strides = array<i32>} : memref<1x256xf32, #tpu.memory_space<vmem>>, vector<1x16xf32>,
    %646 = vector.extract_strided_slice %631 {offsets = [7, 0], sizes = [1, 16], strides = [1, 1]} : vector<16x16xf32> to vector<1x16xf32>
    %c0_154 = arith.constant 0 : index
    %c112 = arith.constant 112 : index
    %647 = vector.load %arg9[%c0_154, %c112] : memref<1x256xf32, #tpu.memory_space<vmem>>, vector<1x16xf32>
    tpu.vector_store %arg9[%c0_154, %c112], %646 {strides = array<i32>} : memref<1x256xf32, #tpu.memory_space<vmem>>, vector<1x16xf32>,
    %648 = vector.extract_strided_slice %631 {offsets = [8, 0], sizes = [1, 16], strides = [1, 1]} : vector<16x16xf32> to vector<1x16xf32>
    %c0_155 = arith.constant 0 : index
    %c128 = arith.constant 128 : index
    %649 = vector.load %arg9[%c0_155, %c128] : memref<1x256xf32, #tpu.memory_space<vmem>>, vector<1x16xf32>
    tpu.vector_store %arg9[%c0_155, %c128], %648 {strides = array<i32>} : memref<1x256xf32, #tpu.memory_space<vmem>>, vector<1x16xf32>,
    %650 = vector.extract_strided_slice %631 {offsets = [9, 0], sizes = [1, 16], strides = [1, 1]} : vector<16x16xf32> to vector<1x16xf32>
    %c0_156 = arith.constant 0 : index
    %c144 = arith.constant 144 : index
    %651 = vector.load %arg9[%c0_156, %c144] : memref<1x256xf32, #tpu.memory_space<vmem>>, vector<1x16xf32>
    tpu.vector_store %arg9[%c0_156, %c144], %650 {strides = array<i32>} : memref<1x256xf32, #tpu.memory_space<vmem>>, vector<1x16xf32>,
    %652 = vector.extract_strided_slice %631 {offsets = [10, 0], sizes = [1, 16], strides = [1, 1]} : vector<16x16xf32> to vector<1x16xf32>
    %c0_157 = arith.constant 0 : index
    %c160 = arith.constant 160 : index
    %653 = vector.load %arg9[%c0_157, %c160] : memref<1x256xf32, #tpu.memory_space<vmem>>, vector<1x16xf32>
    tpu.vector_store %arg9[%c0_157, %c160], %652 {strides = array<i32>} : memref<1x256xf32, #tpu.memory_space<vmem>>, vector<1x16xf32>,
    %654 = vector.extract_strided_slice %631 {offsets = [11, 0], sizes = [1, 16], strides = [1, 1]} : vector<16x16xf32> to vector<1x16xf32>
    %c0_158 = arith.constant 0 : index
    %c176 = arith.constant 176 : index
    %655 = vector.load %arg9[%c0_158, %c176] : memref<1x256xf32, #tpu.memory_space<vmem>>, vector<1x16xf32>
    tpu.vector_store %arg9[%c0_158, %c176], %654 {strides = array<i32>} : memref<1x256xf32, #tpu.memory_space<vmem>>, vector<1x16xf32>,
    %656 = vector.extract_strided_slice %631 {offsets = [12, 0], sizes = [1, 16], strides = [1, 1]} : vector<16x16xf32> to vector<1x16xf32>
    %c0_159 = arith.constant 0 : index
    %c192 = arith.constant 192 : index
    %657 = vector.load %arg9[%c0_159, %c192] : memref<1x256xf32, #tpu.memory_space<vmem>>, vector<1x16xf32>
    tpu.vector_store %arg9[%c0_159, %c192], %656 {strides = array<i32>} : memref<1x256xf32, #tpu.memory_space<vmem>>, vector<1x16xf32>,
    %658 = vector.extract_strided_slice %631 {offsets = [13, 0], sizes = [1, 16], strides = [1, 1]} : vector<16x16xf32> to vector<1x16xf32>
    %c0_160 = arith.constant 0 : index
    %c208 = arith.constant 208 : index
    %659 = vector.load %arg9[%c0_160, %c208] : memref<1x256xf32, #tpu.memory_space<vmem>>, vector<1x16xf32>
    tpu.vector_store %arg9[%c0_160, %c208], %658 {strides = array<i32>} : memref<1x256xf32, #tpu.memory_space<vmem>>, vector<1x16xf32>,
    %660 = vector.extract_strided_slice %631 {offsets = [14, 0], sizes = [1, 16], strides = [1, 1]} : vector<16x16xf32> to vector<1x16xf32>
    %c0_161 = arith.constant 0 : index
    %c224 = arith.constant 224 : index
    %661 = vector.load %arg9[%c0_161, %c224] : memref<1x256xf32, #tpu.memory_space<vmem>>, vector<1x16xf32>
    tpu.vector_store %arg9[%c0_161, %c224], %660 {strides = array<i32>} : memref<1x256xf32, #tpu.memory_space<vmem>>, vector<1x16xf32>,
    %662 = vector.extract_strided_slice %631 {offsets = [15, 0], sizes = [1, 16], strides = [1, 1]} : vector<16x16xf32> to vector<1x16xf32>
    %c0_162 = arith.constant 0 : index
    %c240 = arith.constant 240 : index
    %663 = vector.load %arg9[%c0_162, %c240] : memref<1x256xf32, #tpu.memory_space<vmem>>, vector<1x16xf32>
    tpu.vector_store %arg9[%c0_162, %c240], %662 {strides = array<i32>} : memref<1x256xf32, #tpu.memory_space<vmem>>, vector<1x16xf32>,
    %c0_163 = arith.constant 0 : index
    %c0_164 = arith.constant 0 : index
    %c0_165 = arith.constant 0 : index
    %664 = vector.load %arg7[%c0_163, %c0_164, %c0_165] : memref<1x16x256xf32, #tpu.memory_space<vmem>>, vector<1x16x256xf32>
    %665 = vector.shape_cast %664 : vector<1x16x256xf32> to vector<16x256xf32>
    %c0_166 = arith.constant 0 : index
    %c0_167 = arith.constant 0 : index
    %666 = vector.load %arg9[%c0_166, %c0_167] : memref<1x256xf32, #tpu.memory_space<vmem>>, vector<1x256xf32>
    %667 = vector.broadcast %666 : vector<1x256xf32> to vector<16x256xf32>
    %668 = arith.mulf %665, %667 : vector<16x256xf32>
    %c0_168 = arith.constant 0 : index
    %c0_169 = arith.constant 0 : index
    %c0_170 = arith.constant 0 : index
    %669 = vector.load %arg7[%c0_168, %c0_169, %c0_170] : memref<1x16x256xf32, #tpu.memory_space<vmem>>, vector<1x16x256xf32>
    %670 = vector.shape_cast %669 : vector<1x16x256xf32> to vector<16x256xf32>
    %671 = vector.shape_cast %668 : vector<16x256xf32> to vector<1x16x256xf32>
    tpu.vector_store %arg7[%c0_168, %c0_169, %c0_170], %671 {strides = array<i32>} : memref<1x16x256xf32, #tpu.memory_space<vmem>>, vector<1x16x256xf32>,
    return
  }
  func.func @transform_0(%arg0: i32) -> (i32, i32, i32) {
    %c0_i32 = arith.constant 0 : i32
    %c0_i32_0 = arith.constant 0 : i32
    %c0_i32_1 = arith.constant 0 : i32
    return %arg0, %c0_i32, %c0_i32_0 : i32, i32, i32
  }
  func.func @transform_1(%arg0: i32) -> (i32, i32) {
    %c0_i32 = arith.constant 0 : i32
    %c0_i32_0 = arith.constant 0 : i32
    %c0_i32_1 = arith.constant 0 : i32
    return %c0_i32, %c0_i32_0 : i32, i32
  }
  func.func @transform_2(%arg0: i32) -> (i32, i32) {
    %c0_i32 = arith.constant 0 : i32
    %c0_i32_0 = arith.constant 0 : i32
    %c0_i32_1 = arith.constant 0 : i32
    return %c0_i32, %c0_i32_0 : i32, i32
  }
  func.func @transform_3(%arg0: i32) -> (i32, i32) {
    %c0_i32 = arith.constant 0 : i32
    %c0_i32_0 = arith.constant 0 : i32
    %c0_i32_1 = arith.constant 0 : i32
    return %c0_i32, %c0_i32_0 : i32, i32
  }
  func.func @transform_4(%arg0: i32) -> i32 {
    %c0_i32 = arith.constant 0 : i32
    %c0_i32_0 = arith.constant 0 : i32
    return %c0_i32 : i32
  }
  func.func @transform_5(%arg0: i32) -> i32 {
    %c0_i32 = arith.constant 0 : i32
    %c0_i32_0 = arith.constant 0 : i32
    return %c0_i32 : i32
  }
  func.func @transform_6(%arg0: i32) -> (i32, i32, i32) {
    %c0_i32 = arith.constant 0 : i32
    %c0_i32_0 = arith.constant 0 : i32
    %c0_i32_1 = arith.constant 0 : i32
    return %arg0, %c0_i32, %c0_i32_0 : i32, i32, i32
  }
}

</mosaic_0001>

<llo_original>
// kernel: tpu_custom_call.1
$region0: #{tpu_custom_call.1}
  #allocation0 [shape = 'u32[]', space=smem, size = 0x4, offset = 0x4, fixed_abs, tag = 'smem constant byte address 0x4 - core index']
  #allocation1 [shape = 'u32[144,128]{1,0:T(1,128)}', space=vmem, size = 0x12000, scoped, tag = 'internal scratch']
  #allocation2 [shape = 'f32[44,128]{1,0:T(8,128)}', space=vmem, size = 0x6000, scoped, tag = 'scratch operand']
  #allocation3 [shape = 'f32[1,256]{1,0:T(1,128)}', space=vmem, size = 0x400, scoped, tag = 'scratch operand']
  #allocation4 [shape = 'f32[1]{0:T(128)S(6)}', space=smem, size = 0x200, scoped, tag = 'scoped memory for tpu_custom_call.1']
  %s0 = inlined_call_operand.hbm [shape: f32[2,16,256], index: 0, kind: input, shape index: {}]
  %s1 = inlined_call_operand.vmem [shape: f32[4,16], index: 1, kind: input, shape index: {}]
  %s2 = inlined_call_operand.vmem [shape: f32[16,4], index: 2, kind: input, shape index: {}]
  %s3 = inlined_call_operand.vmem [shape: f32[16,4], index: 3, kind: input, shape index: {}]
  %s4 = inlined_call_operand.vmem [shape: f32[98], index: 4, kind: input, shape index: {}]
  %s5 = inlined_call_operand.<no memory space> [shape: f32[1], index: 5, kind: input, shape index: {}]
  %s6 = inlined_call_operand.hbm [shape: f32[2,16,256], index: 6, kind: output, shape index: {}]
  %s7 = sld [smem:[#allocation0]]
  $region65: #{tpu_custom_call.1} parent=0
    _
  %s9 = ssub.s32 1, %s7
  %s10 = scalar_select 0, %s9, %s7
  %11 = sst [smem:[#allocation4]] %s5
  $region1: #{tpu_custom_call.1} parent=0
    #allocation5 [shape = 'u8[32768]{0}', space=vmem, size = 0x8000, scoped, tag = 'input window, operand 0']
    #allocation6 [shape = 's32[2]{0}', space=sflag, size = 0x8, scoped, tag = 'scoped memory for tpu_custom_call.1']
    #allocation7 [shape = 's32[2]{0}', space=sflag, size = 0x8, scoped, tag = 'scoped memory for tpu_custom_call.1']
    #allocation8 [shape = 's32[2]{0}', space=sflag, size = 0x8, scoped, tag = 'scoped memory for tpu_custom_call.1']
    #allocation9 [shape = 'u8[512]{0}', space=smem, size = 0x200, scoped, tag = 'input window, operand 4, single buffered']
    #allocation10 [shape = 'u8[32768]{0}', space=vmem, size = 0x8000, scoped, tag = 'output window, operand 0']
    %12 = vsyncpa [#allocation6], 0
    %s13 = scalar_lea.sflag [#allocation6], 1
    %14 = vsyncpa %s13, 0
    %15 = vsyncpa [#allocation8], 0
    %16 = vsyncpa [#allocation7], 0
    %s17 = scalar_lea.sflag [#allocation7], 1
    %18 = vsyncpa %s17, 0
    loop: start=0, step=1, limit=4
    $region2: #{tpu_custom_call.1} parent=1 // loop_pre_header
      _
    $region3: #{tpu_custom_call.1} parent=1 // loop_header
      %s20 = sphi 0, %s24
      %p21 = scmp.ge.s32.totalorder %s20, 4
      %s30 = sphi 0, %s32
      %s33 = sphi 0, %s30
      %s34 = sphi 0, %s33
      %s50 = sphi 0, %s34
      %s54 = sphi 0, %s54
      %s56 = sphi 0, %s54
      %s57 = sphi 0, %s56
      %s71 = sphi 0, %s57
      %s75 = sphi 0, %s75
      %s77 = sphi 0, %s75
      %s78 = sphi 0, %s77
      %s92 = sphi 0, %s78
      %s96 = sphi 0, %s96
      %s98 = sphi 0, %s96
      %s99 = sphi 0, %s98
      %s113 = sphi 0, %s99
      %s117 = sphi 0, %s117
      %s119 = sphi 0, %s117
      %s120 = sphi 0, %s119
      %s134 = sphi 0, %s120
      %s138 = sphi 0, %s138
      %s140 = sphi 0, %s138
      %s141 = sphi 0, %s140
      %s155 = sphi 0, %s141
      %s161 = sphi 0, %s163
      %s164 = sphi 0, %s161
      %s165 = sphi 0, %s164
      %s181 = sphi 0, %s165
    $region4: #{tpu_custom_call.1} parent=1 // loop_header_branch
      %23 = sbr.rel (%p21) target = $region8
    $region5: #{tpu_custom_call.1} parent=1 // loop_body
      %s25 = ssub.s32 %s20, 1
      %s26 = ssub.s32 %s20, 2
      %s27 = sadd.s32 %s20, 1
      %s28 = ssub.s32 %s20, %s27
      %p29 = scmp.eq.s32.totalorder %s28, 0
      %s31 = sadd.s32 %s30, 1
      %s32 = scalar_select %p29, %s30, %s31
      %p35 = pneg %p29
      %p36 = scmp.eq.s32.totalorder %s20, 1
      %p37 = por %p35, %p36
      %p38 = scmp.ne.s32.totalorder %s30, %s33
      %p39 = scmp.eq.s32.totalorder %s20, 0
      %p40 = por %p38, %p39
      %p41 = scmp.ne.s32.totalorder %s30, %s33
      %p42 = scmp.eq.s32.totalorder %s25, 1
      %p43 = por %p41, %p42
      %p44 = scmp.ne.s32.totalorder %s33, %s34
      %p45 = scmp.eq.s32.totalorder %s25, 0
      %p46 = por %p44, %p45
      %p47 = scmp.ne.s32.totalorder %s33, %s34
      %p48 = scmp.eq.s32.totalorder %s26, 1
      %p49 = por %p47, %p48
      %p51 = scmp.ne.s32.totalorder %s34, %s50
      %p52 = scmp.eq.s32.totalorder %s26, 0
      %p53 = por %p51, %p52
      %s55 = sadd.s32 %s54, 1
      %p58 = scmp.eq.s32.totalorder %s20, 1
      %p59 = scmp.ne.s32.totalorder %s54, %s56
      %p60 = scmp.eq.s32.totalorder %s20, 0
      %p61 = por %p59, %p60
      %p62 = scmp.ne.s32.totalorder %s54, %s56
      %p63 = scmp.eq.s32.totalorder %s25, 1
      %p64 = por %p62, %p63
      %p65 = scmp.ne.s32.totalorder %s56, %s57
      %p66 = scmp.eq.s32.totalorder %s25, 0
      %p67 = por %p65, %p66
      %p68 = scmp.ne.s32.totalorder %s56, %s57
      %p69 = scmp.eq.s32.totalorder %s26, 1
      %p70 = por %p68, %p69
      %p72 = scmp.ne.s32.totalorder %s57, %s71
      %p73 = scmp.eq.s32.totalorder %s26, 0
      %p74 = por %p72, %p73
      %s76 = sadd.s32 %s75, 1
      %p79 = scmp.eq.s32.totalorder %s20, 1
      %p80 = scmp.ne.s32.totalorder %s75, %s77
      %p81 = scmp.eq.s32.totalorder %s20, 0
      %p82 = por %p80, %p81
      %p83 = scmp.ne.s32.totalorder %s75, %s77
      %p84 = scmp.eq.s32.totalorder %s25, 1
      %p85 = por %p83, %p84
      %p86 = scmp.ne.s32.totalorder %s77, %s78
      %p87 = scmp.eq.s32.totalorder %s25, 0
      %p88 = por %p86, %p87
      %p89 = scmp.ne.s32.totalorder %s77, %s78
      %p90 = scmp.eq.s32.totalorder %s26, 1
      %p91 = por %p89, %p90
      %p93 = scmp.ne.s32.totalorder %s78, %s92
      %p94 = scmp.eq.s32.totalorder %s26, 0
      %p95 = por %p93, %p94
      %s97 = sadd.s32 %s96, 1
      %p100 = scmp.eq.s32.totalorder %s20, 1
      %p101 = scmp.ne.s32.totalorder %s96, %s98
      %p102 = scmp.eq.s32.totalorder %s20, 0
      %p103 = por %p101, %p102
      %p104 = scmp.ne.s32.totalorder %s96, %s98
      %p105 = scmp.eq.s32.totalorder %s25, 1
      %p106 = por %p104, %p105
      %p107 = scmp.ne.s32.totalorder %s98, %s99
      %p108 = scmp.eq.s32.totalorder %s25, 0
      %p109 = por %p107, %p108
      %p110 = scmp.ne.s32.totalorder %s98, %s99
      %p111 = scmp.eq.s32.totalorder %s26, 1
      %p112 = por %p110, %p111
      %p114 = scmp.ne.s32.totalorder %s99, %s113
      %p115 = scmp.eq.s32.totalorder %s26, 0
      %p116 = por %p114, %p115
      %s118 = sadd.s32 %s117, 1
      %p121 = scmp.eq.s32.totalorder %s20, 1
      %p122 = scmp.ne.s32.totalorder %s117, %s119
      %p123 = scmp.eq.s32.totalorder %s20, 0
      %p124 = por %p122, %p123
      %p125 = scmp.ne.s32.totalorder %s117, %s119
      %p126 = scmp.eq.s32.totalorder %s25, 1
      %p127 = por %p125, %p126
      %p128 = scmp.ne.s32.totalorder %s119, %s120
      %p129 = scmp.eq.s32.totalorder %s25, 0
      %p130 = por %p128, %p129
      %p131 = scmp.ne.s32.totalorder %s119, %s120
      %p132 = scmp.eq.s32.totalorder %s26, 1
      %p133 = por %p131, %p132
      %p135 = scmp.ne.s32.totalorder %s120, %s134
      %p136 = scmp.eq.s32.totalorder %s26, 0
      %p137 = por %p135, %p136
      %s139 = sadd.s32 %s138, 1
      %p142 = scmp.eq.s32.totalorder %s20, 1
      %p143 = scmp.ne.s32.totalorder %s138, %s140
      %p144 = scmp.eq.s32.totalorder %s20, 0
      %p145 = por %p143, %p144
      %p146 = scmp.ne.s32.totalorder %s138, %s140
      %p147 = scmp.eq.s32.totalorder %s25, 1
      %p148 = por %p146, %p147
      %p149 = scmp.ne.s32.totalorder %s140, %s141
      %p150 = scmp.eq.s32.totalorder %s25, 0
      %p151 = por %p149, %p150
      %p152 = scmp.ne.s32.totalorder %s140, %s141
      %p153 = scmp.eq.s32.totalorder %s26, 1
      %p154 = por %p152, %p153
      %p156 = scmp.ne.s32.totalorder %s141, %s155
      %p157 = scmp.eq.s32.totalorder %s26, 0
      %p158 = por %p156, %p157
      %s159 = ssub.s32 %s20, %s27
      %p160 = scmp.eq.s32.totalorder %s159, 0
      %s162 = sadd.s32 %s161, 1
      %s163 = scalar_select %p160, %s161, %s162
      %p166 = pneg %p160
      %p167 = scmp.eq.s32.totalorder %s20, 1
      %p168 = por %p166, %p167
      %p169 = scmp.ne.s32.totalorder %s161, %s164
      %p170 = scmp.eq.s32.totalorder %s20, 0
      %p171 = por %p169, %p170
      %p172 = scmp.ne.s32.totalorder %s161, %s164
      %p173 = scmp.eq.s32.totalorder %s25, 1
      %p174 = por %p172, %p173
      %p175 = scmp.ne.s32.totalorder %s164, %s165
      %p176 = scmp.eq.s32.totalorder %s25, 0
      %p177 = por %p175, %p176
      %p178 = scmp.ne.s32.totalorder %s164, %s165
      %p179 = scmp.eq.s32.totalorder %s26, 1
      %p180 = por %p178, %p179
      %p182 = scmp.ne.s32.totalorder %s165, %s181
      %p183 = scmp.eq.s32.totalorder %s26, 0
      %p184 = por %p182, %p183
      %p185 = scmp.le.s32.totalorder 1, %s20
      %p186 = scmp.lt.s32.totalorder %s20, 3
      %p187 = pnand %p185, %p186
      %p188 = pneg %p187
      // Predicated region
      $region9: #{tpu_custom_call.1} parent=5 // pred_check
        _
      $region10: #{tpu_custom_call.1} parent=5 // pred_check_branch
        %190 = sbr.rel (%p187) target = $region12
      $region11: #{tpu_custom_call.1} parent=5 // pred_region
        %s191 = ssub.s32 %s20, 1
        // Predicated region
        $region13: #{tpu_custom_call.1} parent=11 // pred_check
          %p192 = pneg %p67
        $region14: #{tpu_custom_call.1} parent=11 // pred_check_branch
          %194 = sbr.rel (%p192) target = $region16
        $region15: #{tpu_custom_call.1} parent=11 // pred_region
          _
        $region16: #{tpu_custom_call.1} parent=11 // pred_fallthru
          _
        // Predicated region
        $region17: #{tpu_custom_call.1} parent=11 // pred_check
          %p195 = pneg %p88
        $region18: #{tpu_custom_call.1} parent=11 // pred_check_branch
          %197 = sbr.rel (%p195) target = $region20
        $region19: #{tpu_custom_call.1} parent=11 // pred_region
          _
        $region20: #{tpu_custom_call.1} parent=11 // pred_fallthru
          _
        // Predicated region
        $region21: #{tpu_custom_call.1} parent=11 // pred_check
          %p198 = pneg %p109
        $region22: #{tpu_custom_call.1} parent=11 // pred_check_branch
          %200 = sbr.rel (%p198) target = $region24
        $region23: #{tpu_custom_call.1} parent=11 // pred_region
          _
        $region24: #{tpu_custom_call.1} parent=11 // pred_fallthru
          _
        // Predicated region
        $region25: #{tpu_custom_call.1} parent=11 // pred_check
          %p201 = pneg %p130
        $region26: #{tpu_custom_call.1} parent=11 // pred_check_branch
          %203 = sbr.rel (%p201) target = $region28
        $region27: #{tpu_custom_call.1} parent=11 // pred_region
          %s205 = ssub.s32 16, 16
          %206 = vsyncadd [#allocation8], %s205
          %s208 = sshll.u32 %s4, 4
          %s209 = int_to_ptr.vmem [resolvable:$true] %s208
          %211 = dma.vmem_to_smem %s209, 16, [#allocation9], [#allocation8]
        $region28: #{tpu_custom_call.1} parent=11 // pred_fallthru
          _
        // Predicated region
        $region29: #{tpu_custom_call.1} parent=11 // pred_check
          %p212 = pneg %p151
        $region30: #{tpu_custom_call.1} parent=11 // pred_check_branch
          %214 = sbr.rel (%p212) target = $region32
        $region31: #{tpu_custom_call.1} parent=11 // pred_region
          _
        $region32: #{tpu_custom_call.1} parent=11 // pred_fallthru
          _
      $region12: #{tpu_custom_call.1} parent=5 // pred_fallthru
        _
      %p215 = scmp.lt.s32.totalorder %s20, 2
      // Predicated region
      $region33: #{tpu_custom_call.1} parent=5 // pred_check
        %p216 = pneg %p215
      $region34: #{tpu_custom_call.1} parent=5 // pred_check_branch
        %218 = sbr.rel (%p216) target = $region36
      $region35: #{tpu_custom_call.1} parent=5 // pred_region
        // Predicated region
        $region37: #{tpu_custom_call.1} parent=35 // pred_check
          %p219 = pneg %p40
        $region38: #{tpu_custom_call.1} parent=35 // pred_check_branch
          %221 = sbr.rel (%p219) target = $region40
        $region39: #{tpu_custom_call.1} parent=35 // pred_region
          %s222 = sand.u32 %s30, 1
          %s223 = scalar_lea.sflag [#allocation6], %s222
          %s224 = sand.u32 %s30, 1
          %s225 = smul.addr %s224, 32
          %s226 = scalar_lea.vmem [#allocation5], %s225
          %s228 = ssub.s32 512, 512
          %229 = vsyncadd %s223, %s228
          %s230 = smul.addr %s20, 4
          %s231 = smul.addr %s230, 128
          %s232 = scalar_lea.hbm %s0, %s231
          %s233 = sshll.u32 %s226, 4
          %s234 = int_to_ptr.vmem [resolvable:$true] %s233
          %239 = dma.hbm_to_vmem [thread:$0]  %s232, 512, %s234, %s223, 256, 256, 16
        $region40: #{tpu_custom_call.1} parent=35 // pred_fallthru
          _
      $region36: #{tpu_custom_call.1} parent=5 // pred_fallthru
        _
      %p240 = scmp.le.s32.totalorder 1, %s20
      %p241 = scmp.lt.s32.totalorder %s20, 3
      %p242 = pnand %p240, %p241
      %p243 = pneg %p242
      // Predicated region
      $region41: #{tpu_custom_call.1} parent=5 // pred_check
        _
      $region42: #{tpu_custom_call.1} parent=5 // pred_check_branch
        %245 = sbr.rel (%p242) target = $region44
      $region43: #{tpu_custom_call.1} parent=5 // pred_region
        %s246 = ssub.s32 %s20, 1
        %s247 = sand.u32 %s33, 1
        %s248 = scalar_lea.sflag [#allocation6], %s247
        %s249 = sand.u32 %s33, 1
        %s250 = smul.addr %s249, 32
        %s251 = scalar_lea.vmem [#allocation5], %s250
        // Predicated region
        $region45: #{tpu_custom_call.1} parent=43 // pred_check
          %p252 = pneg %p46
        $region46: #{tpu_custom_call.1} parent=43 // pred_check_branch
          %254 = sbr.rel (%p252) target = $region48
        $region47: #{tpu_custom_call.1} parent=43 // pred_region
          %255 = dma.done %s248, 512
        $region48: #{tpu_custom_call.1} parent=43 // pred_fallthru
          _
        // Predicated region
        $region49: #{tpu_custom_call.1} parent=43 // pred_check
          %p256 = pneg %p130
        $region50: #{tpu_custom_call.1} parent=43 // pred_check_branch
          %258 = sbr.rel (%p256) target = $region52
        $region51: #{tpu_custom_call.1} parent=43 // pred_region
          %259 = dma.done [#allocation8], 16
        $region52: #{tpu_custom_call.1} parent=43 // pred_fallthru
          _
        %260 = sfence
        %s261 = sand.u32 %s33, 1
        %s262 = scalar_lea.sflag [#allocation6], %s261
        %s263 = sand.u32 %s33, 1
        %s264 = smul.addr %s263, 32
        %s265 = scalar_lea.vmem [#allocation5], %s264
        %p266 = pneg %p46
        %p267 = pneg %p43
        %p268 = pneg %p67
        %p269 = pneg %p64
        %p270 = pneg %p88
        %p271 = pneg %p85
        %p272 = pneg %p109
        %p273 = pneg %p106
        %p274 = pneg %p130
        %p275 = pneg %p127
        %p276 = pneg %p151
        %p277 = pneg %p148
        %p278 = pneg %p177
        %p279 = pneg %p174
        %s280 = sand.u32 %s164, 1
        %s281 = scalar_lea.sflag [#allocation7], %s280
        %s282 = sand.u32 %s164, 1
        %s283 = smul.addr %s282, 32
        %s284 = scalar_lea.vmem [#allocation10], %s283
        %v285 = vld [vmem:[%s251] sm:$0xff]
        %v286 = vld [vmem:[%s251 + $0x8] sm:$0xff]
        %v287 = vld [vmem:[%s251 + $0x10] sm:$0xff]
        %v288 = vld [vmem:[%s251 + $0x18] sm:$0xff]
        %v289 = vld [vmem:[%s1] sm:$0xf]
        %v290 = vld [vmem:[%s3] sm:$0xff]
        %v291 = vld [vmem:[%s3 + $0x8] sm:$0xff]
        %vm292 = vcmask 130048
        %v294 = vsel %vm292, %v289, 0
        %296 = vmatprep.subr.mxu0 %v286
        %297 = vmatpush1.msra.mxu0 %v285
        %298 = vmatprep.subr.mxu0 %v288
        %299 = vmatpush1.msra.mxu0 %v287
        %300 = vmatprep.subr.mxu0 0.0
        %301 = vmatpush1.msra.mxu0 0.0
        %302 = vmatprep.subr.mxu0 0.0
        %303 = vmatpush1.msra.mxu0 0.0
        %304 = vmatprep.subr.mxu0 0.0
        %305 = vmatpush1.msra.mxu0 0.0
        %306 = vmatprep.subr.mxu0 0.0
        %307 = vmatpush1.msra.mxu0 0.0
        %308 = vmatprep.subr.mxu0 0.0
        %309 = vmatpush1.msra.mxu0 0.0
        %310 = vmatprep.subr.mxu0 0.0
        %311 = vmatpush1.msra.mxu0 0.0
        %312 = vmatprep.subr.mxu0 0.0
        %313 = vmatpush1.msra.mxu0 0.0
        %314 = vmatprep.subr.mxu0 0.0
        %315 = vmatpush1.msra.mxu0 0.0
        %316 = vmatprep.subr.mxu0 0.0
        %317 = vmatpush1.msra.mxu0 0.0
        %318 = vmatprep.subr.mxu0 0.0
        %319 = vmatpush1.msra.mxu0 0.0
        %320 = vmatprep.subr.mxu0 0.0
        %321 = vmatpush1.msra.mxu0 0.0
        %322 = vmatprep.subr.mxu0 0.0
        %323 = vmatpush1.msra.mxu0 0.0
        %324 = vmatprep.subr.mxu0 0.0
        %325 = vmatpush1.msra.mxu0 0.0
        %326 = vmatprep.subr.mxu0 0.0
        %327 = vmatpush1.msra.mxu0 0.0
        %328 = vmatprep.subr.mxu0 0.0
        %329 = vmatpush1.msra.mxu0 0.0
        %330 = vmatprep.subr.mxu0 0.0
        %331 = vmatpush1.msra.mxu0 0.0
        %332 = vmatprep.subr.mxu0 0.0
        %333 = vmatpush1.msra.mxu0 0.0
        %334 = vmatprep.subr.mxu0 0.0
        %335 = vmatpush1.msra.mxu0 0.0
        %336 = vmatprep.subr.mxu0 0.0
        %337 = vmatpush1.msra.mxu0 0.0
        %338 = vmatprep.subr.mxu0 0.0
        %339 = vmatpush1.msra.mxu0 0.0
        %340 = vmatprep.subr.mxu0 0.0
        %341 = vmatpush1.msra.mxu0 0.0
        %342 = vmatprep.subr.mxu0 0.0
        %343 = vmatpush1.msra.mxu0 0.0
        %344 = vmatprep.subr.mxu0 0.0
        %345 = vmatpush1.msra.mxu0 0.0
        %346 = vmatprep.subr.mxu0 0.0
        %347 = vmatpush1.msra.mxu0 0.0
        %348 = vmatprep.subr.mxu0 0.0
        %349 = vmatpush1.msra.mxu0 0.0
        %350 = vmatprep.subr.mxu0 0.0
        %351 = vmatpush1.msra.mxu0 0.0
        %352 = vmatprep.subr.mxu0 0.0
        %353 = vmatpush1.msra.mxu0 0.0
        %354 = vmatprep.subr.mxu0 0.0
        %355 = vmatpush1.msra.mxu0 0.0
        %356 = vmatprep.subr.mxu0 0.0
        %357 = vmatpush1.msra.mxu0 0.0
        %358 = vmatprep.subr.mxu0 0.0
        %359 = vmatpush1.msra.mxu0 0.0
        %360 = vmatprep.mubr.f32.mxu0 0.0
        %361 = vmatmul.mubr.f32.gmra.mrb[0].mxu0 %v294
        %v362 = vpop.f32.mrb[0].mxu0
        %v363 = vadd.f32 0.0, %v362
        %v364 = vpop.f32.mrb[0].mxu0
        %v365 = vadd.f32 0.0, %v364
        %366 = vdwg.mxu0
        %v367 = vmax.f32 %v363, 0.0
        %v368 = vmax.f32 %v365, 0.0
        %v369 = vmax.f32 %v285, %v286
        %370 = vmax.xlane.f32.xlu0 %v369
        %v371 = vpop.xlane.xlu0 %370
        %v372 = vmax.f32 %v287, %v288
        %373 = vmax.xlane.f32.xlu0 %v372
        %v374 = vpop.xlane.xlu0 %373
        %v375 = vld [vmem:[%s2] sm:$0xff]
        %v376 = vld [vmem:[%s2 + $0x8] sm:$0xff]
        %v377 = vmul.f32 %v375, %v371
        %v378 = vmul.f32 %v376, %v374
        %vm379 = vcmask 31744
        %v380 = vsel %vm379, %v377, 0.0
        %v381 = vsel %vm379, %v378, 0.0
        %v382 = vadd.f32 %v380, %v381
        %v383 = vrot.slane %v382, 4
        %v384 = vadd.f32 %v382, %v383
        %v385 = vrot.slane %v384, 2
        %v386 = vadd.f32 %v384, %v385
        %v387 = vrot.slane %v386, 1
        %v388 = vadd.f32 %v386, %v387
        %v389 = vmax.f32 %v388, 0.0
        %v390 = vmul.f32 %v290, %v389
        %v391 = vmul.f32 %v291, %v389
        %v392 = vsel %vm379, %v390, 0.0
        %393 = vadd.xlane.f32.xlu0 %v392
        %v394 = vpop.xlane.xlu0 %393
        %v395 = vsel %vm379, %v391, 0.0
        %396 = vadd.xlane.f32.xlu0 %v395
        %v397 = vpop.xlane.xlu0 %396
        %v399 = vsel %vm379, %v290, 0
        %v402 = vsel %vm379, %v291, 0
        %vm404 = vcmask 1043456
        %v406 = vsel %vm404, %v367, 0
        %v409 = vsel %vm404, %v368, 0
        %411 = vmatprep.subr.mxu0 %v409
        %412 = vmatpush1.msra.mxu0 %v406
        %413 = vmatprep.subr.mxu0 0.0
        %414 = vmatpush1.msra.mxu0 0.0
        %415 = vmatprep.subr.mxu0 0.0
        %416 = vmatpush1.msra.mxu0 0.0
        %417 = vmatprep.subr.mxu0 0.0
        %418 = vmatpush1.msra.mxu0 0.0
        %419 = vmatprep.subr.mxu0 0.0
        %420 = vmatpush1.msra.mxu0 0.0
        %421 = vmatprep.subr.mxu0 0.0
        %422 = vmatpush1.msra.mxu0 0.0
        %423 = vmatprep.subr.mxu0 0.0
        %424 = vmatpush1.msra.mxu0 0.0
        %425 = vmatprep.subr.mxu0 0.0
        %426 = vmatpush1.msra.mxu0 0.0
        %427 = vmatprep.subr.mxu0 0.0
        %428 = vmatpush1.msra.mxu0 0.0
        %429 = vmatprep.subr.mxu0 0.0
        %430 = vmatpush1.msra.mxu0 0.0
        %431 = vmatprep.subr.mxu0 0.0
        %432 = vmatpush1.msra.mxu0 0.0
        %433 = vmatprep.subr.mxu0 0.0
        %434 = vmatpush1.msra.mxu0 0.0
        %435 = vmatprep.subr.mxu0 0.0
        %436 = vmatpush1.msra.mxu0 0.0
        %437 = vmatprep.subr.mxu0 0.0
        %438 = vmatpush1.msra.mxu0 0.0
        %439 = vmatprep.subr.mxu0 0.0
        %440 = vmatpush1.msra.mxu0 0.0
        %441 = vmatprep.subr.mxu0 0.0
        %442 = vmatpush1.msra.mxu0 0.0
        %443 = vmatprep.subr.mxu0 0.0
        %444 = vmatpush1.msra.mxu0 0.0
        %445 = vmatprep.subr.mxu0 0.0
        %446 = vmatpush1.msra.mxu0 0.0
        %447 = vmatprep.subr.mxu0 0.0
        %448 = vmatpush1.msra.mxu0 0.0
        %449 = vmatprep.subr.mxu0 0.0
        %450 = vmatpush1.msra.mxu0 0.0
        %451 = vmatprep.subr.mxu0 0.0
        %452 = vmatpush1.msra.mxu0 0.0
        %453 = vmatprep.subr.mxu0 0.0
        %454 = vmatpush1.msra.mxu0 0.0
        %455 = vmatprep.subr.mxu0 0.0
        %456 = vmatpush1.msra.mxu0 0.0
        %457 = vmatprep.subr.mxu0 0.0
        %458 = vmatpush1.msra.mxu0 0.0
        %459 = vmatprep.subr.mxu0 0.0
        %460 = vmatpush1.msra.mxu0 0.0
        %461 = vmatprep.subr.mxu0 0.0
        %462 = vmatpush1.msra.mxu0 0.0
        %463 = vmatprep.subr.mxu0 0.0
        %464 = vmatpush1.msra.mxu0 0.0
        %465 = vmatprep.subr.mxu0 0.0
        %466 = vmatpush1.msra.mxu0 0.0
        %467 = vmatprep.subr.mxu0 0.0
        %468 = vmatpush1.msra.mxu0 0.0
        %469 = vmatprep.subr.mxu0 0.0
        %470 = vmatpush1.msra.mxu0 0.0
        %471 = vmatprep.subr.mxu0 0.0
        %472 = vmatpush1.msra.mxu0 0.0
        %473 = vmatprep.subr.mxu0 0.0
        %474 = vmatpush1.msra.mxu0 0.0
        %475 = vmatprep.mubr.f32.mxu0 0.0
        %476 = vmatmul.mubr.f32.gmra.mrb[0].mxu0 %v399
        %v477 = vpop.f32.mrb[0].mxu0
        %v478 = vadd.f32 %v394, %v477
        %v479 = vpop.f32.mrb[0].mxu0
        %v480 = vadd.f32 %v394, %v479
        %481 = vmatprep.mubr.f32.mxu0 0.0
        %482 = vmatmul.mubr.f32.gmra.mrb[0].mxu0 %v402
        %v483 = vpop.f32.mrb[0].mxu0
        %v484 = vadd.f32 %v397, %v483
        %v485 = vpop.f32.mrb[0].mxu0
        %v486 = vadd.f32 %v397, %v485
        %487 = vdwg.mxu0
        %v488 = vxor.u32 %v478, 2147483648
        %v489 = vxor.u32 %v480, 2147483648
        %v490 = vxor.u32 %v484, 2147483648
        %v491 = vxor.u32 %v486, 2147483648
        %v492 = vmul.f32 %v488, 1.442695
        %v493 = vpow.pop %v492
        %v494 = vmul.f32 %v489, 1.442695
        %v495 = vpow.pop %v494
        %v496 = vmul.f32 %v490, 1.442695
        %v497 = vpow.pop %v496
        %v498 = vmul.f32 %v491, 1.442695
        %v499 = vpow.pop %v498
        %v500 = vadd.f32 %v493, 1.0
        %v501 = vadd.f32 %v495, 1.0
        %v502 = vadd.f32 %v497, 1.0
        %v503 = vadd.f32 %v499, 1.0
        %v504 = vrcp.pop %v500
        %v505 = vmul.f32 1.0, %v504
        %v506 = vrcp.pop %v501
        %v507 = vmul.f32 1.0, %v506
        %v508 = vrcp.pop %v502
        %v509 = vmul.f32 1.0, %v508
        %v510 = vrcp.pop %v503
        %v511 = vmul.f32 1.0, %v510
        %v512 = vmul.f32 %v285, %v505
        %v513 = vmul.f32 %v286, %v507
        %v514 = vmul.f32 %v287, %v509
        %v515 = vmul.f32 %v288, %v511
        %516 = vst [vmem:[%s284] sm:$0xff] %v512
        %517 = vst [vmem:[%s284 + $0x8] sm:$0xff] %v513
        %518 = vst [vmem:[%s284 + $0x10] sm:$0xff] %v514
        %519 = vst [vmem:[%s284 + $0x18] sm:$0xff] %v515
        %v520 = vadd.f32 %v505, %v509
        %v521 = vrot.slane %v520, 4
        %v522 = vadd.f32 %v520, %v521
        %v523 = vrot.slane %v522, 2
        %v524 = vadd.f32 %v522, %v523
        %v525 = vrot.slane %v524, 1
        %v526 = vadd.f32 %v524, %v525
        %v527 = vadd.f32 %v507, %v511
        %v528 = vrot.slane %v527, 4
        %v529 = vadd.f32 %v527, %v528
        %v530 = vrot.slane %v529, 2
        %v531 = vadd.f32 %v529, %v530
        %v532 = vrot.slane %v531, 1
        %v533 = vadd.f32 %v531, %v532
        %v534 = vrcp.pop 16.0
        %v535 = vmul.f32 %v526, %v534
        %v536 = vmul.f32 %v533, %v534
        %v537 = vmax.f32 %v505, %v509
        %v538 = vrot.slane %v537, 4
        %v539 = vmax.f32 %v537, %v538
        %v540 = vrot.slane %v539, 2
        %v541 = vmax.f32 %v539, %v540
        %v542 = vrot.slane %v541, 1
        %v543 = vmax.f32 %v541, %v542
        %v544 = vmax.f32 %v507, %v511
        %v545 = vrot.slane %v544, 4
        %v546 = vmax.f32 %v544, %v545
        %v547 = vrot.slane %v546, 2
        %v548 = vmax.f32 %v546, %v547
        %v549 = vrot.slane %v548, 1
        %v550 = vmax.f32 %v548, %v549
        %551 = vst [vmem:[#allocation2] sm:$0x7] 0.0
        %552 = vst [vmem:[#allocation2 + $0x13] sm:$0x7] 0.0
        %vm553 = vcmask 23552
        %554 = vst.msk [vmem:[#allocation2 + $0x3] sm:$0xff] %vm553, 0.0
        %555 = vst.msk [vmem:[#allocation2 + $0xb] sm:$0xff] %vm553, 0.0
        %vm556 = vcmask 179352
        %557 = vst.msk [vmem:[#allocation2 + $0x3] sm:$0xff] %vm556, 0.0
        %558 = vst.msk [vmem:[#allocation2 + $0xb] sm:$0xff] %vm556, 0.0
        %559 = vst [vmem:[#allocation2 + $0x16] sm:$0x7] 0.0
        %560 = vst [vmem:[#allocation2 + $0x29] sm:$0x7] 0.0
        %561 = vst.msk [vmem:[#allocation2 + $0x19] sm:$0xff] %vm553, 0.0
        %562 = vst.msk [vmem:[#allocation2 + $0x21] sm:$0xff] %vm553, 0.0
        %563 = vst.msk [vmem:[#allocation2 + $0x19] sm:$0xff] %vm556, 0.0
        %564 = vst.msk [vmem:[#allocation2 + $0x21] sm:$0xff] %vm556, 0.0
        %566 = vrot.lane.b32.xlu0 %v535, 3
        %v567 = vpop.permute.xlu0 %566
        %vm569 = vcmask 147480
        %570 = vst.msk [vmem:[#allocation2 + $0x3] sm:$0x1] %vm569, %v567
        %572 = vrot.lane.b32.xlu0 %v543, 3
        %v573 = vpop.permute.xlu0 %572
        %575 = vst.msk [vmem:[#allocation2 + $0x19] sm:$0x1] %vm569, %v573
        %576 = vrot.lane.b32.xlu0 %v535, 115
        %v577 = vpop.permute.xlu0 %576
        %579 = vst.msk [vmem:[#allocation2 + $0x4] sm:$0x1] %vm569, %v577
        %580 = vrot.lane.b32.xlu0 %v543, 115
        %v581 = vpop.permute.xlu0 %580
        %583 = vst.msk [vmem:[#allocation2 + $0x1a] sm:$0x1] %vm569, %v581
        %584 = vrot.lane.b32.xlu0 %v535, 99
        %v585 = vpop.permute.xlu0 %584
        %587 = vst.msk [vmem:[#allocation2 + $0x5] sm:$0x1] %vm569, %v585
        %588 = vrot.lane.b32.xlu0 %v543, 99
        %v589 = vpop.permute.xlu0 %588
        %591 = vst.msk [vmem:[#allocation2 + $0x1b] sm:$0x1] %vm569, %v589
        %592 = vrot.lane.b32.xlu0 %v535, 83
        %v593 = vpop.permute.xlu0 %592
        %595 = vst.msk [vmem:[#allocation2 + $0x6] sm:$0x1] %vm569, %v593
        %596 = vrot.lane.b32.xlu0 %v543, 83
        %v597 = vpop.permute.xlu0 %596
        %599 = vst.msk [vmem:[#allocation2 + $0x1c] sm:$0x1] %vm569, %v597
        %600 = vrot.lane.b32.xlu0 %v535, 67
        %v601 = vpop.permute.xlu0 %600
        %603 = vst.msk [vmem:[#allocation2 + $0x7] sm:$0x1] %vm569, %v601
        %604 = vrot.lane.b32.xlu0 %v543, 67
        %v605 = vpop.permute.xlu0 %604
        %607 = vst.msk [vmem:[#allocation2 + $0x1d] sm:$0x1] %vm569, %v605
        %608 = vrot.lane.b32.xlu0 %v535, 51
        %v609 = vpop.permute.xlu0 %608
        %611 = vst.msk [vmem:[#allocation2 + $0x8] sm:$0x1] %vm569, %v609
        %612 = vrot.lane.b32.xlu0 %v543, 51
        %v613 = vpop.permute.xlu0 %612
        %615 = vst.msk [vmem:[#allocation2 + $0x1e] sm:$0x1] %vm569, %v613
        %616 = vrot.lane.b32.xlu0 %v535, 35
        %v617 = vpop.permute.xlu0 %616
        %619 = vst.msk [vmem:[#allocation2 + $0x9] sm:$0x1] %vm569, %v617
        %620 = vrot.lane.b32.xlu0 %v543, 35
        %v621 = vpop.permute.xlu0 %620
        %623 = vst.msk [vmem:[#allocation2 + $0x1f] sm:$0x1] %vm569, %v621
        %624 = vrot.lane.b32.xlu0 %v535, 19
        %v625 = vpop.permute.xlu0 %624
        %627 = vst.msk [vmem:[#allocation2 + $0xa] sm:$0x1] %vm569, %v625
        %628 = vrot.lane.b32.xlu0 %v543, 19
        %v629 = vpop.permute.xlu0 %628
        %631 = vst.msk [vmem:[#allocation2 + $0x20] sm:$0x1] %vm569, %v629
        %633 = vrot.lane.b32.xlu0 %v536, 3
        %v634 = vpop.permute.xlu0 %633
        %636 = vst.msk [vmem:[#allocation2 + $0xb] sm:$0x1] %vm569, %v634
        %638 = vrot.lane.b32.xlu0 %v550, 3
        %v639 = vpop.permute.xlu0 %638
        %641 = vst.msk [vmem:[#allocation2 + $0x21] sm:$0x1] %vm569, %v639
        %642 = vrot.lane.b32.xlu0 %v536, 115
        %v643 = vpop.permute.xlu0 %642
        %645 = vst.msk [vmem:[#allocation2 + $0xc] sm:$0x1] %vm569, %v643
        %646 = vrot.lane.b32.xlu0 %v550, 115
        %v647 = vpop.permute.xlu0 %646
        %649 = vst.msk [vmem:[#allocation2 + $0x22] sm:$0x1] %vm569, %v647
        %650 = vrot.lane.b32.xlu0 %v536, 99
        %v651 = vpop.permute.xlu0 %650
        %653 = vst.msk [vmem:[#allocation2 + $0xd] sm:$0x1] %vm569, %v651
        %654 = vrot.lane.b32.xlu0 %v550, 99
        %v655 = vpop.permute.xlu0 %654
        %657 = vst.msk [vmem:[#allocation2 + $0x23] sm:$0x1] %vm569, %v655
        %658 = vrot.lane.b32.xlu0 %v536, 83
        %v659 = vpop.permute.xlu0 %658
        %661 = vst.msk [vmem:[#allocation2 + $0xe] sm:$0x1] %vm569, %v659
        %662 = vrot.lane.b32.xlu0 %v550, 83
        %v663 = vpop.permute.xlu0 %662
        %665 = vst.msk [vmem:[#allocation2 + $0x24] sm:$0x1] %vm569, %v663
        %666 = vrot.lane.b32.xlu0 %v536, 67
        %v667 = vpop.permute.xlu0 %666
        %669 = vst.msk [vmem:[#allocation2 + $0xf] sm:$0x1] %vm569, %v667
        %670 = vrot.lane.b32.xlu0 %v550, 67
        %v671 = vpop.permute.xlu0 %670
        %673 = vst.msk [vmem:[#allocation2 + $0x25] sm:$0x1] %vm569, %v671
        %674 = vrot.lane.b32.xlu0 %v536, 51
        %v675 = vpop.permute.xlu0 %674
        %677 = vst.msk [vmem:[#allocation2 + $0x10] sm:$0x1] %vm569, %v675
        %678 = vrot.lane.b32.xlu0 %v550, 51
        %v679 = vpop.permute.xlu0 %678
        %681 = vst.msk [vmem:[#allocation2 + $0x26] sm:$0x1] %vm569, %v679
        %682 = vrot.lane.b32.xlu0 %v536, 35
        %v683 = vpop.permute.xlu0 %682
        %685 = vst.msk [vmem:[#allocation2 + $0x11] sm:$0x1] %vm569, %v683
        %686 = vrot.lane.b32.xlu0 %v550, 35
        %v687 = vpop.permute.xlu0 %686
        %689 = vst.msk [vmem:[#allocation2 + $0x27] sm:$0x1] %vm569, %v687
        %690 = vrot.lane.b32.xlu0 %v536, 19
        %v691 = vpop.permute.xlu0 %690
        %693 = vst.msk [vmem:[#allocation2 + $0x12] sm:$0x1] %vm569, %v691
        %694 = vrot.lane.b32.xlu0 %v550, 19
        %v695 = vpop.permute.xlu0 %694
        %697 = vst.msk [vmem:[#allocation2 + $0x28] sm:$0x1] %vm569, %v695
        %v698 = vld [vmem:[#allocation2] sm:$0xff]
        %v699 = vld [vmem:[#allocation2 + $0x8] sm:$0xff]
        %s700 = sld [smem:[#allocation9]]
        %v701 = vstv %s700
        %v702 = vmul.f32 %v701, %v698
        %v703 = vmul.f32 %v701, %v699
        %v704 = vadd.f32 %v702, 0.0
        %v705 = vadd.f32 %v703, 0.0
        %s706 = sld [smem:[#allocation9 + $0x1]]
        %v707 = vstv %s706
        %v708 = vmul.f32 %v707, %v698
        %v709 = vmul.f32 %v707, %v699
        %v710 = vadd.f32 %v708, 0.0
        %v711 = vadd.f32 %v709, 0.0
        %s712 = sld [smem:[#allocation9 + $0x2]]
        %v713 = vstv %s712
        %v714 = vmul.f32 %v713, %v698
        %v715 = vmul.f32 %v713, %v699
        %v716 = vadd.f32 %v714, 0.0
        %v717 = vadd.f32 %v715, 0.0
        %s718 = sld [smem:[#allocation9 + $0x3]]
        %v719 = vstv %s718
        %v720 = vmul.f32 %v719, %v698
        %v721 = vmul.f32 %v719, %v699
        %v722 = vadd.f32 %v720, 0.0
        %v723 = vadd.f32 %v721, 0.0
        %s724 = sld [smem:[#allocation9 + $0x4]]
        %v725 = vstv %s724
        %v726 = vmul.f32 %v725, %v698
        %v727 = vmul.f32 %v725, %v699
        %730 = vrot.lane.b32.xlu0 %v726, 124
        %v731 = vpop.permute.xlu0 %730
        %732 = vrot.lane.b32.xlu0 %v727, 124
        %v733 = vpop.permute.xlu0 %732
        %v736 = vadd.f32 %v704, %v731
        %v737 = vadd.f32 %v705, %v733
        %s738 = sld [smem:[#allocation9 + $0x5]]
        %v739 = vstv %s738
        %v740 = vmul.f32 %v739, %v698
        %v741 = vmul.f32 %v739, %v699
        %744 = vrot.lane.b32.xlu0 %v740, 124
        %v745 = vpop.permute.xlu0 %744
        %746 = vrot.lane.b32.xlu0 %v741, 124
        %v747 = vpop.permute.xlu0 %746
        %v750 = vadd.f32 %v710, %v745
        %v751 = vadd.f32 %v711, %v747
        %s752 = sld [smem:[#allocation9 + $0x6]]
        %v753 = vstv %s752
        %v754 = vmul.f32 %v753, %v698
        %v755 = vmul.f32 %v753, %v699
        %758 = vrot.lane.b32.xlu0 %v754, 124
        %v759 = vpop.permute.xlu0 %758
        %760 = vrot.lane.b32.xlu0 %v755, 124
        %v761 = vpop.permute.xlu0 %760
        %v764 = vadd.f32 %v716, %v759
        %v765 = vadd.f32 %v717, %v761
        %v766 = vld [vmem:[#allocation2 + $0x1] sm:$0xff]
        %v767 = vld [vmem:[#allocation2 + $0x9] sm:$0xff]
        %s768 = sld [smem:[#allocation9 + $0x7]]
        %v769 = vstv %s768
        %v770 = vmul.f32 %v769, %v766
        %v771 = vmul.f32 %v769, %v767
        %774 = vrot.lane.b32.xlu0 %v770, 3
        %v775 = vpop.permute.xlu0 %774
        %776 = vrot.lane.b32.xlu0 %v771, 3
        %v777 = vpop.permute.xlu0 %776
        %v780 = vadd.f32 %v722, %v775
        %v781 = vadd.f32 %v723, %v777
        %s782 = sld [smem:[#allocation9 + $0x8]]
        %v783 = vstv %s782
        %v784 = vmul.f32 %v783, %v766
        %v785 = vmul.f32 %v783, %v767
        %788 = vrot.lane.b32.xlu0 %v784, 127
        %v789 = vpop.permute.xlu0 %788
        %790 = vrot.lane.b32.xlu0 %v785, 127
        %v791 = vpop.permute.xlu0 %790
        %v794 = vadd.f32 %v736, %v789
        %v795 = vadd.f32 %v737, %v791
        %s796 = sld [smem:[#allocation9 + $0x9]]
        %v797 = vstv %s796
        %v798 = vmul.f32 %v797, %v766
        %v799 = vmul.f32 %v797, %v767
        %802 = vrot.lane.b32.xlu0 %v798, 127
        %v803 = vpop.permute.xlu0 %802
        %804 = vrot.lane.b32.xlu0 %v799, 127
        %v805 = vpop.permute.xlu0 %804
        %v808 = vadd.f32 %v750, %v803
        %v809 = vadd.f32 %v751, %v805
        %s810 = sld [smem:[#allocation9 + $0xa]]
        %v811 = vstv %s810
        %v812 = vmul.f32 %v811, %v766
        %v813 = vmul.f32 %v811, %v767
        %816 = vrot.lane.b32.xlu0 %v812, 127
        %v817 = vpop.permute.xlu0 %816
        %818 = vrot.lane.b32.xlu0 %v813, 127
        %v819 = vpop.permute.xlu0 %818
        %v822 = vadd.f32 %v764, %v817
        %v823 = vadd.f32 %v765, %v819
        %s824 = sld [smem:[#allocation9 + $0xb]]
        %v825 = vstv %s824
        %v826 = vmul.f32 %v825, %v766
        %v827 = vmul.f32 %v825, %v767
        %830 = vrot.lane.b32.xlu0 %v826, 127
        %v831 = vpop.permute.xlu0 %830
        %832 = vrot.lane.b32.xlu0 %v827, 127
        %v833 = vpop.permute.xlu0 %832
        %v836 = vadd.f32 %v780, %v831
        %v837 = vadd.f32 %v781, %v833
        %s838 = sld [smem:[#allocation9 + $0xc]]
        %v839 = vstv %s838
        %v840 = vmul.f32 %v839, %v766
        %v841 = vmul.f32 %v839, %v767
        %844 = vrot.lane.b32.xlu0 %v840, 123
        %v845 = vpop.permute.xlu0 %844
        %846 = vrot.lane.b32.xlu0 %v841, 123
        %v847 = vpop.permute.xlu0 %846
        %v850 = vadd.f32 %v794, %v845
        %v851 = vadd.f32 %v795, %v847
        %s852 = sld [smem:[#allocation9 + $0xd]]
        %v853 = vstv %s852
        %v854 = vmul.f32 %v853, %v766
        %v855 = vmul.f32 %v853, %v767
        %858 = vrot.lane.b32.xlu0 %v854, 123
        %v859 = vpop.permute.xlu0 %858
        %860 = vrot.lane.b32.xlu0 %v855, 123
        %v861 = vpop.permute.xlu0 %860
        %v864 = vadd.f32 %v808, %v859
        %v865 = vadd.f32 %v809, %v861
        %v866 = vld [vmem:[#allocation2 + $0x2] sm:$0xff]
        %v867 = vld [vmem:[#allocation2 + $0xa] sm:$0xff]
        %s868 = sld [smem:[#allocation9 + $0xe]]
        %v869 = vstv %s868
        %v870 = vmul.f32 %v869, %v866
        %v871 = vmul.f32 %v869, %v867
        %874 = vrot.lane.b32.xlu0 %v870, 2
        %v875 = vpop.permute.xlu0 %874
        %876 = vrot.lane.b32.xlu0 %v871, 2
        %v877 = vpop.permute.xlu0 %876
        %v880 = vadd.f32 %v822, %v875
        %v881 = vadd.f32 %v823, %v877
        %s882 = sld [smem:[#allocation9 + $0xf]]
        %v883 = vstv %s882
        %v884 = vmul.f32 %v883, %v866
        %v885 = vmul.f32 %v883, %v867
        %888 = vrot.lane.b32.xlu0 %v884, 2
        %v889 = vpop.permute.xlu0 %888
        %890 = vrot.lane.b32.xlu0 %v885, 2
        %v891 = vpop.permute.xlu0 %890
        %v894 = vadd.f32 %v836, %v889
        %v895 = vadd.f32 %v837, %v891
        %s896 = sld [smem:[#allocation9 + $0x10]]
        %v897 = vstv %s896
        %v898 = vmul.f32 %v897, %v866
        %v899 = vmul.f32 %v897, %v867
        %902 = vrot.lane.b32.xlu0 %v898, 126
        %v903 = vpop.permute.xlu0 %902
        %904 = vrot.lane.b32.xlu0 %v899, 126
        %v905 = vpop.permute.xlu0 %904
        %v908 = vadd.f32 %v850, %v903
        %v909 = vadd.f32 %v851, %v905
        %s910 = sld [smem:[#allocation9 + $0x11]]
        %v911 = vstv %s910
        %v912 = vmul.f32 %v911, %v866
        %v913 = vmul.f32 %v911, %v867
        %916 = vrot.lane.b32.xlu0 %v912, 126
        %v917 = vpop.permute.xlu0 %916
        %918 = vrot.lane.b32.xlu0 %v913, 126
        %v919 = vpop.permute.xlu0 %918
        %v922 = vadd.f32 %v864, %v917
        %v923 = vadd.f32 %v865, %v919
        %s924 = sld [smem:[#allocation9 + $0x12]]
        %v925 = vstv %s924
        %v926 = vmul.f32 %v925, %v866
        %v927 = vmul.f32 %v925, %v867
        %930 = vrot.lane.b32.xlu0 %v926, 126
        %v931 = vpop.permute.xlu0 %930
        %932 = vrot.lane.b32.xlu0 %v927, 126
        %v933 = vpop.permute.xlu0 %932
        %v936 = vadd.f32 %v880, %v931
        %v937 = vadd.f32 %v881, %v933
        %s938 = sld [smem:[#allocation9 + $0x13]]
        %v939 = vstv %s938
        %v940 = vmul.f32 %v939, %v866
        %v941 = vmul.f32 %v939, %v867
        %944 = vrot.lane.b32.xlu0 %v940, 126
        %v945 = vpop.permute.xlu0 %944
        %946 = vrot.lane.b32.xlu0 %v941, 126
        %v947 = vpop.permute.xlu0 %946
        %v950 = vadd.f32 %v894, %v945
        %v951 = vadd.f32 %v895, %v947
        %s952 = sld [smem:[#allocation9 + $0x14]]
        %v953 = vstv %s952
        %v954 = vmul.f32 %v953, %v866
        %v955 = vmul.f32 %v953, %v867
        %958 = vrot.lane.b32.xlu0 %v954, 122
        %v959 = vpop.permute.xlu0 %958
        %960 = vrot.lane.b32.xlu0 %v955, 122
        %v961 = vpop.permute.xlu0 %960
        %v964 = vadd.f32 %v908, %v959
        %v965 = vadd.f32 %v909, %v961
        %v966 = vld [vmem:[#allocation2 + $0x3] sm:$0xff]
        %v967 = vld [vmem:[#allocation2 + $0xb] sm:$0xff]
        %s968 = sld [smem:[#allocation9 + $0x15]]
        %v969 = vstv %s968
        %v970 = vmul.f32 %v969, %v966
        %v971 = vmul.f32 %v969, %v967
        %974 = vrot.lane.b32.xlu0 %v970, 1
        %v975 = vpop.permute.xlu0 %974
        %976 = vrot.lane.b32.xlu0 %v971, 1
        %v977 = vpop.permute.xlu0 %976
        %v980 = vadd.f32 %v922, %v975
        %v981 = vadd.f32 %v923, %v977
        %s982 = sld [smem:[#allocation9 + $0x16]]
        %v983 = vstv %s982
        %v984 = vmul.f32 %v983, %v966
        %v985 = vmul.f32 %v983, %v967
        %988 = vrot.lane.b32.xlu0 %v984, 1
        %v989 = vpop.permute.xlu0 %988
        %990 = vrot.lane.b32.xlu0 %v985, 1
        %v991 = vpop.permute.xlu0 %990
        %v994 = vadd.f32 %v936, %v989
        %v995 = vadd.f32 %v937, %v991
        %s996 = sld [smem:[#allocation9 + $0x17]]
        %v997 = vstv %s996
        %v998 = vmul.f32 %v997, %v966
        %v999 = vmul.f32 %v997, %v967
        %1002 = vrot.lane.b32.xlu0 %v998, 1
        %v1003 = vpop.permute.xlu0 %1002
        %1004 = vrot.lane.b32.xlu0 %v999, 1
        %v1005 = vpop.permute.xlu0 %1004
        %v1008 = vadd.f32 %v950, %v1003
        %v1009 = vadd.f32 %v951, %v1005
        %s1010 = sld [smem:[#allocation9 + $0x18]]
        %v1011 = vstv %s1010
        %v1012 = vmul.f32 %v1011, %v966
        %v1013 = vmul.f32 %v1011, %v967
        %1016 = vrot.lane.b32.xlu0 %v1012, 125
        %v1017 = vpop.permute.xlu0 %1016
        %1018 = vrot.lane.b32.xlu0 %v1013, 125
        %v1019 = vpop.permute.xlu0 %1018
        %v1022 = vadd.f32 %v964, %v1017
        %v1023 = vadd.f32 %v965, %v1019
        %s1024 = sld [smem:[#allocation9 + $0x19]]
        %v1025 = vstv %s1024
        %v1026 = vmul.f32 %v1025, %v966
        %v1027 = vmul.f32 %v1025, %v967
        %1030 = vrot.lane.b32.xlu0 %v1026, 125
        %v1031 = vpop.permute.xlu0 %1030
        %1032 = vrot.lane.b32.xlu0 %v1027, 125
        %v1033 = vpop.permute.xlu0 %1032
        %v1036 = vadd.f32 %v980, %v1031
        %v1037 = vadd.f32 %v981, %v1033
        %s1038 = sld [smem:[#allocation9 + $0x1a]]
        %v1039 = vstv %s1038
        %v1040 = vmul.f32 %v1039, %v966
        %v1041 = vmul.f32 %v1039, %v967
        %1044 = vrot.lane.b32.xlu0 %v1040, 125
        %v1045 = vpop.permute.xlu0 %1044
        %1046 = vrot.lane.b32.xlu0 %v1041, 125
        %v1047 = vpop.permute.xlu0 %1046
        %v1050 = vadd.f32 %v994, %v1045
        %v1051 = vadd.f32 %v995, %v1047
        %s1052 = sld [smem:[#allocation9 + $0x1b]]
        %v1053 = vstv %s1052
        %v1054 = vmul.f32 %v1053, %v966
        %v1055 = vmul.f32 %v1053, %v967
        %1058 = vrot.lane.b32.xlu0 %v1054, 125
        %v1059 = vpop.permute.xlu0 %1058
        %1060 = vrot.lane.b32.xlu0 %v1055, 125
        %v1061 = vpop.permute.xlu0 %1060
        %v1064 = vadd.f32 %v1008, %v1059
        %v1065 = vadd.f32 %v1009, %v1061
        %v1066 = vld [vmem:[#allocation2 + $0x4] sm:$0xff]
        %v1067 = vld [vmem:[#allocation2 + $0xc] sm:$0xff]
        %s1068 = sld [smem:[#allocation9 + $0x1c]]
        %v1069 = vstv %s1068
        %v1070 = vmul.f32 %v1069, %v1066
        %v1071 = vmul.f32 %v1069, %v1067
        %v1072 = vadd.f32 %v1022, %v1070
        %v1073 = vadd.f32 %v1023, %v1071
        %s1074 = sld [smem:[#allocation9 + $0x1d]]
        %v1075 = vstv %s1074
        %v1076 = vmul.f32 %v1075, %v1066
        %v1077 = vmul.f32 %v1075, %v1067
        %v1078 = vadd.f32 %v1036, %v1076
        %v1079 = vadd.f32 %v1037, %v1077
        %s1080 = sld [smem:[#allocation9 + $0x1e]]
        %v1081 = vstv %s1080
        %v1082 = vmul.f32 %v1081, %v1066
        %v1083 = vmul.f32 %v1081, %v1067
        %v1084 = vadd.f32 %v1050, %v1082
        %v1085 = vadd.f32 %v1051, %v1083
        %s1086 = sld [smem:[#allocation9 + $0x1f]]
        %v1087 = vstv %s1086
        %v1088 = vmul.f32 %v1087, %v1066
        %v1089 = vmul.f32 %v1087, %v1067
        %v1090 = vadd.f32 %v1064, %v1088
        %v1091 = vadd.f32 %v1065, %v1089
        %s1092 = sld [smem:[#allocation9 + $0x20]]
        %v1093 = vstv %s1092
        %v1094 = vmul.f32 %v1093, %v1066
        %v1095 = vmul.f32 %v1093, %v1067
        %1098 = vrot.lane.b32.xlu0 %v1094, 124
        %v1099 = vpop.permute.xlu0 %1098
        %1100 = vrot.lane.b32.xlu0 %v1095, 124
        %v1101 = vpop.permute.xlu0 %1100
        %v1104 = vadd.f32 %v1072, %v1099
        %v1105 = vadd.f32 %v1073, %v1101
        %s1106 = sld [smem:[#allocation9 + $0x21]]
        %v1107 = vstv %s1106
        %v1108 = vmul.f32 %v1107, %v1066
        %v1109 = vmul.f32 %v1107, %v1067
        %1112 = vrot.lane.b32.xlu0 %v1108, 124
        %v1113 = vpop.permute.xlu0 %1112
        %1114 = vrot.lane.b32.xlu0 %v1109, 124
        %v1115 = vpop.permute.xlu0 %1114
        %v1118 = vadd.f32 %v1078, %v1113
        %v1119 = vadd.f32 %v1079, %v1115
        %s1120 = sld [smem:[#allocation9 + $0x22]]
        %v1121 = vstv %s1120
        %v1122 = vmul.f32 %v1121, %v1066
        %v1123 = vmul.f32 %v1121, %v1067
        %1126 = vrot.lane.b32.xlu0 %v1122, 124
        %v1127 = vpop.permute.xlu0 %1126
        %1128 = vrot.lane.b32.xlu0 %v1123, 124
        %v1129 = vpop.permute.xlu0 %1128
        %v1132 = vadd.f32 %v1084, %v1127
        %v1133 = vadd.f32 %v1085, %v1129
        %v1134 = vld [vmem:[#allocation2 + $0x5] sm:$0xff]
        %v1135 = vld [vmem:[#allocation2 + $0xd] sm:$0xff]
        %s1136 = sld [smem:[#allocation9 + $0x23]]
        %v1137 = vstv %s1136
        %v1138 = vmul.f32 %v1137, %v1134
        %v1139 = vmul.f32 %v1137, %v1135
        %1142 = vrot.lane.b32.xlu0 %v1138, 3
        %v1143 = vpop.permute.xlu0 %1142
        %1144 = vrot.lane.b32.xlu0 %v1139, 3
        %v1145 = vpop.permute.xlu0 %1144
        %v1148 = vadd.f32 %v1090, %v1143
        %v1149 = vadd.f32 %v1091, %v1145
        %s1150 = sld [smem:[#allocation9 + $0x24]]
        %v1151 = vstv %s1150
        %v1152 = vmul.f32 %v1151, %v1134
        %v1153 = vmul.f32 %v1151, %v1135
        %1156 = vrot.lane.b32.xlu0 %v1152, 127
        %v1157 = vpop.permute.xlu0 %1156
        %1158 = vrot.lane.b32.xlu0 %v1153, 127
        %v1159 = vpop.permute.xlu0 %1158
        %v1162 = vadd.f32 %v1104, %v1157
        %v1163 = vadd.f32 %v1105, %v1159
        %s1164 = sld [smem:[#allocation9 + $0x25]]
        %v1165 = vstv %s1164
        %v1166 = vmul.f32 %v1165, %v1134
        %v1167 = vmul.f32 %v1165, %v1135
        %1170 = vrot.lane.b32.xlu0 %v1166, 127
        %v1171 = vpop.permute.xlu0 %1170
        %1172 = vrot.lane.b32.xlu0 %v1167, 127
        %v1173 = vpop.permute.xlu0 %1172
        %v1176 = vadd.f32 %v1118, %v1171
        %v1177 = vadd.f32 %v1119, %v1173
        %s1178 = sld [smem:[#allocation9 + $0x26]]
        %v1179 = vstv %s1178
        %v1180 = vmul.f32 %v1179, %v1134
        %v1181 = vmul.f32 %v1179, %v1135
        %1184 = vrot.lane.b32.xlu0 %v1180, 127
        %v1185 = vpop.permute.xlu0 %1184
        %1186 = vrot.lane.b32.xlu0 %v1181, 127
        %v1187 = vpop.permute.xlu0 %1186
        %v1190 = vadd.f32 %v1132, %v1185
        %v1191 = vadd.f32 %v1133, %v1187
        %s1192 = sld [smem:[#allocation9 + $0x27]]
        %v1193 = vstv %s1192
        %v1194 = vmul.f32 %v1193, %v1134
        %v1195 = vmul.f32 %v1193, %v1135
        %1198 = vrot.lane.b32.xlu0 %v1194, 127
        %v1199 = vpop.permute.xlu0 %1198
        %1200 = vrot.lane.b32.xlu0 %v1195, 127
        %v1201 = vpop.permute.xlu0 %1200
        %v1204 = vadd.f32 %v1148, %v1199
        %v1205 = vadd.f32 %v1149, %v1201
        %s1206 = sld [smem:[#allocation9 + $0x28]]
        %v1207 = vstv %s1206
        %v1208 = vmul.f32 %v1207, %v1134
        %v1209 = vmul.f32 %v1207, %v1135
        %1212 = vrot.lane.b32.xlu0 %v1208, 123
        %v1213 = vpop.permute.xlu0 %1212
        %1214 = vrot.lane.b32.xlu0 %v1209, 123
        %v1215 = vpop.permute.xlu0 %1214
        %v1218 = vadd.f32 %v1162, %v1213
        %v1219 = vadd.f32 %v1163, %v1215
        %s1220 = sld [smem:[#allocation9 + $0x29]]
        %v1221 = vstv %s1220
        %v1222 = vmul.f32 %v1221, %v1134
        %v1223 = vmul.f32 %v1221, %v1135
        %1226 = vrot.lane.b32.xlu0 %v1222, 123
        %v1227 = vpop.permute.xlu0 %1226
        %1228 = vrot.lane.b32.xlu0 %v1223, 123
        %v1229 = vpop.permute.xlu0 %1228
        %v1232 = vadd.f32 %v1176, %v1227
        %v1233 = vadd.f32 %v1177, %v1229
        %v1234 = vld [vmem:[#allocation2 + $0x6] sm:$0xff]
        %v1235 = vld [vmem:[#allocation2 + $0xe] sm:$0xff]
        %s1236 = sld [smem:[#allocation9 + $0x2a]]
        %v1237 = vstv %s1236
        %v1238 = vmul.f32 %v1237, %v1234
        %v1239 = vmul.f32 %v1237, %v1235
        %1242 = vrot.lane.b32.xlu0 %v1238, 2
        %v1243 = vpop.permute.xlu0 %1242
        %1244 = vrot.lane.b32.xlu0 %v1239, 2
        %v1245 = vpop.permute.xlu0 %1244
        %v1248 = vadd.f32 %v1190, %v1243
        %v1249 = vadd.f32 %v1191, %v1245
        %s1250 = sld [smem:[#allocation9 + $0x2b]]
        %v1251 = vstv %s1250
        %v1252 = vmul.f32 %v1251, %v1234
        %v1253 = vmul.f32 %v1251, %v1235
        %1256 = vrot.lane.b32.xlu0 %v1252, 2
        %v1257 = vpop.permute.xlu0 %1256
        %1258 = vrot.lane.b32.xlu0 %v1253, 2
        %v1259 = vpop.permute.xlu0 %1258
        %v1262 = vadd.f32 %v1204, %v1257
        %v1263 = vadd.f32 %v1205, %v1259
        %s1264 = sld [smem:[#allocation9 + $0x2c]]
        %v1265 = vstv %s1264
        %v1266 = vmul.f32 %v1265, %v1234
        %v1267 = vmul.f32 %v1265, %v1235
        %1270 = vrot.lane.b32.xlu0 %v1266, 126
        %v1271 = vpop.permute.xlu0 %1270
        %1272 = vrot.lane.b32.xlu0 %v1267, 126
        %v1273 = vpop.permute.xlu0 %1272
        %v1276 = vadd.f32 %v1218, %v1271
        %v1277 = vadd.f32 %v1219, %v1273
        %s1278 = sld [smem:[#allocation9 + $0x2d]]
        %v1279 = vstv %s1278
        %v1280 = vmul.f32 %v1279, %v1234
        %v1281 = vmul.f32 %v1279, %v1235
        %1284 = vrot.lane.b32.xlu0 %v1280, 126
        %v1285 = vpop.permute.xlu0 %1284
        %1286 = vrot.lane.b32.xlu0 %v1281, 126
        %v1287 = vpop.permute.xlu0 %1286
        %v1290 = vadd.f32 %v1232, %v1285
        %v1291 = vadd.f32 %v1233, %v1287
        %s1292 = sld [smem:[#allocation9 + $0x2e]]
        %v1293 = vstv %s1292
        %v1294 = vmul.f32 %v1293, %v1234
        %v1295 = vmul.f32 %v1293, %v1235
        %1298 = vrot.lane.b32.xlu0 %v1294, 126
        %v1299 = vpop.permute.xlu0 %1298
        %1300 = vrot.lane.b32.xlu0 %v1295, 126
        %v1301 = vpop.permute.xlu0 %1300
        %v1304 = vadd.f32 %v1248, %v1299
        %v1305 = vadd.f32 %v1249, %v1301
        %s1306 = sld [smem:[#allocation9 + $0x2f]]
        %v1307 = vstv %s1306
        %v1308 = vmul.f32 %v1307, %v1234
        %v1309 = vmul.f32 %v1307, %v1235
        %1312 = vrot.lane.b32.xlu0 %v1308, 126
        %v1313 = vpop.permute.xlu0 %1312
        %1314 = vrot.lane.b32.xlu0 %v1309, 126
        %v1315 = vpop.permute.xlu0 %1314
        %v1318 = vadd.f32 %v1262, %v1313
        %v1319 = vadd.f32 %v1263, %v1315
        %s1320 = sld [smem:[#allocation9 + $0x30]]
        %v1321 = vstv %s1320
        %v1322 = vmul.f32 %v1321, %v1234
        %v1323 = vmul.f32 %v1321, %v1235
        %1326 = vrot.lane.b32.xlu0 %v1322, 122
        %v1327 = vpop.permute.xlu0 %1326
        %1328 = vrot.lane.b32.xlu0 %v1323, 122
        %v1329 = vpop.permute.xlu0 %1328
        %v1332 = vadd.f32 %v1276, %v1327
        %v1333 = vadd.f32 %v1277, %v1329
        %v1334 = vld [vmem:[#allocation2 + $0x16] sm:$0xff]
        %v1335 = vld [vmem:[#allocation2 + $0x1e] sm:$0xff]
        %s1336 = sld [smem:[#allocation9 + $0x31]]
        %v1337 = vstv %s1336
        %v1338 = vmul.f32 %v1337, %v1334
        %v1339 = vmul.f32 %v1337, %v1335
        %1342 = vrot.lane.b32.xlu0 %v1338, 1
        %v1343 = vpop.permute.xlu0 %1342
        %1344 = vrot.lane.b32.xlu0 %v1339, 1
        %v1345 = vpop.permute.xlu0 %1344
        %v1348 = vadd.f32 %v1290, %v1343
        %v1349 = vadd.f32 %v1291, %v1345
        %s1350 = sld [smem:[#allocation9 + $0x32]]
        %v1351 = vstv %s1350
        %v1352 = vmul.f32 %v1351, %v1334
        %v1353 = vmul.f32 %v1351, %v1335
        %1356 = vrot.lane.b32.xlu0 %v1352, 1
        %v1357 = vpop.permute.xlu0 %1356
        %1358 = vrot.lane.b32.xlu0 %v1353, 1
        %v1359 = vpop.permute.xlu0 %1358
        %v1362 = vadd.f32 %v1304, %v1357
        %v1363 = vadd.f32 %v1305, %v1359
        %s1364 = sld [smem:[#allocation9 + $0x33]]
        %v1365 = vstv %s1364
        %v1366 = vmul.f32 %v1365, %v1334
        %v1367 = vmul.f32 %v1365, %v1335
        %1370 = vrot.lane.b32.xlu0 %v1366, 1
        %v1371 = vpop.permute.xlu0 %1370
        %1372 = vrot.lane.b32.xlu0 %v1367, 1
        %v1373 = vpop.permute.xlu0 %1372
        %v1376 = vadd.f32 %v1318, %v1371
        %v1377 = vadd.f32 %v1319, %v1373
        %s1378 = sld [smem:[#allocation9 + $0x34]]
        %v1379 = vstv %s1378
        %v1380 = vmul.f32 %v1379, %v1334
        %v1381 = vmul.f32 %v1379, %v1335
        %1384 = vrot.lane.b32.xlu0 %v1380, 125
        %v1385 = vpop.permute.xlu0 %1384
        %1386 = vrot.lane.b32.xlu0 %v1381, 125
        %v1387 = vpop.permute.xlu0 %1386
        %v1390 = vadd.f32 %v1332, %v1385
        %v1391 = vadd.f32 %v1333, %v1387
        %s1392 = sld [smem:[#allocation9 + $0x35]]
        %v1393 = vstv %s1392
        %v1394 = vmul.f32 %v1393, %v1334
        %v1395 = vmul.f32 %v1393, %v1335
        %1398 = vrot.lane.b32.xlu0 %v1394, 125
        %v1399 = vpop.permute.xlu0 %1398
        %1400 = vrot.lane.b32.xlu0 %v1395, 125
        %v1401 = vpop.permute.xlu0 %1400
        %v1404 = vadd.f32 %v1348, %v1399
        %v1405 = vadd.f32 %v1349, %v1401
        %s1406 = sld [smem:[#allocation9 + $0x36]]
        %v1407 = vstv %s1406
        %v1408 = vmul.f32 %v1407, %v1334
        %v1409 = vmul.f32 %v1407, %v1335
        %1412 = vrot.lane.b32.xlu0 %v1408, 125
        %v1413 = vpop.permute.xlu0 %1412
        %1414 = vrot.lane.b32.xlu0 %v1409, 125
        %v1415 = vpop.permute.xlu0 %1414
        %v1418 = vadd.f32 %v1362, %v1413
        %v1419 = vadd.f32 %v1363, %v1415
        %s1420 = sld [smem:[#allocation9 + $0x37]]
        %v1421 = vstv %s1420
        %v1422 = vmul.f32 %v1421, %v1334
        %v1423 = vmul.f32 %v1421, %v1335
        %1426 = vrot.lane.b32.xlu0 %v1422, 125
        %v1427 = vpop.permute.xlu0 %1426
        %1428 = vrot.lane.b32.xlu0 %v1423, 125
        %v1429 = vpop.permute.xlu0 %1428
        %v1432 = vadd.f32 %v1376, %v1427
        %v1433 = vadd.f32 %v1377, %v1429
        %v1434 = vld [vmem:[#allocation2 + $0x17] sm:$0xff]
        %v1435 = vld [vmem:[#allocation2 + $0x1f] sm:$0xff]
        %s1436 = sld [smem:[#allocation9 + $0x38]]
        %v1437 = vstv %s1436
        %v1438 = vmul.f32 %v1437, %v1434
        %v1439 = vmul.f32 %v1437, %v1435
        %v1440 = vadd.f32 %v1390, %v1438
        %v1441 = vadd.f32 %v1391, %v1439
        %s1442 = sld [smem:[#allocation9 + $0x39]]
        %v1443 = vstv %s1442
        %v1444 = vmul.f32 %v1443, %v1434
        %v1445 = vmul.f32 %v1443, %v1435
        %v1446 = vadd.f32 %v1404, %v1444
        %v1447 = vadd.f32 %v1405, %v1445
        %s1448 = sld [smem:[#allocation9 + $0x3a]]
        %v1449 = vstv %s1448
        %v1450 = vmul.f32 %v1449, %v1434
        %v1451 = vmul.f32 %v1449, %v1435
        %v1452 = vadd.f32 %v1418, %v1450
        %v1453 = vadd.f32 %v1419, %v1451
        %s1454 = sld [smem:[#allocation9 + $0x3b]]
        %v1455 = vstv %s1454
        %v1456 = vmul.f32 %v1455, %v1434
        %v1457 = vmul.f32 %v1455, %v1435
        %v1458 = vadd.f32 %v1432, %v1456
        %v1459 = vadd.f32 %v1433, %v1457
        %s1460 = sld [smem:[#allocation9 + $0x3c]]
        %v1461 = vstv %s1460
        %v1462 = vmul.f32 %v1461, %v1434
        %v1463 = vmul.f32 %v1461, %v1435
        %1466 = vrot.lane.b32.xlu0 %v1462, 124
        %v1467 = vpop.permute.xlu0 %1466
        %1468 = vrot.lane.b32.xlu0 %v1463, 124
        %v1469 = vpop.permute.xlu0 %1468
        %v1472 = vadd.f32 %v1440, %v1467
        %v1473 = vadd.f32 %v1441, %v1469
        %s1474 = sld [smem:[#allocation9 + $0x3d]]
        %v1475 = vstv %s1474
        %v1476 = vmul.f32 %v1475, %v1434
        %v1477 = vmul.f32 %v1475, %v1435
        %1480 = vrot.lane.b32.xlu0 %v1476, 124
        %v1481 = vpop.permute.xlu0 %1480
        %1482 = vrot.lane.b32.xlu0 %v1477, 124
        %v1483 = vpop.permute.xlu0 %1482
        %v1486 = vadd.f32 %v1446, %v1481
        %v1487 = vadd.f32 %v1447, %v1483
        %s1488 = sld [smem:[#allocation9 + $0x3e]]
        %v1489 = vstv %s1488
        %v1490 = vmul.f32 %v1489, %v1434
        %v1491 = vmul.f32 %v1489, %v1435
        %1494 = vrot.lane.b32.xlu0 %v1490, 124
        %v1495 = vpop.permute.xlu0 %1494
        %1496 = vrot.lane.b32.xlu0 %v1491, 124
        %v1497 = vpop.permute.xlu0 %1496
        %v1500 = vadd.f32 %v1452, %v1495
        %v1501 = vadd.f32 %v1453, %v1497
        %v1502 = vld [vmem:[#allocation2 + $0x18] sm:$0xff]
        %v1503 = vld [vmem:[#allocation2 + $0x20] sm:$0xff]
        %s1504 = sld [smem:[#allocation9 + $0x3f]]
        %v1505 = vstv %s1504
        %v1506 = vmul.f32 %v1505, %v1502
        %v1507 = vmul.f32 %v1505, %v1503
        %1510 = vrot.lane.b32.xlu0 %v1506, 3
        %v1511 = vpop.permute.xlu0 %1510
        %1512 = vrot.lane.b32.xlu0 %v1507, 3
        %v1513 = vpop.permute.xlu0 %1512
        %v1516 = vadd.f32 %v1458, %v1511
        %v1517 = vadd.f32 %v1459, %v1513
        %s1518 = sld [smem:[#allocation9 + $0x40]]
        %v1519 = vstv %s1518
        %v1520 = vmul.f32 %v1519, %v1502
        %v1521 = vmul.f32 %v1519, %v1503
        %1524 = vrot.lane.b32.xlu0 %v1520, 127
        %v1525 = vpop.permute.xlu0 %1524
        %1526 = vrot.lane.b32.xlu0 %v1521, 127
        %v1527 = vpop.permute.xlu0 %1526
        %v1530 = vadd.f32 %v1472, %v1525
        %v1531 = vadd.f32 %v1473, %v1527
        %s1532 = sld [smem:[#allocation9 + $0x41]]
        %v1533 = vstv %s1532
        %v1534 = vmul.f32 %v1533, %v1502
        %v1535 = vmul.f32 %v1533, %v1503
        %1538 = vrot.lane.b32.xlu0 %v1534, 127
        %v1539 = vpop.permute.xlu0 %1538
        %1540 = vrot.lane.b32.xlu0 %v1535, 127
        %v1541 = vpop.permute.xlu0 %1540
        %v1544 = vadd.f32 %v1486, %v1539
        %v1545 = vadd.f32 %v1487, %v1541
        %s1546 = sld [smem:[#allocation9 + $0x42]]
        %v1547 = vstv %s1546
        %v1548 = vmul.f32 %v1547, %v1502
        %v1549 = vmul.f32 %v1547, %v1503
        %1552 = vrot.lane.b32.xlu0 %v1548, 127
        %v1553 = vpop.permute.xlu0 %1552
        %1554 = vrot.lane.b32.xlu0 %v1549, 127
        %v1555 = vpop.permute.xlu0 %1554
        %v1558 = vadd.f32 %v1500, %v1553
        %v1559 = vadd.f32 %v1501, %v1555
        %s1560 = sld [smem:[#allocation9 + $0x43]]
        %v1561 = vstv %s1560
        %v1562 = vmul.f32 %v1561, %v1502
        %v1563 = vmul.f32 %v1561, %v1503
        %1566 = vrot.lane.b32.xlu0 %v1562, 127
        %v1567 = vpop.permute.xlu0 %1566
        %1568 = vrot.lane.b32.xlu0 %v1563, 127
        %v1569 = vpop.permute.xlu0 %1568
        %v1572 = vadd.f32 %v1516, %v1567
        %v1573 = vadd.f32 %v1517, %v1569
        %s1574 = sld [smem:[#allocation9 + $0x44]]
        %v1575 = vstv %s1574
        %v1576 = vmul.f32 %v1575, %v1502
        %v1577 = vmul.f32 %v1575, %v1503
        %1580 = vrot.lane.b32.xlu0 %v1576, 123
        %v1581 = vpop.permute.xlu0 %1580
        %1582 = vrot.lane.b32.xlu0 %v1577, 123
        %v1583 = vpop.permute.xlu0 %1582
        %v1586 = vadd.f32 %v1530, %v1581
        %v1587 = vadd.f32 %v1531, %v1583
        %s1588 = sld [smem:[#allocation9 + $0x45]]
        %v1589 = vstv %s1588
        %v1590 = vmul.f32 %v1589, %v1502
        %v1591 = vmul.f32 %v1589, %v1503
        %1594 = vrot.lane.b32.xlu0 %v1590, 123
        %v1595 = vpop.permute.xlu0 %1594
        %1596 = vrot.lane.b32.xlu0 %v1591, 123
        %v1597 = vpop.permute.xlu0 %1596
        %v1600 = vadd.f32 %v1544, %v1595
        %v1601 = vadd.f32 %v1545, %v1597
        %v1602 = vld [vmem:[#allocation2 + $0x19] sm:$0xff]
        %v1603 = vld [vmem:[#allocation2 + $0x21] sm:$0xff]
        %s1604 = sld [smem:[#allocation9 + $0x46]]
        %v1605 = vstv %s1604
        %v1606 = vmul.f32 %v1605, %v1602
        %v1607 = vmul.f32 %v1605, %v1603
        %1610 = vrot.lane.b32.xlu0 %v1606, 2
        %v1611 = vpop.permute.xlu0 %1610
        %1612 = vrot.lane.b32.xlu0 %v1607, 2
        %v1613 = vpop.permute.xlu0 %1612
        %v1616 = vadd.f32 %v1558, %v1611
        %v1617 = vadd.f32 %v1559, %v1613
        %s1618 = sld [smem:[#allocation9 + $0x47]]
        %v1619 = vstv %s1618
        %v1620 = vmul.f32 %v1619, %v1602
        %v1621 = vmul.f32 %v1619, %v1603
        %1624 = vrot.lane.b32.xlu0 %v1620, 2
        %v1625 = vpop.permute.xlu0 %1624
        %1626 = vrot.lane.b32.xlu0 %v1621, 2
        %v1627 = vpop.permute.xlu0 %1626
        %v1630 = vadd.f32 %v1572, %v1625
        %v1631 = vadd.f32 %v1573, %v1627
        %s1632 = sld [smem:[#allocation9 + $0x48]]
        %v1633 = vstv %s1632
        %v1634 = vmul.f32 %v1633, %v1602
        %v1635 = vmul.f32 %v1633, %v1603
        %1638 = vrot.lane.b32.xlu0 %v1634, 126
        %v1639 = vpop.permute.xlu0 %1638
        %1640 = vrot.lane.b32.xlu0 %v1635, 126
        %v1641 = vpop.permute.xlu0 %1640
        %v1644 = vadd.f32 %v1586, %v1639
        %v1645 = vadd.f32 %v1587, %v1641
        %s1646 = sld [smem:[#allocation9 + $0x49]]
        %v1647 = vstv %s1646
        %v1648 = vmul.f32 %v1647, %v1602
        %v1649 = vmul.f32 %v1647, %v1603
        %1652 = vrot.lane.b32.xlu0 %v1648, 126
        %v1653 = vpop.permute.xlu0 %1652
        %1654 = vrot.lane.b32.xlu0 %v1649, 126
        %v1655 = vpop.permute.xlu0 %1654
        %v1658 = vadd.f32 %v1600, %v1653
        %v1659 = vadd.f32 %v1601, %v1655
        %s1660 = sld [smem:[#allocation9 + $0x4a]]
        %v1661 = vstv %s1660
        %v1662 = vmul.f32 %v1661, %v1602
        %v1663 = vmul.f32 %v1661, %v1603
        %1666 = vrot.lane.b32.xlu0 %v1662, 126
        %v1667 = vpop.permute.xlu0 %1666
        %1668 = vrot.lane.b32.xlu0 %v1663, 126
        %v1669 = vpop.permute.xlu0 %1668
        %v1672 = vadd.f32 %v1616, %v1667
        %v1673 = vadd.f32 %v1617, %v1669
        %s1674 = sld [smem:[#allocation9 + $0x4b]]
        %v1675 = vstv %s1674
        %v1676 = vmul.f32 %v1675, %v1602
        %v1677 = vmul.f32 %v1675, %v1603
        %1680 = vrot.lane.b32.xlu0 %v1676, 126
        %v1681 = vpop.permute.xlu0 %1680
        %1682 = vrot.lane.b32.xlu0 %v1677, 126
        %v1683 = vpop.permute.xlu0 %1682
        %v1686 = vadd.f32 %v1630, %v1681
        %v1687 = vadd.f32 %v1631, %v1683
        %s1688 = sld [smem:[#allocation9 + $0x4c]]
        %v1689 = vstv %s1688
        %v1690 = vmul.f32 %v1689, %v1602
        %v1691 = vmul.f32 %v1689, %v1603
        %1694 = vrot.lane.b32.xlu0 %v1690, 122
        %v1695 = vpop.permute.xlu0 %1694
        %1696 = vrot.lane.b32.xlu0 %v1691, 122
        %v1697 = vpop.permute.xlu0 %1696
        %v1700 = vadd.f32 %v1644, %v1695
        %v1701 = vadd.f32 %v1645, %v1697
        %v1702 = vld [vmem:[#allocation2 + $0x1a] sm:$0xff]
        %v1703 = vld [vmem:[#allocation2 + $0x22] sm:$0xff]
        %s1704 = sld [smem:[#allocation9 + $0x4d]]
        %v1705 = vstv %s1704
        %v1706 = vmul.f32 %v1705, %v1702
        %v1707 = vmul.f32 %v1705, %v1703
        %1710 = vrot.lane.b32.xlu0 %v1706, 1
        %v1711 = vpop.permute.xlu0 %1710
        %1712 = vrot.lane.b32.xlu0 %v1707, 1
        %v1713 = vpop.permute.xlu0 %1712
        %v1716 = vadd.f32 %v1658, %v1711
        %v1717 = vadd.f32 %v1659, %v1713
        %s1718 = sld [smem:[#allocation9 + $0x4e]]
        %v1719 = vstv %s1718
        %v1720 = vmul.f32 %v1719, %v1702
        %v1721 = vmul.f32 %v1719, %v1703
        %1724 = vrot.lane.b32.xlu0 %v1720, 1
        %v1725 = vpop.permute.xlu0 %1724
        %1726 = vrot.lane.b32.xlu0 %v1721, 1
        %v1727 = vpop.permute.xlu0 %1726
        %v1730 = vadd.f32 %v1672, %v1725
        %v1731 = vadd.f32 %v1673, %v1727
        %s1732 = sld [smem:[#allocation9 + $0x4f]]
        %v1733 = vstv %s1732
        %v1734 = vmul.f32 %v1733, %v1702
        %v1735 = vmul.f32 %v1733, %v1703
        %1738 = vrot.lane.b32.xlu0 %v1734, 1
        %v1739 = vpop.permute.xlu0 %1738
        %1740 = vrot.lane.b32.xlu0 %v1735, 1
        %v1741 = vpop.permute.xlu0 %1740
        %v1744 = vadd.f32 %v1686, %v1739
        %v1745 = vadd.f32 %v1687, %v1741
        %s1746 = sld [smem:[#allocation9 + $0x50]]
        %v1747 = vstv %s1746
        %v1748 = vmul.f32 %v1747, %v1702
        %v1749 = vmul.f32 %v1747, %v1703
        %1752 = vrot.lane.b32.xlu0 %v1748, 125
        %v1753 = vpop.permute.xlu0 %1752
        %1754 = vrot.lane.b32.xlu0 %v1749, 125
        %v1755 = vpop.permute.xlu0 %1754
        %v1758 = vadd.f32 %v1700, %v1753
        %v1759 = vadd.f32 %v1701, %v1755
        %s1760 = sld [smem:[#allocation9 + $0x51]]
        %v1761 = vstv %s1760
        %v1762 = vmul.f32 %v1761, %v1702
        %v1763 = vmul.f32 %v1761, %v1703
        %1766 = vrot.lane.b32.xlu0 %v1762, 125
        %v1767 = vpop.permute.xlu0 %1766
        %1768 = vrot.lane.b32.xlu0 %v1763, 125
        %v1769 = vpop.permute.xlu0 %1768
        %v1772 = vadd.f32 %v1716, %v1767
        %v1773 = vadd.f32 %v1717, %v1769
        %s1774 = sld [smem:[#allocation9 + $0x52]]
        %v1775 = vstv %s1774
        %v1776 = vmul.f32 %v1775, %v1702
        %v1777 = vmul.f32 %v1775, %v1703
        %1780 = vrot.lane.b32.xlu0 %v1776, 125
        %v1781 = vpop.permute.xlu0 %1780
        %1782 = vrot.lane.b32.xlu0 %v1777, 125
        %v1783 = vpop.permute.xlu0 %1782
        %v1786 = vadd.f32 %v1730, %v1781
        %v1787 = vadd.f32 %v1731, %v1783
        %s1788 = sld [smem:[#allocation9 + $0x53]]
        %v1789 = vstv %s1788
        %v1790 = vmul.f32 %v1789, %v1702
        %v1791 = vmul.f32 %v1789, %v1703
        %1794 = vrot.lane.b32.xlu0 %v1790, 125
        %v1795 = vpop.permute.xlu0 %1794
        %1796 = vrot.lane.b32.xlu0 %v1791, 125
        %v1797 = vpop.permute.xlu0 %1796
        %v1800 = vadd.f32 %v1744, %v1795
        %v1801 = vadd.f32 %v1745, %v1797
        %v1802 = vld [vmem:[#allocation2 + $0x1b] sm:$0xff]
        %v1803 = vld [vmem:[#allocation2 + $0x23] sm:$0xff]
        %s1804 = sld [smem:[#allocation9 + $0x54]]
        %v1805 = vstv %s1804
        %v1806 = vmul.f32 %v1805, %v1802
        %v1807 = vmul.f32 %v1805, %v1803
        %v1808 = vadd.f32 %v1758, %v1806
        %v1809 = vadd.f32 %v1759, %v1807
        %s1810 = sld [smem:[#allocation9 + $0x55]]
        %v1811 = vstv %s1810
        %v1812 = vmul.f32 %v1811, %v1802
        %v1813 = vmul.f32 %v1811, %v1803
        %v1814 = vadd.f32 %v1772, %v1812
        %v1815 = vadd.f32 %v1773, %v1813
        %s1816 = sld [smem:[#allocation9 + $0x56]]
        %v1817 = vstv %s1816
        %v1818 = vmul.f32 %v1817, %v1802
        %v1819 = vmul.f32 %v1817, %v1803
        %v1820 = vadd.f32 %v1786, %v1818
        %v1821 = vadd.f32 %v1787, %v1819
        %s1822 = sld [smem:[#allocation9 + $0x57]]
        %v1823 = vstv %s1822
        %v1824 = vmul.f32 %v1823, %v1802
        %v1825 = vmul.f32 %v1823, %v1803
        %v1826 = vadd.f32 %v1800, %v1824
        %v1827 = vadd.f32 %v1801, %v1825
        %s1828 = sld [smem:[#allocation9 + $0x58]]
        %v1829 = vstv %s1828
        %v1830 = vmul.f32 %v1829, %v1802
        %v1831 = vmul.f32 %v1829, %v1803
        %1834 = vrot.lane.b32.xlu0 %v1830, 124
        %v1835 = vpop.permute.xlu0 %1834
        %1836 = vrot.lane.b32.xlu0 %v1831, 124
        %v1837 = vpop.permute.xlu0 %1836
        %v1840 = vadd.f32 %v1808, %v1835
        %v1841 = vadd.f32 %v1809, %v1837
        %s1842 = sld [smem:[#allocation9 + $0x59]]
        %v1843 = vstv %s1842
        %v1844 = vmul.f32 %v1843, %v1802
        %v1845 = vmul.f32 %v1843, %v1803
        %1848 = vrot.lane.b32.xlu0 %v1844, 124
        %v1849 = vpop.permute.xlu0 %1848
        %1850 = vrot.lane.b32.xlu0 %v1845, 124
        %v1851 = vpop.permute.xlu0 %1850
        %v1854 = vadd.f32 %v1814, %v1849
        %v1855 = vadd.f32 %v1815, %v1851
        %s1856 = sld [smem:[#allocation9 + $0x5a]]
        %v1857 = vstv %s1856
        %v1858 = vmul.f32 %v1857, %v1802
        %v1859 = vmul.f32 %v1857, %v1803
        %1862 = vrot.lane.b32.xlu0 %v1858, 124
        %v1863 = vpop.permute.xlu0 %1862
        %1864 = vrot.lane.b32.xlu0 %v1859, 124
        %v1865 = vpop.permute.xlu0 %1864
        %v1868 = vadd.f32 %v1820, %v1863
        %v1869 = vadd.f32 %v1821, %v1865
        %v1870 = vld [vmem:[#allocation2 + $0x1c] sm:$0xff]
        %v1871 = vld [vmem:[#allocation2 + $0x24] sm:$0xff]
        %s1872 = sld [smem:[#allocation9 + $0x5b]]
        %v1873 = vstv %s1872
        %v1874 = vmul.f32 %v1873, %v1870
        %v1875 = vmul.f32 %v1873, %v1871
        %1878 = vrot.lane.b32.xlu0 %v1874, 3
        %v1879 = vpop.permute.xlu0 %1878
        %1880 = vrot.lane.b32.xlu0 %v1875, 3
        %v1881 = vpop.permute.xlu0 %1880
        %v1884 = vadd.f32 %v1826, %v1879
        %v1885 = vadd.f32 %v1827, %v1881
        %s1886 = sld [smem:[#allocation9 + $0x5c]]
        %v1887 = vstv %s1886
        %v1888 = vmul.f32 %v1887, %v1870
        %v1889 = vmul.f32 %v1887, %v1871
        %1892 = vrot.lane.b32.xlu0 %v1888, 127
        %v1893 = vpop.permute.xlu0 %1892
        %1894 = vrot.lane.b32.xlu0 %v1889, 127
        %v1895 = vpop.permute.xlu0 %1894
        %v1898 = vadd.f32 %v1840, %v1893
        %v1899 = vadd.f32 %v1841, %v1895
        %s1900 = sld [smem:[#allocation9 + $0x5d]]
        %v1901 = vstv %s1900
        %v1902 = vmul.f32 %v1901, %v1870
        %v1903 = vmul.f32 %v1901, %v1871
        %1906 = vrot.lane.b32.xlu0 %v1902, 127
        %v1907 = vpop.permute.xlu0 %1906
        %1908 = vrot.lane.b32.xlu0 %v1903, 127
        %v1909 = vpop.permute.xlu0 %1908
        %v1912 = vadd.f32 %v1854, %v1907
        %v1913 = vadd.f32 %v1855, %v1909
        %s1914 = sld [smem:[#allocation9 + $0x5e]]
        %v1915 = vstv %s1914
        %v1916 = vmul.f32 %v1915, %v1870
        %v1917 = vmul.f32 %v1915, %v1871
        %1920 = vrot.lane.b32.xlu0 %v1916, 127
        %v1921 = vpop.permute.xlu0 %1920
        %1922 = vrot.lane.b32.xlu0 %v1917, 127
        %v1923 = vpop.permute.xlu0 %1922
        %v1926 = vadd.f32 %v1868, %v1921
        %v1927 = vadd.f32 %v1869, %v1923
        %s1928 = sld [smem:[#allocation9 + $0x5f]]
        %v1929 = vstv %s1928
        %v1930 = vmul.f32 %v1929, %v1870
        %v1931 = vmul.f32 %v1929, %v1871
        %1934 = vrot.lane.b32.xlu0 %v1930, 127
        %v1935 = vpop.permute.xlu0 %1934
        %1936 = vrot.lane.b32.xlu0 %v1931, 127
        %v1937 = vpop.permute.xlu0 %1936
        %v1940 = vadd.f32 %v1884, %v1935
        %v1941 = vadd.f32 %v1885, %v1937
        %s1942 = sld [smem:[#allocation9 + $0x60]]
        %v1943 = vstv %s1942
        %v1944 = vmul.f32 %v1943, %v1870
        %v1945 = vmul.f32 %v1943, %v1871
        %1948 = vrot.lane.b32.xlu0 %v1944, 123
        %v1949 = vpop.permute.xlu0 %1948
        %1950 = vrot.lane.b32.xlu0 %v1945, 123
        %v1951 = vpop.permute.xlu0 %1950
        %v1954 = vadd.f32 %v1898, %v1949
        %v1955 = vadd.f32 %v1899, %v1951
        %s1956 = sld [smem:[#allocation9 + $0x61]]
        %v1957 = vstv %s1956
        %v1958 = vmul.f32 %v1957, %v1870
        %v1959 = vmul.f32 %v1957, %v1871
        %1962 = vrot.lane.b32.xlu0 %v1958, 123
        %v1963 = vpop.permute.xlu0 %1962
        %1964 = vrot.lane.b32.xlu0 %v1959, 123
        %v1965 = vpop.permute.xlu0 %1964
        %v1968 = vadd.f32 %v1912, %v1963
        %v1969 = vadd.f32 %v1913, %v1965
        %1972 = vrot.lane.b32.xlu0 %v1968, 127
        %v1973 = vpop.permute.xlu0 %1972
        %1974 = vrot.lane.b32.xlu0 %v1969, 127
        %v1975 = vpop.permute.xlu0 %1974
        %v1978 = vadd.f32 %v1954, %v1973
        %v1979 = vadd.f32 %v1955, %v1975
        %1982 = vrot.lane.b32.xlu0 %v1940, 127
        %v1983 = vpop.permute.xlu0 %1982
        %1984 = vrot.lane.b32.xlu0 %v1941, 127
        %v1985 = vpop.permute.xlu0 %1984
        %v1988 = vadd.f32 %v1926, %v1983
        %v1989 = vadd.f32 %v1927, %v1985
        %1992 = vrot.lane.b32.xlu0 %v1988, 126
        %v1993 = vpop.permute.xlu0 %1992
        %1994 = vrot.lane.b32.xlu0 %v1989, 126
        %v1995 = vpop.permute.xlu0 %1994
        %v1998 = vadd.f32 %v1978, %v1993
        %v1999 = vadd.f32 %v1979, %v1995
        %s2000 = sld [smem:[#allocation4]]
        %v2001 = vstv %s2000
        %v2002 = vadd.f32 %v1998, %v2001
        %v2003 = vadd.f32 %v1999, %v2001
        %v2004 = vxor.u32 %v2002, 2147483648
        %v2005 = vxor.u32 %v2003, 2147483648
        %v2006 = vmul.f32 %v2004, 1.442695
        %v2007 = vpow.pop %v2006
        %v2008 = vmul.f32 %v2005, 1.442695
        %v2009 = vpow.pop %v2008
        %v2010 = vadd.f32 %v2007, 1.0
        %v2011 = vadd.f32 %v2009, 1.0
        %v2012 = vrcp.pop %v2010
        %v2013 = vmul.f32 1.0, %v2012
        %v2014 = vrcp.pop %v2011
        %v2015 = vmul.f32 1.0, %v2014
        %v2016 = vlaneseq
        %vm2017 = vcmp.ge.s32.totalorder %v2016, 0
        %vm2018 = vcmp.lt.s32.totalorder %v2016, 16
        %vm2019 = vmand %vm2017, %vm2018
        %2020 = vst.msk [vmem:[#allocation3] sm:$0x1] %vm2019, %v2013
        %v2023 = vunpack.c.l.s4 1966171168
        %v2024 = vunpack.c.0.s8 %v2023
        %v2025 = vlaneseq
        %v2026 = vshrl.u32 %v2025, 7
        %v2027 = vsub.s32 %v2024, %v2026
        %v2028 = vrot.slane %v2013, %v2027
        %v2029 = vcombine.high %v2028, %v2028
        %v2031 = vunpack.c.l.s4 1966171168
        %v2032 = vunpack.c.0.s8 %v2031
        %v2033 = vlaneseq
        %v2034 = vshrl.u32 %v2033, 7
        %v2035 = vsub.s32 %v2032, %v2034
        %v2036 = vrot.slane %v2028, %v2035
        %v2038 = vunpack.c.l.s4 1966171168
        %v2039 = vunpack.c.0.s8 %v2038
        %v2040 = vlaneseq
        %v2041 = vshrl.u32 %v2040, 7
        %v2042 = vsub.s32 %v2039, %v2041
        %v2043 = vrot.slane %v2029, %v2042
        %2044 = vrot.lane.b32.xlu0 %v2043, 16
        %v2045 = vpop.permute.xlu0 %2044
        %vm2047 = vcmp.ge.s32.totalorder %v2016, 16
        %vm2048 = vcmp.lt.s32.totalorder %v2016, 32
        %vm2049 = vmand %vm2047, %vm2048
        %2050 = vst.msk [vmem:[#allocation3] sm:$0x1] %vm2049, %v2045
        %v2051 = vcombine.high %v2036, %v2036
        %2052 = vrot.lane.b32.xlu0 %v2051, 32
        %v2053 = vpop.permute.xlu0 %2052
        %vm2055 = vcmp.ge.s32.totalorder %v2016, 32
        %vm2056 = vcmp.lt.s32.totalorder %v2016, 48
        %vm2057 = vmand %vm2055, %vm2056
        %2058 = vst.msk [vmem:[#allocation3] sm:$0x1] %vm2057, %v2053
        %v2059 = vcombine.high %v2043, %v2043
        %2060 = vrot.lane.b32.xlu0 %v2059, 48
        %v2061 = vpop.permute.xlu0 %2060
        %vm2063 = vcmp.ge.s32.totalorder %v2016, 48
        %vm2064 = vcmp.lt.s32.totalorder %v2016, 64
        %vm2065 = vmand %vm2063, %vm2064
        %2066 = vst.msk [vmem:[#allocation3] sm:$0x1] %vm2065, %v2061
        %v2067 = vcombine.high %v2013, %v2013
        %v2069 = vunpack.c.l.s4 1966171168
        %v2070 = vunpack.c.0.s8 %v2069
        %v2071 = vlaneseq
        %v2072 = vshrl.u32 %v2071, 7
        %v2073 = vsub.s32 %v2070, %v2072
        %v2074 = vrot.slane %v2067, %v2073
        %v2076 = vunpack.c.l.s4 1966171168
        %v2077 = vunpack.c.0.s8 %v2076
        %v2078 = vlaneseq
        %v2079 = vshrl.u32 %v2078, 7
        %v2080 = vsub.s32 %v2077, %v2079
        %v2081 = vrot.slane %v2074, %v2080
        %2082 = vrot.lane.b32.xlu0 %v2081, 64
        %v2083 = vpop.permute.xlu0 %2082
        %vm2085 = vcmp.ge.s32.totalorder %v2016, 64
        %vm2086 = vcmp.lt.s32.totalorder %v2016, 80
        %vm2087 = vmand %vm2085, %vm2086
        %2088 = vst.msk [vmem:[#allocation3] sm:$0x1] %vm2087, %v2083
        %v2089 = vcombine.high %v2074, %v2074
        %v2091 = vunpack.c.l.s4 1966171168
        %v2092 = vunpack.c.0.s8 %v2091
        %v2093 = vlaneseq
        %v2094 = vshrl.u32 %v2093, 7
        %v2095 = vsub.s32 %v2092, %v2094
        %v2096 = vrot.slane %v2089, %v2095
        %2097 = vrot.lane.b32.xlu0 %v2096, 80
        %v2098 = vpop.permute.xlu0 %2097
        %vm2100 = vcmp.ge.s32.totalorder %v2016, 80
        %vm2101 = vcmp.lt.s32.totalorder %v2016, 96
        %vm2102 = vmand %vm2100, %vm2101
        %2103 = vst.msk [vmem:[#allocation3] sm:$0x1] %vm2102, %v2098
        %v2104 = vcombine.high %v2081, %v2081
        %2105 = vrot.lane.b32.xlu0 %v2104, 96
        %v2106 = vpop.permute.xlu0 %2105
        %vm2108 = vcmp.ge.s32.totalorder %v2016, 96
        %vm2109 = vcmp.lt.s32.totalorder %v2016, 112
        %vm2110 = vmand %vm2108, %vm2109
        %2111 = vst.msk [vmem:[#allocation3] sm:$0x1] %vm2110, %v2106
        %v2112 = vcombine.high %v2096, %v2096
        %2113 = vrot.lane.b32.xlu0 %v2112, 112
        %v2114 = vpop.permute.xlu0 %2113
        %vm2116 = vcmp.ge.s32.totalorder %v2016, 112
        %vm2117 = vcmp.lt.s32.totalorder %v2016, 128
        %vm2118 = vmand %vm2116, %vm2117
        %2119 = vst.msk [vmem:[#allocation3] sm:$0x1] %vm2118, %v2114
        %2120 = vst.msk [vmem:[#allocation3 + $0x1] sm:$0x1] %vm2019, %v2015
        %v2123 = vunpack.c.l.s4 1966171168
        %v2124 = vunpack.c.0.s8 %v2123
        %v2125 = vlaneseq
        %v2126 = vshrl.u32 %v2125, 7
        %v2127 = vsub.s32 %v2124, %v2126
        %v2128 = vrot.slane %v2015, %v2127
        %v2129 = vcombine.high %v2128, %v2128
        %v2131 = vunpack.c.l.s4 1966171168
        %v2132 = vunpack.c.0.s8 %v2131
        %v2133 = vlaneseq
        %v2134 = vshrl.u32 %v2133, 7
        %v2135 = vsub.s32 %v2132, %v2134
        %v2136 = vrot.slane %v2128, %v2135
        %v2138 = vunpack.c.l.s4 1966171168
        %v2139 = vunpack.c.0.s8 %v2138
        %v2140 = vlaneseq
        %v2141 = vshrl.u32 %v2140, 7
        %v2142 = vsub.s32 %v2139, %v2141
        %v2143 = vrot.slane %v2129, %v2142
        %2144 = vrot.lane.b32.xlu0 %v2143, 16
        %v2145 = vpop.permute.xlu0 %2144
        %2147 = vst.msk [vmem:[#allocation3 + $0x1] sm:$0x1] %vm2049, %v2145
        %v2148 = vcombine.high %v2136, %v2136
        %2149 = vrot.lane.b32.xlu0 %v2148, 32
        %v2150 = vpop.permute.xlu0 %2149
        %2152 = vst.msk [vmem:[#allocation3 + $0x1] sm:$0x1] %vm2057, %v2150
        %v2153 = vcombine.high %v2143, %v2143
        %2154 = vrot.lane.b32.xlu0 %v2153, 48
        %v2155 = vpop.permute.xlu0 %2154
        %2157 = vst.msk [vmem:[#allocation3 + $0x1] sm:$0x1] %vm2065, %v2155
        %v2158 = vcombine.high %v2015, %v2015
        %v2160 = vunpack.c.l.s4 1966171168
        %v2161 = vunpack.c.0.s8 %v2160
        %v2162 = vlaneseq
        %v2163 = vshrl.u32 %v2162, 7
        %v2164 = vsub.s32 %v2161, %v2163
        %v2165 = vrot.slane %v2158, %v2164
        %v2167 = vunpack.c.l.s4 1966171168
        %v2168 = vunpack.c.0.s8 %v2167
        %v2169 = vlaneseq
        %v2170 = vshrl.u32 %v2169, 7
        %v2171 = vsub.s32 %v2168, %v2170
        %v2172 = vrot.slane %v2165, %v2171
        %2173 = vrot.lane.b32.xlu0 %v2172, 64
        %v2174 = vpop.permute.xlu0 %2173
        %2176 = vst.msk [vmem:[#allocation3 + $0x1] sm:$0x1] %vm2087, %v2174
        %v2177 = vcombine.high %v2165, %v2165
        %v2179 = vunpack.c.l.s4 1966171168
        %v2180 = vunpack.c.0.s8 %v2179
        %v2181 = vlaneseq
        %v2182 = vshrl.u32 %v2181, 7
        %v2183 = vsub.s32 %v2180, %v2182
        %v2184 = vrot.slane %v2177, %v2183
        %2185 = vrot.lane.b32.xlu0 %v2184, 80
        %v2186 = vpop.permute.xlu0 %2185
        %2188 = vst.msk [vmem:[#allocation3 + $0x1] sm:$0x1] %vm2102, %v2186
        %v2189 = vcombine.high %v2172, %v2172
        %2190 = vrot.lane.b32.xlu0 %v2189, 96
        %v2191 = vpop.permute.xlu0 %2190
        %2193 = vst.msk [vmem:[#allocation3 + $0x1] sm:$0x1] %vm2110, %v2191
        %v2194 = vcombine.high %v2184, %v2184
        %2195 = vrot.lane.b32.xlu0 %v2194, 112
        %v2196 = vpop.permute.xlu0 %2195
        %2198 = vst.msk [vmem:[#allocation3 + $0x1] sm:$0x1] %vm2118, %v2196
        %v2199 = vld [vmem:[%s284] sm:$0xff]
        %v2200 = vld [vmem:[%s284 + $0x8] sm:$0xff]
        %v2201 = vld [vmem:[%s284 + $0x10] sm:$0xff]
        %v2202 = vld [vmem:[%s284 + $0x18] sm:$0xff]
        %v2203 = vld [vmem:[#allocation3] sm:$0x3]
        %v2205 = vlaneseq
        %v2206 = vshrl.u32 %v2205, 7
        %v2207 = vsub.s32 0, %v2206
        %v2208 = vrot.slane %v2203, %v2207
        %v2209 = vlaneseq
        %v2210 = vshrl.u32 %v2209, 7
        %v2211 = vsub.s32 1, %v2210
        %v2212 = vrot.slane %v2203, %v2211
        %v2215 = vmul.f32 %v2199, %v2208
        %v2216 = vmul.f32 %v2200, %v2212
        %v2217 = vmul.f32 %v2201, %v2208
        %v2218 = vmul.f32 %v2202, %v2212
        %2219 = vst [vmem:[%s284] sm:$0xff] %v2215
        %2220 = vst [vmem:[%s284 + $0x8] sm:$0xff] %v2216
        %2221 = vst [vmem:[%s284 + $0x10] sm:$0xff] %v2217
        %2222 = vst [vmem:[%s284 + $0x18] sm:$0xff] %v2218
        %s2223 = sand.u32 %s164, 1
        %s2224 = scalar_lea.sflag [#allocation7], %s2223
        %s2225 = sand.u32 %s164, 1
        %s2226 = smul.addr %s2225, 32
        %s2227 = scalar_lea.vmem [#allocation10], %s2226
        // Predicated region
        $region53: #{tpu_custom_call.1} parent=43 // pred_check
          %p2228 = pneg %p174
        $region54: #{tpu_custom_call.1} parent=43 // pred_check_branch
          %2230 = sbr.rel (%p2228) target = $region56
        $region55: #{tpu_custom_call.1} parent=43 // pred_region
          %s2232 = ssub.s32 512, 512
          %2233 = vsyncadd %s2224, %s2232
          %s2234 = smul.addr %s25, 4
          %s2235 = smul.addr %s2234, 128
          %s2236 = scalar_lea.hbm %s6, %s2235
          %s2237 = sshll.u32 %s2227, 4
          %s2238 = int_to_ptr.vmem [resolvable:$true] %s2237
          %2243 = dma.vmem_to_hbm [thread:$0]  %s2238, 512, %s2236, %s2224, 256, 256, 16
        $region56: #{tpu_custom_call.1} parent=43 // pred_fallthru
          _
      $region44: #{tpu_custom_call.1} parent=5 // pred_fallthru
        _
      %p2244 = scmp.le.s32.totalorder 2, %s20
      // Predicated region
      $region57: #{tpu_custom_call.1} parent=5 // pred_check
        %p2245 = pneg %p2244
      $region58: #{tpu_custom_call.1} parent=5 // pred_check_branch
        %2247 = sbr.rel (%p2245) target = $region60
      $region59: #{tpu_custom_call.1} parent=5 // pred_region
        %s2248 = ssub.s32 %s20, 2
        // Predicated region
        $region61: #{tpu_custom_call.1} parent=59 // pred_check
          %p2249 = pneg %p180
        $region62: #{tpu_custom_call.1} parent=59 // pred_check_branch
          %2251 = sbr.rel (%p2249) target = $region64
        $region63: #{tpu_custom_call.1} parent=59 // pred_region
          %s2252 = sand.u32 %s165, 1
          %s2253 = scalar_lea.sflag [#allocation7], %s2252
          %s2254 = sand.u32 %s165, 1
          %s2255 = smul.addr %s2254, 32
          %s2256 = scalar_lea.vmem [#allocation10], %s2255
          %2257 = dma.done %s2253, 512
        $region64: #{tpu_custom_call.1} parent=59 // pred_fallthru
          _
      $region60: #{tpu_custom_call.1} parent=5 // pred_fallthru
        _
    $region6: #{tpu_custom_call.1} parent=1 // loop_footer
      %s24 = sadd.s32 1, %s20
    $region7: #{tpu_custom_call.1} parent=1 // loop_footer_branch
      %19 = sbr.rel target = $region3
    $region8: #{tpu_custom_call.1} parent=1 // loop_exit
      _
    %2258 = vsyncpa [#allocation6], 1
    %s2259 = scalar_lea.sflag [#allocation6], 1
    %2260 = vsyncpa %s2259, 1
    %2261 = vsyncpa [#allocation7], 1
    %s2262 = scalar_lea.sflag [#allocation7], 1
    %2263 = vsyncpa %s2262, 1
    %2264 = vsyncpa [#allocation8], 1
    %s2265 = scalar_lea.sflag [#allocation8], 1
    %2266 = vsyncpa %s2265, 1

</llo_original>
